<compile_context>
chip_gen: v6e
topology: v6e:2x2x1
jax: 0.10.0
libtpu: 0.0.40
codegen_flags: <defaults>
</compile_context>

<pallas_src>
import numpy as np
import jax
import jax.numpy as jnp
from jax import lax
from jax.experimental import pallas as pl
from jax.experimental.pallas import tpu as pltpu


# --------------------------------------------------------------------------
# Pallas kernel
# --------------------------------------------------------------------------
def _doc_bilstm_kernel(x_ref, mask_ref,
                       w0_in, b0, w0f_hh, w0b_hh,
                       w1f_in, w1b_in, b1, w1f_hh, w1b_hh,
                       wof, wob, b_out,
                       out_ref,
                       proj_buf, f_buf, b_buf):
    T, Bc, D = x_ref.shape
    H = w0f_hh.shape[0]
    H4 = 4 * H
    TB = T * Bc

    def cell(pre, c_prev):
        # PyTorch nn.LSTM gate order i, f, g, o (bias already in `pre`).
        i = jax.nn.sigmoid(pre[:, 0 * H:1 * H])
        f = jax.nn.sigmoid(pre[:, 1 * H:2 * H])
        g = jnp.tanh(pre[:, 2 * H:3 * H])
        o = jax.nn.sigmoid(pre[:, 3 * H:4 * H])
        c = f * c_prev + i * g
        h = o * jnp.tanh(c)
        return h, c

    def run_layer(wf_hh_ref, wb_hh_ref):
        wf_hh = wf_hh_ref[...]
        wb_hh = wb_hh_ref[...]
        z = jnp.zeros((Bc, H), jnp.float32)

        # Fused fwd/bwd recurrence: step s handles t=s (fwd) and t=T-1-s (bwd).
        # The two direction chains are independent -> ILP across MXU/VPU/EUP.
        def step(s, carry):
            h_f, c_f, h_b, c_b = carry
            tf = s
            tb = T - 1 - s
            pre_f = proj_buf[tf][:, :H4] + jnp.dot(
                h_f, wf_hh, preferred_element_type=jnp.float32)
            pre_b = proj_buf[tb][:, H4:] + jnp.dot(
                h_b, wb_hh, preferred_element_type=jnp.float32)
            h_f, c_f = cell(pre_f, c_f)
            h_bn, c_bn = cell(pre_b, c_b)
            # pack_padded_sequence semantics for the reverse direction:
            # state is forced to zero at padded timesteps so the bwd pass of
            # sequence b effectively starts at t = len_b - 1 from zero state.
            m = mask_ref[tb]                      # (Bc, 1), precomputed f32
            h_b = h_bn * m
            c_b = c_bn * m
            f_buf[tf] = h_f
            b_buf[tb] = h_b
            return (h_f, c_f, h_b, c_b)

        lax.fori_loop(0, T, step, (z, z, z, z), unroll=True)

    # ---- Layer 0: hoisted input projection (one big MXU matmul) ------------
    x_flat = x_ref[...].reshape(TB, D)
    proj_buf[...] = (jnp.dot(x_flat, w0_in[...],
                             preferred_element_type=jnp.float32)
                     + b0[...]).reshape(T, Bc, 8 * H)
    run_layer(w0f_hh, w0b_hh)

    # ---- Layer 1: hoisted projection of layer-0 outputs (no per-step concat)
    f0_flat = f_buf[...].reshape(TB, H)
    b0_flat = b_buf[...].reshape(TB, H)
    proj_buf[...] = (jnp.dot(f0_flat, w1f_in[...],
                             preferred_element_type=jnp.float32)
                     + jnp.dot(b0_flat, w1b_in[...],
                               preferred_element_type=jnp.float32)
                     + b1[...]).reshape(T, Bc, 8 * H)
    run_layer(w1f_hh, w1b_hh)      # overwrites f_buf/b_buf with layer-1 states

    # ---- h2s linear over the whole flattened slab, single store ------------
    f1_flat = f_buf[...].reshape(TB, H)
    b1_flat = b_buf[...].reshape(TB, H)
    y = (jnp.dot(f1_flat, wof[...], preferred_element_type=jnp.float32)
         + jnp.dot(b1_flat, wob[...], preferred_element_type=jnp.float32)
         + b_out[...])
    out_ref[...] = y.reshape(T, Bc, 2)


_WEIGHT_KEYS = ("w0_in", "b0", "w0f_hh", "w0b_hh",
                "w1f_in", "w1b_in", "b1", "w1f_hh", "w1b_hh",
                "wof", "wob", "b_out")


def doc_bilstm_h2s(x, mask, params, batch_chunk=8):
    """x: [T, B, D] f32, mask: [T, B, 1] f32 (t < len). Returns [T, B, 2]."""
    T, B, D = x.shape
    H = params["w0f_hh"].shape[0]
    Bc = min(batch_chunk, B)
    assert B % Bc == 0 and Bc % 8 == 0
    grid = (B // Bc,)

    weights = [params[k] for k in _WEIGHT_KEYS]
    in_specs = ([pl.BlockSpec((T, Bc, D), lambda i: (0, i, 0)),
                 pl.BlockSpec((T, Bc, 1), lambda i: (0, i, 0))]
                + [pl.BlockSpec(w.shape, lambda i: (0, 0)) for w in weights])
    out_spec = pl.BlockSpec((T, Bc, 2), lambda i: (0, i, 0))

    return pl.pallas_call(
        _doc_bilstm_kernel,
        out_shape=jax.ShapeDtypeStruct((T, B, 2), jnp.float32),
        grid_spec=pltpu.PrefetchScalarGridSpec(
            num_scalar_prefetch=0,
            grid=grid,
            in_specs=in_specs,
            out_specs=out_spec,
            scratch_shapes=[pltpu.VMEM((T, Bc, 8 * H), jnp.float32),  # proj
                            pltpu.VMEM((T, Bc, H), jnp.float32),      # fwd h
                            pltpu.VMEM((T, Bc, H), jnp.float32)]),    # bwd h
        compiler_params=pltpu.CompilerParams(
            dimension_semantics=("parallel",)),
    )(x, mask, *weights)


# --------------------------------------------------------------------------
# Parameters (PyTorch-shaped raw params; packed layout for the kernel)
# --------------------------------------------------------------------------
def init_params(key, enc_dim, hidden):
    H = hidden
    ks = jax.random.split(key, 5)

    def lstm_dir(k, in_dim):
        kk = jax.random.split(k, 4)
        s = 1.0 / np.sqrt(H)
        w_ih = jax.random.uniform(kk[0], (4 * H, in_dim), jnp.float32, -s, s)
        w_hh = jax.random.uniform(kk[1], (4 * H, H), jnp.float32, -s, s)
        b_ih = jax.random.uniform(kk[2], (4 * H,), jnp.float32, -s, s)
        b_hh = jax.random.uniform(kk[3], (4 * H,), jnp.float32, -s, s)
        # transposed layout: [in, 4H], [H, 4H], combined bias [1, 4H]
        return w_ih.T, w_hh.T, (b_ih + b_hh).reshape(1, 4 * H)

    wf0_ih, wf0_hh, bf0 = lstm_dir(ks[0], enc_dim)
    wb0_ih, wb0_hh, bb0 = lstm_dir(ks[1], enc_dim)
    wf1_ih, wf1_hh, bf1 = lstm_dir(ks[2], 2 * H)
    wb1_ih, wb1_hh, bb1 = lstm_dir(ks[3], 2 * H)

    kw, kb = jax.random.split(ks[4])
    s = 1.0 / np.sqrt(2 * H)
    w_h2s = jax.random.uniform(kw, (2, 2 * H), jnp.float32, -s, s)   # nn.Linear
    b_h2s = jax.random.uniform(kb, (2,), jnp.float32, -s, s)
    return dict(wf0_ih=wf0_ih, wf0_hh=wf0_hh, bf0=bf0,
                wb0_ih=wb0_ih, wb0_hh=wb0_hh, bb0=bb0,
                wf1_ih=wf1_ih, wf1_hh=wf1_hh, bf1=bf1,
                wb1_ih=wb1_ih, wb1_hh=wb1_hh, bb1=bb1,
                w_out=w_h2s.T, b_out=b_h2s.reshape(1, 2))


def pack_params(p, H):
    """Kernel layout: fused fwd|bwd input projections, split row-halves."""
    return dict(
        w0_in=jnp.concatenate([p["wf0_ih"], p["wb0_ih"]], axis=1),   # (D, 8H)
        b0=jnp.concatenate([p["bf0"], p["bb0"]], axis=1),            # (1, 8H)
        w0f_hh=p["wf0_hh"], w0b_hh=p["wb0_hh"],                      # (H, 4H)
        w1f_in=jnp.concatenate([p["wf1_ih"][:H], p["wb1_ih"][:H]], axis=1),
        w1b_in=jnp.concatenate([p["wf1_ih"][H:], p["wb1_ih"][H:]], axis=1),
        b1=jnp.concatenate([p["bf1"], p["bb1"]], axis=1),
        w1f_hh=p["wf1_hh"], w1b_hh=p["wb1_hh"],
        wof=p["w_out"][:H], wob=p["w_out"][H:],                      # (H, 2)
        b_out=p["b_out"],
    )


# --------------------------------------------------------------------------
# Host-side glue mirroring Model.forward (sort / pad / pack / unsort)
# --------------------------------------------------------------------------
def _pack_docs(encoded_documents, sublane=8):
    doc_sizes = [int(d.shape[0]) for d in encoded_documents]
    B = len(encoded_documents)
    B_pad = max(sublane, -(-B // sublane) * sublane)       # pad to 8 sublanes
    T = max(doc_sizes)
    order = np.argsort(doc_sizes)[::-1]                    # descending (pack)
    ordered_sizes = [doc_sizes[i] for i in order]
    D = int(encoded_documents[0].shape[1])
    x = np.zeros((T, B_pad, D), np.float32)
    lens = np.zeros((B_pad,), np.int32)
    for j, idx in enumerate(order):
        d = np.asarray(encoded_documents[idx], np.float32)
        x[:d.shape[0], j, :] = d
        lens[j] = d.shape[0]
    return x, ordered_sizes, np.argsort(order), B, lens


def model_forward(encoded_documents, packed_params):
    x, ordered_sizes, inv, B, lens = _pack_docs(encoded_documents)
    T = x.shape[0]
    mask = (np.arange(T)[:, None] < lens[None, :]).astype(np.float32)[..., None]
    padded = doc_bilstm_h2s(jnp.asarray(x), jnp.asarray(mask), packed_params)
    # padded_x[0:doc_len - 1, i, :] per ordered doc, then unsort + concat
    doc_outputs = [padded[0:L - 1, j, :] for j, L in enumerate(ordered_sizes)]
    unsorted = [doc_outputs[inv[i]] for i in range(B)]
    return jnp.concatenate(unsorted, axis=0)                # [sum(L_i-1), 2]


# --------------------------------------------------------------------------
# NumPy reference (same math) for a correctness check
# --------------------------------------------------------------------------
def _np_cell(x, h, c, w_ih, w_hh, b, H):
    g = x @ w_ih + h @ w_hh + b
    sig = lambda z: 1.0 / (1.0 + np.exp(-z))
    i, f = sig(g[:, :H]), sig(g[:, H:2 * H])
    gg, o = np.tanh(g[:, 2 * H:3 * H]), sig(g[:, 3 * H:])
    c = f * c + i * gg
    return o * np.tanh(c), c


def _np_bidir(inp, lens, wfi, wfh, bf, wbi, wbh, bb, H):
    T, B, _ = inp.shape
    outf = np.zeros((T, B, H), np.float32)
    outb = np.zeros((T, B, H), np.float32)
    h = np.zeros((B, H), np.float32); c = np.zeros((B, H), np.float32)
    for t in range(T):
        h, c = _np_cell(inp[t], h, c, wfi, wfh, bf, H)
        outf[t] = h
    h = np.zeros((B, H), np.float32); c = np.zeros((B, H), np.float32)
    for t in range(T - 1, -1, -1):
        h, c = _np_cell(inp[t], h, c, wbi, wbh, bb, H)
        valid = (t < lens).astype(np.float32)
        h, c = h * valid, c * valid
        outb[t] = h
    return np.concatenate([outf, outb], axis=-1)


def reference_forward(encoded_documents, raw):
    p = {k: np.asarray(v, np.float32) for k, v in raw.items()}
    x, ordered_sizes, inv, B, lens = _pack_docs(encoded_documents)
    lens_col = lens.reshape(-1, 1)
    H = p["wf0_hh"].shape[0]
    y0 = _np_bidir(x, lens_col, p["wf0_ih"], p["wf0_hh"], p["bf0"],
                   p["wb0_ih"], p["wb0_hh"], p["bb0"], H)
    y1 = _np_bidir(y0, lens_col, p["wf1_ih"], p["wf1_hh"], p["bf1"],
                   p["wb1_ih"], p["wb1_hh"], p["bb1"], H)
    padded = y1 @ p["w_out"] + p["b_out"]
    doc_outputs = [padded[0:L - 1, j, :] for j, L in enumerate(ordered_sizes)]
    return np.concatenate([doc_outputs[inv[i]] for i in range(B)], axis=0)


# --------------------------------------------------------------------------
if __name__ == "__main__":
    key = jax.random.PRNGKey(0)
    ENC_HIDDEN = 16               # sentence_encoder.hidden
    ENC_DIM = ENC_HIDDEN * 2      # sentence encoding dim (LSTM input size)
    HIDDEN = 32                   # Model hidden (scaled down from 256)
    DOC_SIZES = [4, 6]            # sentences per document (2 documents)

    kp = jax.random.split(key, 1 + len(DOC_SIZES))
    raw_params = init_params(kp[0], ENC_DIM, HIDDEN)
    kernel_params = pack_params(raw_params, HIDDEN)

    # Pre-encoded sentence embeddings per document (sentence_encoder output).
    encoded_documents = [
        jax.random.normal(kp[1 + i], (n, ENC_DIM), jnp.float32)
        for i, n in enumerate(DOC_SIZES)
    ]

    out = model_forward(encoded_documents, kernel_params)
    out = jax.block_until_ready(out)
    assert out.shape == (sum(n - 1 for n in DOC_SIZES), 2), out.shape

    ref = reference_forward(encoded_documents, raw_params)
    np.testing.assert_allclose(np.asarray(out), ref, rtol=5e-4, atol=5e-4)

    print("KERNEL_OK")
</pallas_src>

<mosaic_0001>
module attributes {stable_mosaic.version = 11 : i64} {
  func.func @_doc_bilstm_kernel(%arg0: i32, %arg1: memref<6x8x32xf32, #tpu.memory_space<vmem>>, %arg2: memref<6x8x1xf32, #tpu.memory_space<vmem>>, %arg3: memref<32x256xf32, #tpu.memory_space<vmem>>, %arg4: memref<1x256xf32, #tpu.memory_space<vmem>>, %arg5: memref<32x128xf32, #tpu.memory_space<vmem>>, %arg6: memref<32x128xf32, #tpu.memory_space<vmem>>, %arg7: memref<32x256xf32, #tpu.memory_space<vmem>>, %arg8: memref<32x256xf32, #tpu.memory_space<vmem>>, %arg9: memref<1x256xf32, #tpu.memory_space<vmem>>, %arg10: memref<32x128xf32, #tpu.memory_space<vmem>>, %arg11: memref<32x128xf32, #tpu.memory_space<vmem>>, %arg12: memref<32x2xf32, #tpu.memory_space<vmem>>, %arg13: memref<32x2xf32, #tpu.memory_space<vmem>>, %arg14: memref<1x2xf32, #tpu.memory_space<vmem>>, %arg15: memref<6x8x2xf32, #tpu.memory_space<vmem>>, %arg16: memref<6x8x256xf32, #tpu.memory_space<vmem>>, %arg17: memref<6x8x32xf32, #tpu.memory_space<vmem>>, %arg18: memref<6x8x32xf32, #tpu.memory_space<vmem>>) attributes {dimension_semantics = [#tpu.dimension_semantics<parallel>], iteration_bounds = array<i64: 1>, scalar_prefetch = 0 : i64, scratch_operands = 3 : i64, tpu.core_type = #tpu.core_type<tc>, window_params = [{transform_indices = @transform_0, window_bounds = array<i64: 6, 8, 32>}, {transform_indices = @transform_1, window_bounds = array<i64: 6, 8, 1>}, {pipeline_mode = #tpu.pipeline_mode<synchronous>, transform_indices = @transform_2, window_bounds = array<i64: 32, 256>}, {pipeline_mode = #tpu.pipeline_mode<synchronous>, transform_indices = @transform_3, window_bounds = array<i64: 1, 256>}, {pipeline_mode = #tpu.pipeline_mode<synchronous>, transform_indices = @transform_4, window_bounds = array<i64: 32, 128>}, {pipeline_mode = #tpu.pipeline_mode<synchronous>, transform_indices = @transform_5, window_bounds = array<i64: 32, 128>}, {pipeline_mode = #tpu.pipeline_mode<synchronous>, transform_indices = @transform_6, window_bounds = array<i64: 32, 256>}, {pipeline_mode = #tpu.pipeline_mode<synchronous>, transform_indices = @transform_7, window_bounds = array<i64: 32, 256>}, {pipeline_mode = #tpu.pipeline_mode<synchronous>, transform_indices = @transform_8, window_bounds = array<i64: 1, 256>}, {pipeline_mode = #tpu.pipeline_mode<synchronous>, transform_indices = @transform_9, window_bounds = array<i64: 32, 128>}, {pipeline_mode = #tpu.pipeline_mode<synchronous>, transform_indices = @transform_10, window_bounds = array<i64: 32, 128>}, {pipeline_mode = #tpu.pipeline_mode<synchronous>, transform_indices = @transform_11, window_bounds = array<i64: 32, 2>}, {pipeline_mode = #tpu.pipeline_mode<synchronous>, transform_indices = @transform_12, window_bounds = array<i64: 32, 2>}, {pipeline_mode = #tpu.pipeline_mode<synchronous>, transform_indices = @transform_13, window_bounds = array<i64: 1, 2>}, {transform_indices = @transform_14, window_bounds = array<i64: 6, 8, 2>}]} {
    %c0 = arith.constant 0 : index
    %c0_0 = arith.constant 0 : index
    %c0_1 = arith.constant 0 : index
    %0 = vector.load %arg1[%c0, %c0_0, %c0_1] : memref<6x8x32xf32, #tpu.memory_space<vmem>>, vector<6x8x32xf32>
    %1 = vector.shape_cast %0 : vector<6x8x32xf32> to vector<48x32xf32>
    %c0_2 = arith.constant 0 : index
    %c0_3 = arith.constant 0 : index
    %2 = vector.load %arg3[%c0_2, %c0_3] : memref<32x256xf32, #tpu.memory_space<vmem>>, vector<32x256xf32>
    %cst = arith.constant dense<0.000000e+00> : vector<48x256xf32>
    %3 = tpu.matmul %1, %2, %cst {dimension_numbers = #tpu.dot_dimension_numbers<[1], [0], [0], [1], [0, 0, 1, 1], [], []>} : vector<48x32xf32>, vector<32x256xf32>, vector<48x256xf32> -> vector<48x256xf32>
    %c0_4 = arith.constant 0 : index
    %c0_5 = arith.constant 0 : index
    %4 = vector.load %arg4[%c0_4, %c0_5] : memref<1x256xf32, #tpu.memory_space<vmem>>, vector<1x256xf32>
    %5 = vector.broadcast %4 : vector<1x256xf32> to vector<48x256xf32>
    %6 = arith.addf %3, %5 : vector<48x256xf32>
    %7 = vector.shape_cast %6 : vector<48x256xf32> to vector<6x8x256xf32>
    %c0_6 = arith.constant 0 : index
    %c0_7 = arith.constant 0 : index
    %c0_8 = arith.constant 0 : index
    %8 = vector.load %arg16[%c0_6, %c0_7, %c0_8] : memref<6x8x256xf32, #tpu.memory_space<vmem>>, vector<6x8x256xf32>
    tpu.vector_store %arg16[%c0_6, %c0_7, %c0_8], %7 {strides = array<i32>} : memref<6x8x256xf32, #tpu.memory_space<vmem>>, vector<6x8x256xf32>,
    %c0_9 = arith.constant 0 : index
    %c0_10 = arith.constant 0 : index
    %9 = vector.load %arg5[%c0_9, %c0_10] : memref<32x128xf32, #tpu.memory_space<vmem>>, vector<32x128xf32>
    %c0_11 = arith.constant 0 : index
    %c0_12 = arith.constant 0 : index
    %10 = vector.load %arg6[%c0_11, %c0_12] : memref<32x128xf32, #tpu.memory_space<vmem>>, vector<32x128xf32>
    %cst_13 = arith.constant 0.000000e+00 : f32
    %11 = vector.broadcast %cst_13 : f32 to vector<8x32xf32>
    %c0_i32 = arith.constant 0 : i32
    %c5_i32 = arith.constant 5 : i32
    %12 = arith.subi %c5_i32, %c0_i32 : i32
    %13 = arith.index_cast %c0_i32 : i32 to index
    %c0_14 = arith.constant 0 : index
    %c0_15 = arith.constant 0 : index
    %14 = vector.load %arg16[%13, %c0_14, %c0_15] : memref<6x8x256xf32, #tpu.memory_space<vmem>>, vector<1x8x256xf32>
    %15 = vector.shape_cast %14 : vector<1x8x256xf32> to vector<8x256xf32>
    %16 = vector.extract_strided_slice %15 {offsets = [0, 0], sizes = [8, 128], strides = [1, 1]} : vector<8x256xf32> to vector<8x128xf32>
    %cst_16 = arith.constant dense<0.000000e+00> : vector<8x128xf32>
    %17 = tpu.matmul %11, %9, %cst_16 {dimension_numbers = #tpu.dot_dimension_numbers<[1], [0], [0], [1], [0, 0, 1, 1], [], []>} : vector<8x32xf32>, vector<32x128xf32>, vector<8x128xf32> -> vector<8x128xf32>
    %18 = arith.addf %16, %17 : vector<8x128xf32>
    %19 = arith.index_cast %12 : i32 to index
    %c0_17 = arith.constant 0 : index
    %c0_18 = arith.constant 0 : index
    %20 = vector.load %arg16[%19, %c0_17, %c0_18] : memref<6x8x256xf32, #tpu.memory_space<vmem>>, vector<1x8x256xf32>
    %21 = vector.shape_cast %20 : vector<1x8x256xf32> to vector<8x256xf32>
    %22 = vector.extract_strided_slice %21 {offsets = [0, 128], sizes = [8, 128], strides = [1, 1]} : vector<8x256xf32> to vector<8x128xf32>
    %cst_19 = arith.constant dense<0.000000e+00> : vector<8x128xf32>
    %23 = tpu.matmul %11, %10, %cst_19 {dimension_numbers = #tpu.dot_dimension_numbers<[1], [0], [0], [1], [0, 0, 1, 1], [], []>} : vector<8x32xf32>, vector<32x128xf32>, vector<8x128xf32> -> vector<8x128xf32>
    %24 = arith.addf %22, %23 : vector<8x128xf32>
    %25 = vector.extract_strided_slice %18 {offsets = [0, 0], sizes = [8, 32], strides = [1, 1]} : vector<8x128xf32> to vector<8x32xf32>
    %26 = arith.negf %25 : vector<8x32xf32>
    %27 = math.exp %26 : vector<8x32xf32>
    %cst_20 = arith.constant 1.000000e+00 : f32
    %28 = vector.broadcast %cst_20 : f32 to vector<8x32xf32>
    %29 = arith.addf %28, %27 : vector<8x32xf32>
    %30 = arith.divf %28, %29 : vector<8x32xf32>
    %31 = vector.extract_strided_slice %18 {offsets = [0, 32], sizes = [8, 32], strides = [1, 1]} : vector<8x128xf32> to vector<8x32xf32>
    %32 = arith.negf %31 : vector<8x32xf32>
    %33 = math.exp %32 : vector<8x32xf32>
    %cst_21 = arith.constant 1.000000e+00 : f32
    %34 = vector.broadcast %cst_21 : f32 to vector<8x32xf32>
    %35 = arith.addf %34, %33 : vector<8x32xf32>
    %36 = arith.divf %34, %35 : vector<8x32xf32>
    %37 = vector.extract_strided_slice %18 {offsets = [0, 64], sizes = [8, 32], strides = [1, 1]} : vector<8x128xf32> to vector<8x32xf32>
    %38 = math.tanh %37 : vector<8x32xf32>
    %39 = vector.extract_strided_slice %18 {offsets = [0, 96], sizes = [8, 32], strides = [1, 1]} : vector<8x128xf32> to vector<8x32xf32>
    %40 = arith.negf %39 : vector<8x32xf32>
    %41 = math.exp %40 : vector<8x32xf32>
    %cst_22 = arith.constant 1.000000e+00 : f32
    %42 = vector.broadcast %cst_22 : f32 to vector<8x32xf32>
    %43 = arith.addf %42, %41 : vector<8x32xf32>
    %44 = arith.divf %42, %43 : vector<8x32xf32>
    %45 = arith.mulf %36, %11 : vector<8x32xf32>
    %46 = arith.mulf %30, %38 : vector<8x32xf32>
    %47 = arith.addf %45, %46 : vector<8x32xf32>
    %48 = math.tanh %47 : vector<8x32xf32>
    %49 = arith.mulf %44, %48 : vector<8x32xf32>
    %50 = vector.extract_strided_slice %24 {offsets = [0, 0], sizes = [8, 32], strides = [1, 1]} : vector<8x128xf32> to vector<8x32xf32>
    %51 = arith.negf %50 : vector<8x32xf32>
    %52 = math.exp %51 : vector<8x32xf32>
    %cst_23 = arith.constant 1.000000e+00 : f32
    %53 = vector.broadcast %cst_23 : f32 to vector<8x32xf32>
    %54 = arith.addf %53, %52 : vector<8x32xf32>
    %55 = arith.divf %53, %54 : vector<8x32xf32>
    %56 = vector.extract_strided_slice %24 {offsets = [0, 32], sizes = [8, 32], strides = [1, 1]} : vector<8x128xf32> to vector<8x32xf32>
    %57 = arith.negf %56 : vector<8x32xf32>
    %58 = math.exp %57 : vector<8x32xf32>
    %cst_24 = arith.constant 1.000000e+00 : f32
    %59 = vector.broadcast %cst_24 : f32 to vector<8x32xf32>
    %60 = arith.addf %59, %58 : vector<8x32xf32>
    %61 = arith.divf %59, %60 : vector<8x32xf32>
    %62 = vector.extract_strided_slice %24 {offsets = [0, 64], sizes = [8, 32], strides = [1, 1]} : vector<8x128xf32> to vector<8x32xf32>
    %63 = math.tanh %62 : vector<8x32xf32>
    %64 = vector.extract_strided_slice %24 {offsets = [0, 96], sizes = [8, 32], strides = [1, 1]} : vector<8x128xf32> to vector<8x32xf32>
    %65 = arith.negf %64 : vector<8x32xf32>
    %66 = math.exp %65 : vector<8x32xf32>
    %cst_25 = arith.constant 1.000000e+00 : f32
    %67 = vector.broadcast %cst_25 : f32 to vector<8x32xf32>
    %68 = arith.addf %67, %66 : vector<8x32xf32>
    %69 = arith.divf %67, %68 : vector<8x32xf32>
    %70 = arith.mulf %61, %11 : vector<8x32xf32>
    %71 = arith.mulf %55, %63 : vector<8x32xf32>
    %72 = arith.addf %70, %71 : vector<8x32xf32>
    %73 = math.tanh %72 : vector<8x32xf32>
    %74 = arith.mulf %69, %73 : vector<8x32xf32>
    %75 = arith.index_cast %12 : i32 to index
    %c0_26 = arith.constant 0 : index
    %c0_27 = arith.constant 0 : index
    %76 = vector.load %arg2[%75, %c0_26, %c0_27] : memref<6x8x1xf32, #tpu.memory_space<vmem>>, vector<1x8x1xf32>
    %77 = vector.shape_cast %76 : vector<1x8x1xf32> to vector<8x1xf32>
    %78 = vector.broadcast %77 : vector<8x1xf32> to vector<8x32xf32>
    %79 = arith.mulf %74, %78 : vector<8x32xf32>
    %80 = vector.broadcast %77 : vector<8x1xf32> to vector<8x32xf32>
    %81 = arith.mulf %72, %80 : vector<8x32xf32>
    %82 = arith.index_cast %c0_i32 : i32 to index
    %c0_28 = arith.constant 0 : index
    %c0_29 = arith.constant 0 : index
    %83 = vector.load %arg17[%82, %c0_28, %c0_29] : memref<6x8x32xf32, #tpu.memory_space<vmem>>, vector<1x8x32xf32>
    %84 = vector.shape_cast %83 : vector<1x8x32xf32> to vector<8x32xf32>
    %85 = vector.shape_cast %49 : vector<8x32xf32> to vector<1x8x32xf32>
    tpu.vector_store %arg17[%82, %c0_28, %c0_29], %85 {strides = array<i32>} : memref<6x8x32xf32, #tpu.memory_space<vmem>>, vector<1x8x32xf32>,
    %86 = arith.index_cast %12 : i32 to index
    %c0_30 = arith.constant 0 : index
    %c0_31 = arith.constant 0 : index
    %87 = vector.load %arg18[%86, %c0_30, %c0_31] : memref<6x8x32xf32, #tpu.memory_space<vmem>>, vector<1x8x32xf32>
    %88 = vector.shape_cast %87 : vector<1x8x32xf32> to vector<8x32xf32>
    %89 = vector.shape_cast %79 : vector<8x32xf32> to vector<1x8x32xf32>
    tpu.vector_store %arg18[%86, %c0_30, %c0_31], %89 {strides = array<i32>} : memref<6x8x32xf32, #tpu.memory_space<vmem>>, vector<1x8x32xf32>,
    %c1_i32 = arith.constant 1 : i32
    %c5_i32_32 = arith.constant 5 : i32
    %90 = arith.subi %c5_i32_32, %c1_i32 : i32
    %91 = arith.index_cast %c1_i32 : i32 to index
    %c0_33 = arith.constant 0 : index
    %c0_34 = arith.constant 0 : index
    %92 = vector.load %arg16[%91, %c0_33, %c0_34] : memref<6x8x256xf32, #tpu.memory_space<vmem>>, vector<1x8x256xf32>
    %93 = vector.shape_cast %92 : vector<1x8x256xf32> to vector<8x256xf32>
    %94 = vector.extract_strided_slice %93 {offsets = [0, 0], sizes = [8, 128], strides = [1, 1]} : vector<8x256xf32> to vector<8x128xf32>
    %cst_35 = arith.constant dense<0.000000e+00> : vector<8x128xf32>
    %95 = tpu.matmul %49, %9, %cst_35 {dimension_numbers = #tpu.dot_dimension_numbers<[1], [0], [0], [1], [0, 0, 1, 1], [], []>} : vector<8x32xf32>, vector<32x128xf32>, vector<8x128xf32> -> vector<8x128xf32>
    %96 = arith.addf %94, %95 : vector<8x128xf32>
    %97 = arith.index_cast %90 : i32 to index
    %c0_36 = arith.constant 0 : index
    %c0_37 = arith.constant 0 : index
    %98 = vector.load %arg16[%97, %c0_36, %c0_37] : memref<6x8x256xf32, #tpu.memory_space<vmem>>, vector<1x8x256xf32>
    %99 = vector.shape_cast %98 : vector<1x8x256xf32> to vector<8x256xf32>
    %100 = vector.extract_strided_slice %99 {offsets = [0, 128], sizes = [8, 128], strides = [1, 1]} : vector<8x256xf32> to vector<8x128xf32>
    %cst_38 = arith.constant dense<0.000000e+00> : vector<8x128xf32>
    %101 = tpu.matmul %79, %10, %cst_38 {dimension_numbers = #tpu.dot_dimension_numbers<[1], [0], [0], [1], [0, 0, 1, 1], [], []>} : vector<8x32xf32>, vector<32x128xf32>, vector<8x128xf32> -> vector<8x128xf32>
    %102 = arith.addf %100, %101 : vector<8x128xf32>
    %103 = vector.extract_strided_slice %96 {offsets = [0, 0], sizes = [8, 32], strides = [1, 1]} : vector<8x128xf32> to vector<8x32xf32>
    %104 = arith.negf %103 : vector<8x32xf32>
    %105 = math.exp %104 : vector<8x32xf32>
    %cst_39 = arith.constant 1.000000e+00 : f32
    %106 = vector.broadcast %cst_39 : f32 to vector<8x32xf32>
    %107 = arith.addf %106, %105 : vector<8x32xf32>
    %108 = arith.divf %106, %107 : vector<8x32xf32>
    %109 = vector.extract_strided_slice %96 {offsets = [0, 32], sizes = [8, 32], strides = [1, 1]} : vector<8x128xf32> to vector<8x32xf32>
    %110 = arith.negf %109 : vector<8x32xf32>
    %111 = math.exp %110 : vector<8x32xf32>
    %cst_40 = arith.constant 1.000000e+00 : f32
    %112 = vector.broadcast %cst_40 : f32 to vector<8x32xf32>
    %113 = arith.addf %112, %111 : vector<8x32xf32>
    %114 = arith.divf %112, %113 : vector<8x32xf32>
    %115 = vector.extract_strided_slice %96 {offsets = [0, 64], sizes = [8, 32], strides = [1, 1]} : vector<8x128xf32> to vector<8x32xf32>
    %116 = math.tanh %115 : vector<8x32xf32>
    %117 = vector.extract_strided_slice %96 {offsets = [0, 96], sizes = [8, 32], strides = [1, 1]} : vector<8x128xf32> to vector<8x32xf32>
    %118 = arith.negf %117 : vector<8x32xf32>
    %119 = math.exp %118 : vector<8x32xf32>
    %cst_41 = arith.constant 1.000000e+00 : f32
    %120 = vector.broadcast %cst_41 : f32 to vector<8x32xf32>
    %121 = arith.addf %120, %119 : vector<8x32xf32>
    %122 = arith.divf %120, %121 : vector<8x32xf32>
    %123 = arith.mulf %114, %47 : vector<8x32xf32>
    %124 = arith.mulf %108, %116 : vector<8x32xf32>
    %125 = arith.addf %123, %124 : vector<8x32xf32>
    %126 = math.tanh %125 : vector<8x32xf32>
    %127 = arith.mulf %122, %126 : vector<8x32xf32>
    %128 = vector.extract_strided_slice %102 {offsets = [0, 0], sizes = [8, 32], strides = [1, 1]} : vector<8x128xf32> to vector<8x32xf32>
    %129 = arith.negf %128 : vector<8x32xf32>
    %130 = math.exp %129 : vector<8x32xf32>
    %cst_42 = arith.constant 1.000000e+00 : f32
    %131 = vector.broadcast %cst_42 : f32 to vector<8x32xf32>
    %132 = arith.addf %131, %130 : vector<8x32xf32>
    %133 = arith.divf %131, %132 : vector<8x32xf32>
    %134 = vector.extract_strided_slice %102 {offsets = [0, 32], sizes = [8, 32], strides = [1, 1]} : vector<8x128xf32> to vector<8x32xf32>
    %135 = arith.negf %134 : vector<8x32xf32>
    %136 = math.exp %135 : vector<8x32xf32>
    %cst_43 = arith.constant 1.000000e+00 : f32
    %137 = vector.broadcast %cst_43 : f32 to vector<8x32xf32>
    %138 = arith.addf %137, %136 : vector<8x32xf32>
    %139 = arith.divf %137, %138 : vector<8x32xf32>
    %140 = vector.extract_strided_slice %102 {offsets = [0, 64], sizes = [8, 32], strides = [1, 1]} : vector<8x128xf32> to vector<8x32xf32>
    %141 = math.tanh %140 : vector<8x32xf32>
    %142 = vector.extract_strided_slice %102 {offsets = [0, 96], sizes = [8, 32], strides = [1, 1]} : vector<8x128xf32> to vector<8x32xf32>
    %143 = arith.negf %142 : vector<8x32xf32>
    %144 = math.exp %143 : vector<8x32xf32>
    %cst_44 = arith.constant 1.000000e+00 : f32
    %145 = vector.broadcast %cst_44 : f32 to vector<8x32xf32>
    %146 = arith.addf %145, %144 : vector<8x32xf32>
    %147 = arith.divf %145, %146 : vector<8x32xf32>
    %148 = arith.mulf %139, %81 : vector<8x32xf32>
    %149 = arith.mulf %133, %141 : vector<8x32xf32>
    %150 = arith.addf %148, %149 : vector<8x32xf32>
    %151 = math.tanh %150 : vector<8x32xf32>
    %152 = arith.mulf %147, %151 : vector<8x32xf32>
    %153 = arith.index_cast %90 : i32 to index
    %c0_45 = arith.constant 0 : index
    %c0_46 = arith.constant 0 : index
    %154 = vector.load %arg2[%153, %c0_45, %c0_46] : memref<6x8x1xf32, #tpu.memory_space<vmem>>, vector<1x8x1xf32>
    %155 = vector.shape_cast %154 : vector<1x8x1xf32> to vector<8x1xf32>
    %156 = vector.broadcast %155 : vector<8x1xf32> to vector<8x32xf32>
    %157 = arith.mulf %152, %156 : vector<8x32xf32>
    %158 = vector.broadcast %155 : vector<8x1xf32> to vector<8x32xf32>
    %159 = arith.mulf %150, %158 : vector<8x32xf32>
    %160 = arith.index_cast %c1_i32 : i32 to index
    %c0_47 = arith.constant 0 : index
    %c0_48 = arith.constant 0 : index
    %161 = vector.load %arg17[%160, %c0_47, %c0_48] : memref<6x8x32xf32, #tpu.memory_space<vmem>>, vector<1x8x32xf32>
    %162 = vector.shape_cast %161 : vector<1x8x32xf32> to vector<8x32xf32>
    %163 = vector.shape_cast %127 : vector<8x32xf32> to vector<1x8x32xf32>
    tpu.vector_store %arg17[%160, %c0_47, %c0_48], %163 {strides = array<i32>} : memref<6x8x32xf32, #tpu.memory_space<vmem>>, vector<1x8x32xf32>,
    %164 = arith.index_cast %90 : i32 to index
    %c0_49 = arith.constant 0 : index
    %c0_50 = arith.constant 0 : index
    %165 = vector.load %arg18[%164, %c0_49, %c0_50] : memref<6x8x32xf32, #tpu.memory_space<vmem>>, vector<1x8x32xf32>
    %166 = vector.shape_cast %165 : vector<1x8x32xf32> to vector<8x32xf32>
    %167 = vector.shape_cast %157 : vector<8x32xf32> to vector<1x8x32xf32>
    tpu.vector_store %arg18[%164, %c0_49, %c0_50], %167 {strides = array<i32>} : memref<6x8x32xf32, #tpu.memory_space<vmem>>, vector<1x8x32xf32>,
    %c2_i32 = arith.constant 2 : i32
    %c5_i32_51 = arith.constant 5 : i32
    %168 = arith.subi %c5_i32_51, %c2_i32 : i32
    %169 = arith.index_cast %c2_i32 : i32 to index
    %c0_52 = arith.constant 0 : index
    %c0_53 = arith.constant 0 : index
    %170 = vector.load %arg16[%169, %c0_52, %c0_53] : memref<6x8x256xf32, #tpu.memory_space<vmem>>, vector<1x8x256xf32>
    %171 = vector.shape_cast %170 : vector<1x8x256xf32> to vector<8x256xf32>
    %172 = vector.extract_strided_slice %171 {offsets = [0, 0], sizes = [8, 128], strides = [1, 1]} : vector<8x256xf32> to vector<8x128xf32>
    %cst_54 = arith.constant dense<0.000000e+00> : vector<8x128xf32>
    %173 = tpu.matmul %127, %9, %cst_54 {dimension_numbers = #tpu.dot_dimension_numbers<[1], [0], [0], [1], [0, 0, 1, 1], [], []>} : vector<8x32xf32>, vector<32x128xf32>, vector<8x128xf32> -> vector<8x128xf32>
    %174 = arith.addf %172, %173 : vector<8x128xf32>
    %175 = arith.index_cast %168 : i32 to index
    %c0_55 = arith.constant 0 : index
    %c0_56 = arith.constant 0 : index
    %176 = vector.load %arg16[%175, %c0_55, %c0_56] : memref<6x8x256xf32, #tpu.memory_space<vmem>>, vector<1x8x256xf32>
    %177 = vector.shape_cast %176 : vector<1x8x256xf32> to vector<8x256xf32>
    %178 = vector.extract_strided_slice %177 {offsets = [0, 128], sizes = [8, 128], strides = [1, 1]} : vector<8x256xf32> to vector<8x128xf32>
    %cst_57 = arith.constant dense<0.000000e+00> : vector<8x128xf32>
    %179 = tpu.matmul %157, %10, %cst_57 {dimension_numbers = #tpu.dot_dimension_numbers<[1], [0], [0], [1], [0, 0, 1, 1], [], []>} : vector<8x32xf32>, vector<32x128xf32>, vector<8x128xf32> -> vector<8x128xf32>
    %180 = arith.addf %178, %179 : vector<8x128xf32>
    %181 = vector.extract_strided_slice %174 {offsets = [0, 0], sizes = [8, 32], strides = [1, 1]} : vector<8x128xf32> to vector<8x32xf32>
    %182 = arith.negf %181 : vector<8x32xf32>
    %183 = math.exp %182 : vector<8x32xf32>
    %cst_58 = arith.constant 1.000000e+00 : f32
    %184 = vector.broadcast %cst_58 : f32 to vector<8x32xf32>
    %185 = arith.addf %184, %183 : vector<8x32xf32>
    %186 = arith.divf %184, %185 : vector<8x32xf32>
    %187 = vector.extract_strided_slice %174 {offsets = [0, 32], sizes = [8, 32], strides = [1, 1]} : vector<8x128xf32> to vector<8x32xf32>
    %188 = arith.negf %187 : vector<8x32xf32>
    %189 = math.exp %188 : vector<8x32xf32>
    %cst_59 = arith.constant 1.000000e+00 : f32
    %190 = vector.broadcast %cst_59 : f32 to vector<8x32xf32>
    %191 = arith.addf %190, %189 : vector<8x32xf32>
    %192 = arith.divf %190, %191 : vector<8x32xf32>
    %193 = vector.extract_strided_slice %174 {offsets = [0, 64], sizes = [8, 32], strides = [1, 1]} : vector<8x128xf32> to vector<8x32xf32>
    %194 = math.tanh %193 : vector<8x32xf32>
    %195 = vector.extract_strided_slice %174 {offsets = [0, 96], sizes = [8, 32], strides = [1, 1]} : vector<8x128xf32> to vector<8x32xf32>
    %196 = arith.negf %195 : vector<8x32xf32>
    %197 = math.exp %196 : vector<8x32xf32>
    %cst_60 = arith.constant 1.000000e+00 : f32
    %198 = vector.broadcast %cst_60 : f32 to vector<8x32xf32>
    %199 = arith.addf %198, %197 : vector<8x32xf32>
    %200 = arith.divf %198, %199 : vector<8x32xf32>
    %201 = arith.mulf %192, %125 : vector<8x32xf32>
    %202 = arith.mulf %186, %194 : vector<8x32xf32>
    %203 = arith.addf %201, %202 : vector<8x32xf32>
    %204 = math.tanh %203 : vector<8x32xf32>
    %205 = arith.mulf %200, %204 : vector<8x32xf32>
    %206 = vector.extract_strided_slice %180 {offsets = [0, 0], sizes = [8, 32], strides = [1, 1]} : vector<8x128xf32> to vector<8x32xf32>
    %207 = arith.negf %206 : vector<8x32xf32>
    %208 = math.exp %207 : vector<8x32xf32>
    %cst_61 = arith.constant 1.000000e+00 : f32
    %209 = vector.broadcast %cst_61 : f32 to vector<8x32xf32>
    %210 = arith.addf %209, %208 : vector<8x32xf32>
    %211 = arith.divf %209, %210 : vector<8x32xf32>
    %212 = vector.extract_strided_slice %180 {offsets = [0, 32], sizes = [8, 32], strides = [1, 1]} : vector<8x128xf32> to vector<8x32xf32>
    %213 = arith.negf %212 : vector<8x32xf32>
    %214 = math.exp %213 : vector<8x32xf32>
    %cst_62 = arith.constant 1.000000e+00 : f32
    %215 = vector.broadcast %cst_62 : f32 to vector<8x32xf32>
    %216 = arith.addf %215, %214 : vector<8x32xf32>
    %217 = arith.divf %215, %216 : vector<8x32xf32>
    %218 = vector.extract_strided_slice %180 {offsets = [0, 64], sizes = [8, 32], strides = [1, 1]} : vector<8x128xf32> to vector<8x32xf32>
    %219 = math.tanh %218 : vector<8x32xf32>
    %220 = vector.extract_strided_slice %180 {offsets = [0, 96], sizes = [8, 32], strides = [1, 1]} : vector<8x128xf32> to vector<8x32xf32>
    %221 = arith.negf %220 : vector<8x32xf32>
    %222 = math.exp %221 : vector<8x32xf32>
    %cst_63 = arith.constant 1.000000e+00 : f32
    %223 = vector.broadcast %cst_63 : f32 to vector<8x32xf32>
    %224 = arith.addf %223, %222 : vector<8x32xf32>
    %225 = arith.divf %223, %224 : vector<8x32xf32>
    %226 = arith.mulf %217, %159 : vector<8x32xf32>
    %227 = arith.mulf %211, %219 : vector<8x32xf32>
    %228 = arith.addf %226, %227 : vector<8x32xf32>
    %229 = math.tanh %228 : vector<8x32xf32>
    %230 = arith.mulf %225, %229 : vector<8x32xf32>
    %231 = arith.index_cast %168 : i32 to index
    %c0_64 = arith.constant 0 : index
    %c0_65 = arith.constant 0 : index
    %232 = vector.load %arg2[%231, %c0_64, %c0_65] : memref<6x8x1xf32, #tpu.memory_space<vmem>>, vector<1x8x1xf32>
    %233 = vector.shape_cast %232 : vector<1x8x1xf32> to vector<8x1xf32>
    %234 = vector.broadcast %233 : vector<8x1xf32> to vector<8x32xf32>
    %235 = arith.mulf %230, %234 : vector<8x32xf32>
    %236 = vector.broadcast %233 : vector<8x1xf32> to vector<8x32xf32>
    %237 = arith.mulf %228, %236 : vector<8x32xf32>
    %238 = arith.index_cast %c2_i32 : i32 to index
    %c0_66 = arith.constant 0 : index
    %c0_67 = arith.constant 0 : index
    %239 = vector.load %arg17[%238, %c0_66, %c0_67] : memref<6x8x32xf32, #tpu.memory_space<vmem>>, vector<1x8x32xf32>
    %240 = vector.shape_cast %239 : vector<1x8x32xf32> to vector<8x32xf32>
    %241 = vector.shape_cast %205 : vector<8x32xf32> to vector<1x8x32xf32>
    tpu.vector_store %arg17[%238, %c0_66, %c0_67], %241 {strides = array<i32>} : memref<6x8x32xf32, #tpu.memory_space<vmem>>, vector<1x8x32xf32>,
    %242 = arith.index_cast %168 : i32 to index
    %c0_68 = arith.constant 0 : index
    %c0_69 = arith.constant 0 : index
    %243 = vector.load %arg18[%242, %c0_68, %c0_69] : memref<6x8x32xf32, #tpu.memory_space<vmem>>, vector<1x8x32xf32>
    %244 = vector.shape_cast %243 : vector<1x8x32xf32> to vector<8x32xf32>
    %245 = vector.shape_cast %235 : vector<8x32xf32> to vector<1x8x32xf32>
    tpu.vector_store %arg18[%242, %c0_68, %c0_69], %245 {strides = array<i32>} : memref<6x8x32xf32, #tpu.memory_space<vmem>>, vector<1x8x32xf32>,
    %c3_i32 = arith.constant 3 : i32
    %c5_i32_70 = arith.constant 5 : i32
    %246 = arith.subi %c5_i32_70, %c3_i32 : i32
    %247 = arith.index_cast %c3_i32 : i32 to index
    %c0_71 = arith.constant 0 : index
    %c0_72 = arith.constant 0 : index
    %248 = vector.load %arg16[%247, %c0_71, %c0_72] : memref<6x8x256xf32, #tpu.memory_space<vmem>>, vector<1x8x256xf32>
    %249 = vector.shape_cast %248 : vector<1x8x256xf32> to vector<8x256xf32>
    %250 = vector.extract_strided_slice %249 {offsets = [0, 0], sizes = [8, 128], strides = [1, 1]} : vector<8x256xf32> to vector<8x128xf32>
    %cst_73 = arith.constant dense<0.000000e+00> : vector<8x128xf32>
    %251 = tpu.matmul %205, %9, %cst_73 {dimension_numbers = #tpu.dot_dimension_numbers<[1], [0], [0], [1], [0, 0, 1, 1], [], []>} : vector<8x32xf32>, vector<32x128xf32>, vector<8x128xf32> -> vector<8x128xf32>
    %252 = arith.addf %250, %251 : vector<8x128xf32>
    %253 = arith.index_cast %246 : i32 to index
    %c0_74 = arith.constant 0 : index
    %c0_75 = arith.constant 0 : index
    %254 = vector.load %arg16[%253, %c0_74, %c0_75] : memref<6x8x256xf32, #tpu.memory_space<vmem>>, vector<1x8x256xf32>
    %255 = vector.shape_cast %254 : vector<1x8x256xf32> to vector<8x256xf32>
    %256 = vector.extract_strided_slice %255 {offsets = [0, 128], sizes = [8, 128], strides = [1, 1]} : vector<8x256xf32> to vector<8x128xf32>
    %cst_76 = arith.constant dense<0.000000e+00> : vector<8x128xf32>
    %257 = tpu.matmul %235, %10, %cst_76 {dimension_numbers = #tpu.dot_dimension_numbers<[1], [0], [0], [1], [0, 0, 1, 1], [], []>} : vector<8x32xf32>, vector<32x128xf32>, vector<8x128xf32> -> vector<8x128xf32>
    %258 = arith.addf %256, %257 : vector<8x128xf32>
    %259 = vector.extract_strided_slice %252 {offsets = [0, 0], sizes = [8, 32], strides = [1, 1]} : vector<8x128xf32> to vector<8x32xf32>
    %260 = arith.negf %259 : vector<8x32xf32>
    %261 = math.exp %260 : vector<8x32xf32>
    %cst_77 = arith.constant 1.000000e+00 : f32
    %262 = vector.broadcast %cst_77 : f32 to vector<8x32xf32>
    %263 = arith.addf %262, %261 : vector<8x32xf32>
    %264 = arith.divf %262, %263 : vector<8x32xf32>
    %265 = vector.extract_strided_slice %252 {offsets = [0, 32], sizes = [8, 32], strides = [1, 1]} : vector<8x128xf32> to vector<8x32xf32>
    %266 = arith.negf %265 : vector<8x32xf32>
    %267 = math.exp %266 : vector<8x32xf32>
    %cst_78 = arith.constant 1.000000e+00 : f32
    %268 = vector.broadcast %cst_78 : f32 to vector<8x32xf32>
    %269 = arith.addf %268, %267 : vector<8x32xf32>
    %270 = arith.divf %268, %269 : vector<8x32xf32>
    %271 = vector.extract_strided_slice %252 {offsets = [0, 64], sizes = [8, 32], strides = [1, 1]} : vector<8x128xf32> to vector<8x32xf32>
    %272 = math.tanh %271 : vector<8x32xf32>
    %273 = vector.extract_strided_slice %252 {offsets = [0, 96], sizes = [8, 32], strides = [1, 1]} : vector<8x128xf32> to vector<8x32xf32>
    %274 = arith.negf %273 : vector<8x32xf32>
    %275 = math.exp %274 : vector<8x32xf32>
    %cst_79 = arith.constant 1.000000e+00 : f32
    %276 = vector.broadcast %cst_79 : f32 to vector<8x32xf32>
    %277 = arith.addf %276, %275 : vector<8x32xf32>
    %278 = arith.divf %276, %277 : vector<8x32xf32>
    %279 = arith.mulf %270, %203 : vector<8x32xf32>
    %280 = arith.mulf %264, %272 : vector<8x32xf32>
    %281 = arith.addf %279, %280 : vector<8x32xf32>
    %282 = math.tanh %281 : vector<8x32xf32>
    %283 = arith.mulf %278, %282 : vector<8x32xf32>
    %284 = vector.extract_strided_slice %258 {offsets = [0, 0], sizes = [8, 32], strides = [1, 1]} : vector<8x128xf32> to vector<8x32xf32>
    %285 = arith.negf %284 : vector<8x32xf32>
    %286 = math.exp %285 : vector<8x32xf32>
    %cst_80 = arith.constant 1.000000e+00 : f32
    %287 = vector.broadcast %cst_80 : f32 to vector<8x32xf32>
    %288 = arith.addf %287, %286 : vector<8x32xf32>
    %289 = arith.divf %287, %288 : vector<8x32xf32>
    %290 = vector.extract_strided_slice %258 {offsets = [0, 32], sizes = [8, 32], strides = [1, 1]} : vector<8x128xf32> to vector<8x32xf32>
    %291 = arith.negf %290 : vector<8x32xf32>
    %292 = math.exp %291 : vector<8x32xf32>
    %cst_81 = arith.constant 1.000000e+00 : f32
    %293 = vector.broadcast %cst_81 : f32 to vector<8x32xf32>
    %294 = arith.addf %293, %292 : vector<8x32xf32>
    %295 = arith.divf %293, %294 : vector<8x32xf32>
    %296 = vector.extract_strided_slice %258 {offsets = [0, 64], sizes = [8, 32], strides = [1, 1]} : vector<8x128xf32> to vector<8x32xf32>
    %297 = math.tanh %296 : vector<8x32xf32>
    %298 = vector.extract_strided_slice %258 {offsets = [0, 96], sizes = [8, 32], strides = [1, 1]} : vector<8x128xf32> to vector<8x32xf32>
    %299 = arith.negf %298 : vector<8x32xf32>
    %300 = math.exp %299 : vector<8x32xf32>
    %cst_82 = arith.constant 1.000000e+00 : f32
    %301 = vector.broadcast %cst_82 : f32 to vector<8x32xf32>
    %302 = arith.addf %301, %300 : vector<8x32xf32>
    %303 = arith.divf %301, %302 : vector<8x32xf32>
    %304 = arith.mulf %295, %237 : vector<8x32xf32>
    %305 = arith.mulf %289, %297 : vector<8x32xf32>
    %306 = arith.addf %304, %305 : vector<8x32xf32>
    %307 = math.tanh %306 : vector<8x32xf32>
    %308 = arith.mulf %303, %307 : vector<8x32xf32>
    %309 = arith.index_cast %246 : i32 to index
    %c0_83 = arith.constant 0 : index
    %c0_84 = arith.constant 0 : index
    %310 = vector.load %arg2[%309, %c0_83, %c0_84] : memref<6x8x1xf32, #tpu.memory_space<vmem>>, vector<1x8x1xf32>
    %311 = vector.shape_cast %310 : vector<1x8x1xf32> to vector<8x1xf32>
    %312 = vector.broadcast %311 : vector<8x1xf32> to vector<8x32xf32>
    %313 = arith.mulf %308, %312 : vector<8x32xf32>
    %314 = vector.broadcast %311 : vector<8x1xf32> to vector<8x32xf32>
    %315 = arith.mulf %306, %314 : vector<8x32xf32>
    %316 = arith.index_cast %c3_i32 : i32 to index
    %c0_85 = arith.constant 0 : index
    %c0_86 = arith.constant 0 : index
    %317 = vector.load %arg17[%316, %c0_85, %c0_86] : memref<6x8x32xf32, #tpu.memory_space<vmem>>, vector<1x8x32xf32>
    %318 = vector.shape_cast %317 : vector<1x8x32xf32> to vector<8x32xf32>
    %319 = vector.shape_cast %283 : vector<8x32xf32> to vector<1x8x32xf32>
    tpu.vector_store %arg17[%316, %c0_85, %c0_86], %319 {strides = array<i32>} : memref<6x8x32xf32, #tpu.memory_space<vmem>>, vector<1x8x32xf32>,
    %320 = arith.index_cast %246 : i32 to index
    %c0_87 = arith.constant 0 : index
    %c0_88 = arith.constant 0 : index
    %321 = vector.load %arg18[%320, %c0_87, %c0_88] : memref<6x8x32xf32, #tpu.memory_space<vmem>>, vector<1x8x32xf32>
    %322 = vector.shape_cast %321 : vector<1x8x32xf32> to vector<8x32xf32>
    %323 = vector.shape_cast %313 : vector<8x32xf32> to vector<1x8x32xf32>
    tpu.vector_store %arg18[%320, %c0_87, %c0_88], %323 {strides = array<i32>} : memref<6x8x32xf32, #tpu.memory_space<vmem>>, vector<1x8x32xf32>,
    %c4_i32 = arith.constant 4 : i32
    %c5_i32_89 = arith.constant 5 : i32
    %324 = arith.subi %c5_i32_89, %c4_i32 : i32
    %325 = arith.index_cast %c4_i32 : i32 to index
    %c0_90 = arith.constant 0 : index
    %c0_91 = arith.constant 0 : index
    %326 = vector.load %arg16[%325, %c0_90, %c0_91] : memref<6x8x256xf32, #tpu.memory_space<vmem>>, vector<1x8x256xf32>
    %327 = vector.shape_cast %326 : vector<1x8x256xf32> to vector<8x256xf32>
    %328 = vector.extract_strided_slice %327 {offsets = [0, 0], sizes = [8, 128], strides = [1, 1]} : vector<8x256xf32> to vector<8x128xf32>
    %cst_92 = arith.constant dense<0.000000e+00> : vector<8x128xf32>
    %329 = tpu.matmul %283, %9, %cst_92 {dimension_numbers = #tpu.dot_dimension_numbers<[1], [0], [0], [1], [0, 0, 1, 1], [], []>} : vector<8x32xf32>, vector<32x128xf32>, vector<8x128xf32> -> vector<8x128xf32>
    %330 = arith.addf %328, %329 : vector<8x128xf32>
    %331 = arith.index_cast %324 : i32 to index
    %c0_93 = arith.constant 0 : index
    %c0_94 = arith.constant 0 : index
    %332 = vector.load %arg16[%331, %c0_93, %c0_94] : memref<6x8x256xf32, #tpu.memory_space<vmem>>, vector<1x8x256xf32>
    %333 = vector.shape_cast %332 : vector<1x8x256xf32> to vector<8x256xf32>
    %334 = vector.extract_strided_slice %333 {offsets = [0, 128], sizes = [8, 128], strides = [1, 1]} : vector<8x256xf32> to vector<8x128xf32>
    %cst_95 = arith.constant dense<0.000000e+00> : vector<8x128xf32>
    %335 = tpu.matmul %313, %10, %cst_95 {dimension_numbers = #tpu.dot_dimension_numbers<[1], [0], [0], [1], [0, 0, 1, 1], [], []>} : vector<8x32xf32>, vector<32x128xf32>, vector<8x128xf32> -> vector<8x128xf32>
    %336 = arith.addf %334, %335 : vector<8x128xf32>
    %337 = vector.extract_strided_slice %330 {offsets = [0, 0], sizes = [8, 32], strides = [1, 1]} : vector<8x128xf32> to vector<8x32xf32>
    %338 = arith.negf %337 : vector<8x32xf32>
    %339 = math.exp %338 : vector<8x32xf32>
    %cst_96 = arith.constant 1.000000e+00 : f32
    %340 = vector.broadcast %cst_96 : f32 to vector<8x32xf32>
    %341 = arith.addf %340, %339 : vector<8x32xf32>
    %342 = arith.divf %340, %341 : vector<8x32xf32>
    %343 = vector.extract_strided_slice %330 {offsets = [0, 32], sizes = [8, 32], strides = [1, 1]} : vector<8x128xf32> to vector<8x32xf32>
    %344 = arith.negf %343 : vector<8x32xf32>
    %345 = math.exp %344 : vector<8x32xf32>
    %cst_97 = arith.constant 1.000000e+00 : f32
    %346 = vector.broadcast %cst_97 : f32 to vector<8x32xf32>
    %347 = arith.addf %346, %345 : vector<8x32xf32>
    %348 = arith.divf %346, %347 : vector<8x32xf32>
    %349 = vector.extract_strided_slice %330 {offsets = [0, 64], sizes = [8, 32], strides = [1, 1]} : vector<8x128xf32> to vector<8x32xf32>
    %350 = math.tanh %349 : vector<8x32xf32>
    %351 = vector.extract_strided_slice %330 {offsets = [0, 96], sizes = [8, 32], strides = [1, 1]} : vector<8x128xf32> to vector<8x32xf32>
    %352 = arith.negf %351 : vector<8x32xf32>
    %353 = math.exp %352 : vector<8x32xf32>
    %cst_98 = arith.constant 1.000000e+00 : f32
    %354 = vector.broadcast %cst_98 : f32 to vector<8x32xf32>
    %355 = arith.addf %354, %353 : vector<8x32xf32>
    %356 = arith.divf %354, %355 : vector<8x32xf32>
    %357 = arith.mulf %348, %281 : vector<8x32xf32>
    %358 = arith.mulf %342, %350 : vector<8x32xf32>
    %359 = arith.addf %357, %358 : vector<8x32xf32>
    %360 = math.tanh %359 : vector<8x32xf32>
    %361 = arith.mulf %356, %360 : vector<8x32xf32>
    %362 = vector.extract_strided_slice %336 {offsets = [0, 0], sizes = [8, 32], strides = [1, 1]} : vector<8x128xf32> to vector<8x32xf32>
    %363 = arith.negf %362 : vector<8x32xf32>
    %364 = math.exp %363 : vector<8x32xf32>
    %cst_99 = arith.constant 1.000000e+00 : f32
    %365 = vector.broadcast %cst_99 : f32 to vector<8x32xf32>
    %366 = arith.addf %365, %364 : vector<8x32xf32>
    %367 = arith.divf %365, %366 : vector<8x32xf32>
    %368 = vector.extract_strided_slice %336 {offsets = [0, 32], sizes = [8, 32], strides = [1, 1]} : vector<8x128xf32> to vector<8x32xf32>
    %369 = arith.negf %368 : vector<8x32xf32>
    %370 = math.exp %369 : vector<8x32xf32>
    %cst_100 = arith.constant 1.000000e+00 : f32
    %371 = vector.broadcast %cst_100 : f32 to vector<8x32xf32>
    %372 = arith.addf %371, %370 : vector<8x32xf32>
    %373 = arith.divf %371, %372 : vector<8x32xf32>
    %374 = vector.extract_strided_slice %336 {offsets = [0, 64], sizes = [8, 32], strides = [1, 1]} : vector<8x128xf32> to vector<8x32xf32>
    %375 = math.tanh %374 : vector<8x32xf32>
    %376 = vector.extract_strided_slice %336 {offsets = [0, 96], sizes = [8, 32], strides = [1, 1]} : vector<8x128xf32> to vector<8x32xf32>
    %377 = arith.negf %376 : vector<8x32xf32>
    %378 = math.exp %377 : vector<8x32xf32>
    %cst_101 = arith.constant 1.000000e+00 : f32
    %379 = vector.broadcast %cst_101 : f32 to vector<8x32xf32>
    %380 = arith.addf %379, %378 : vector<8x32xf32>
    %381 = arith.divf %379, %380 : vector<8x32xf32>
    %382 = arith.mulf %373, %315 : vector<8x32xf32>
    %383 = arith.mulf %367, %375 : vector<8x32xf32>
    %384 = arith.addf %382, %383 : vector<8x32xf32>
    %385 = math.tanh %384 : vector<8x32xf32>
    %386 = arith.mulf %381, %385 : vector<8x32xf32>
    %387 = arith.index_cast %324 : i32 to index
    %c0_102 = arith.constant 0 : index
    %c0_103 = arith.constant 0 : index
    %388 = vector.load %arg2[%387, %c0_102, %c0_103] : memref<6x8x1xf32, #tpu.memory_space<vmem>>, vector<1x8x1xf32>
    %389 = vector.shape_cast %388 : vector<1x8x1xf32> to vector<8x1xf32>
    %390 = vector.broadcast %389 : vector<8x1xf32> to vector<8x32xf32>
    %391 = arith.mulf %386, %390 : vector<8x32xf32>
    %392 = vector.broadcast %389 : vector<8x1xf32> to vector<8x32xf32>
    %393 = arith.mulf %384, %392 : vector<8x32xf32>
    %394 = arith.index_cast %c4_i32 : i32 to index
    %c0_104 = arith.constant 0 : index
    %c0_105 = arith.constant 0 : index
    %395 = vector.load %arg17[%394, %c0_104, %c0_105] : memref<6x8x32xf32, #tpu.memory_space<vmem>>, vector<1x8x32xf32>
    %396 = vector.shape_cast %395 : vector<1x8x32xf32> to vector<8x32xf32>
    %397 = vector.shape_cast %361 : vector<8x32xf32> to vector<1x8x32xf32>
    tpu.vector_store %arg17[%394, %c0_104, %c0_105], %397 {strides = array<i32>} : memref<6x8x32xf32, #tpu.memory_space<vmem>>, vector<1x8x32xf32>,
    %398 = arith.index_cast %324 : i32 to index
    %c0_106 = arith.constant 0 : index
    %c0_107 = arith.constant 0 : index
    %399 = vector.load %arg18[%398, %c0_106, %c0_107] : memref<6x8x32xf32, #tpu.memory_space<vmem>>, vector<1x8x32xf32>
    %400 = vector.shape_cast %399 : vector<1x8x32xf32> to vector<8x32xf32>
    %401 = vector.shape_cast %391 : vector<8x32xf32> to vector<1x8x32xf32>
    tpu.vector_store %arg18[%398, %c0_106, %c0_107], %401 {strides = array<i32>} : memref<6x8x32xf32, #tpu.memory_space<vmem>>, vector<1x8x32xf32>,
    %c5_i32_108 = arith.constant 5 : i32
    %c5_i32_109 = arith.constant 5 : i32
    %402 = arith.subi %c5_i32_109, %c5_i32_108 : i32
    %403 = arith.index_cast %c5_i32_108 : i32 to index
    %c0_110 = arith.constant 0 : index
    %c0_111 = arith.constant 0 : index
    %404 = vector.load %arg16[%403, %c0_110, %c0_111] : memref<6x8x256xf32, #tpu.memory_space<vmem>>, vector<1x8x256xf32>
    %405 = vector.shape_cast %404 : vector<1x8x256xf32> to vector<8x256xf32>
    %406 = vector.extract_strided_slice %405 {offsets = [0, 0], sizes = [8, 128], strides = [1, 1]} : vector<8x256xf32> to vector<8x128xf32>
    %cst_112 = arith.constant dense<0.000000e+00> : vector<8x128xf32>
    %407 = tpu.matmul %361, %9, %cst_112 {dimension_numbers = #tpu.dot_dimension_numbers<[1], [0], [0], [1], [0, 0, 1, 1], [], []>} : vector<8x32xf32>, vector<32x128xf32>, vector<8x128xf32> -> vector<8x128xf32>
    %408 = arith.addf %406, %407 : vector<8x128xf32>
    %409 = arith.index_cast %402 : i32 to index
    %c0_113 = arith.constant 0 : index
    %c0_114 = arith.constant 0 : index
    %410 = vector.load %arg16[%409, %c0_113, %c0_114] : memref<6x8x256xf32, #tpu.memory_space<vmem>>, vector<1x8x256xf32>
    %411 = vector.shape_cast %410 : vector<1x8x256xf32> to vector<8x256xf32>
    %412 = vector.extract_strided_slice %411 {offsets = [0, 128], sizes = [8, 128], strides = [1, 1]} : vector<8x256xf32> to vector<8x128xf32>
    %cst_115 = arith.constant dense<0.000000e+00> : vector<8x128xf32>
    %413 = tpu.matmul %391, %10, %cst_115 {dimension_numbers = #tpu.dot_dimension_numbers<[1], [0], [0], [1], [0, 0, 1, 1], [], []>} : vector<8x32xf32>, vector<32x128xf32>, vector<8x128xf32> -> vector<8x128xf32>
    %414 = arith.addf %412, %413 : vector<8x128xf32>
    %415 = vector.extract_strided_slice %408 {offsets = [0, 0], sizes = [8, 32], strides = [1, 1]} : vector<8x128xf32> to vector<8x32xf32>
    %416 = arith.negf %415 : vector<8x32xf32>
    %417 = math.exp %416 : vector<8x32xf32>
    %cst_116 = arith.constant 1.000000e+00 : f32
    %418 = vector.broadcast %cst_116 : f32 to vector<8x32xf32>
    %419 = arith.addf %418, %417 : vector<8x32xf32>
    %420 = arith.divf %418, %419 : vector<8x32xf32>
    %421 = vector.extract_strided_slice %408 {offsets = [0, 32], sizes = [8, 32], strides = [1, 1]} : vector<8x128xf32> to vector<8x32xf32>
    %422 = arith.negf %421 : vector<8x32xf32>
    %423 = math.exp %422 : vector<8x32xf32>
    %cst_117 = arith.constant 1.000000e+00 : f32
    %424 = vector.broadcast %cst_117 : f32 to vector<8x32xf32>
    %425 = arith.addf %424, %423 : vector<8x32xf32>
    %426 = arith.divf %424, %425 : vector<8x32xf32>
    %427 = vector.extract_strided_slice %408 {offsets = [0, 64], sizes = [8, 32], strides = [1, 1]} : vector<8x128xf32> to vector<8x32xf32>
    %428 = math.tanh %427 : vector<8x32xf32>
    %429 = vector.extract_strided_slice %408 {offsets = [0, 96], sizes = [8, 32], strides = [1, 1]} : vector<8x128xf32> to vector<8x32xf32>
    %430 = arith.negf %429 : vector<8x32xf32>
    %431 = math.exp %430 : vector<8x32xf32>
    %cst_118 = arith.constant 1.000000e+00 : f32
    %432 = vector.broadcast %cst_118 : f32 to vector<8x32xf32>
    %433 = arith.addf %432, %431 : vector<8x32xf32>
    %434 = arith.divf %432, %433 : vector<8x32xf32>
    %435 = arith.mulf %426, %359 : vector<8x32xf32>
    %436 = arith.mulf %420, %428 : vector<8x32xf32>
    %437 = arith.addf %435, %436 : vector<8x32xf32>
    %438 = math.tanh %437 : vector<8x32xf32>
    %439 = arith.mulf %434, %438 : vector<8x32xf32>
    %440 = vector.extract_strided_slice %414 {offsets = [0, 0], sizes = [8, 32], strides = [1, 1]} : vector<8x128xf32> to vector<8x32xf32>
    %441 = arith.negf %440 : vector<8x32xf32>
    %442 = math.exp %441 : vector<8x32xf32>
    %cst_119 = arith.constant 1.000000e+00 : f32
    %443 = vector.broadcast %cst_119 : f32 to vector<8x32xf32>
    %444 = arith.addf %443, %442 : vector<8x32xf32>
    %445 = arith.divf %443, %444 : vector<8x32xf32>
    %446 = vector.extract_strided_slice %414 {offsets = [0, 32], sizes = [8, 32], strides = [1, 1]} : vector<8x128xf32> to vector<8x32xf32>
    %447 = arith.negf %446 : vector<8x32xf32>
    %448 = math.exp %447 : vector<8x32xf32>
    %cst_120 = arith.constant 1.000000e+00 : f32
    %449 = vector.broadcast %cst_120 : f32 to vector<8x32xf32>
    %450 = arith.addf %449, %448 : vector<8x32xf32>
    %451 = arith.divf %449, %450 : vector<8x32xf32>
    %452 = vector.extract_strided_slice %414 {offsets = [0, 64], sizes = [8, 32], strides = [1, 1]} : vector<8x128xf32> to vector<8x32xf32>
    %453 = math.tanh %452 : vector<8x32xf32>
    %454 = vector.extract_strided_slice %414 {offsets = [0, 96], sizes = [8, 32], strides = [1, 1]} : vector<8x128xf32> to vector<8x32xf32>
    %455 = arith.negf %454 : vector<8x32xf32>
    %456 = math.exp %455 : vector<8x32xf32>
    %cst_121 = arith.constant 1.000000e+00 : f32
    %457 = vector.broadcast %cst_121 : f32 to vector<8x32xf32>
    %458 = arith.addf %457, %456 : vector<8x32xf32>
    %459 = arith.divf %457, %458 : vector<8x32xf32>
    %460 = arith.mulf %451, %393 : vector<8x32xf32>
    %461 = arith.mulf %445, %453 : vector<8x32xf32>
    %462 = arith.addf %460, %461 : vector<8x32xf32>
    %463 = math.tanh %462 : vector<8x32xf32>
    %464 = arith.mulf %459, %463 : vector<8x32xf32>
    %465 = arith.index_cast %402 : i32 to index
    %c0_122 = arith.constant 0 : index
    %c0_123 = arith.constant 0 : index
    %466 = vector.load %arg2[%465, %c0_122, %c0_123] : memref<6x8x1xf32, #tpu.memory_space<vmem>>, vector<1x8x1xf32>
    %467 = vector.shape_cast %466 : vector<1x8x1xf32> to vector<8x1xf32>
    %468 = vector.broadcast %467 : vector<8x1xf32> to vector<8x32xf32>
    %469 = arith.mulf %464, %468 : vector<8x32xf32>
    %470 = vector.broadcast %467 : vector<8x1xf32> to vector<8x32xf32>
    %471 = arith.mulf %462, %470 : vector<8x32xf32>
    %472 = arith.index_cast %c5_i32_108 : i32 to index
    %c0_124 = arith.constant 0 : index
    %c0_125 = arith.constant 0 : index
    %473 = vector.load %arg17[%472, %c0_124, %c0_125] : memref<6x8x32xf32, #tpu.memory_space<vmem>>, vector<1x8x32xf32>
    %474 = vector.shape_cast %473 : vector<1x8x32xf32> to vector<8x32xf32>
    %475 = vector.shape_cast %439 : vector<8x32xf32> to vector<1x8x32xf32>
    tpu.vector_store %arg17[%472, %c0_124, %c0_125], %475 {strides = array<i32>} : memref<6x8x32xf32, #tpu.memory_space<vmem>>, vector<1x8x32xf32>,
    %476 = arith.index_cast %402 : i32 to index
    %c0_126 = arith.constant 0 : index
    %c0_127 = arith.constant 0 : index
    %477 = vector.load %arg18[%476, %c0_126, %c0_127] : memref<6x8x32xf32, #tpu.memory_space<vmem>>, vector<1x8x32xf32>
    %478 = vector.shape_cast %477 : vector<1x8x32xf32> to vector<8x32xf32>
    %479 = vector.shape_cast %469 : vector<8x32xf32> to vector<1x8x32xf32>
    tpu.vector_store %arg18[%476, %c0_126, %c0_127], %479 {strides = array<i32>} : memref<6x8x32xf32, #tpu.memory_space<vmem>>, vector<1x8x32xf32>,
    %c6_i32 = arith.constant 6 : i32
    %c0_128 = arith.constant 0 : index
    %c0_129 = arith.constant 0 : index
    %c0_130 = arith.constant 0 : index
    %480 = vector.load %arg17[%c0_128, %c0_129, %c0_130] : memref<6x8x32xf32, #tpu.memory_space<vmem>>, vector<6x8x32xf32>
    %481 = vector.shape_cast %480 : vector<6x8x32xf32> to vector<48x32xf32>
    %c0_131 = arith.constant 0 : index
    %c0_132 = arith.constant 0 : index
    %c0_133 = arith.constant 0 : index
    %482 = vector.load %arg18[%c0_131, %c0_132, %c0_133] : memref<6x8x32xf32, #tpu.memory_space<vmem>>, vector<6x8x32xf32>
    %483 = vector.shape_cast %482 : vector<6x8x32xf32> to vector<48x32xf32>
    %c0_134 = arith.constant 0 : index
    %c0_135 = arith.constant 0 : index
    %484 = vector.load %arg7[%c0_134, %c0_135] : memref<32x256xf32, #tpu.memory_space<vmem>>, vector<32x256xf32>
    %cst_136 = arith.constant dense<0.000000e+00> : vector<48x256xf32>
    %485 = tpu.matmul %481, %484, %cst_136 {dimension_numbers = #tpu.dot_dimension_numbers<[1], [0], [0], [1], [0, 0, 1, 1], [], []>} : vector<48x32xf32>, vector<32x256xf32>, vector<48x256xf32> -> vector<48x256xf32>
    %c0_137 = arith.constant 0 : index
    %c0_138 = arith.constant 0 : index
    %486 = vector.load %arg8[%c0_137, %c0_138] : memref<32x256xf32, #tpu.memory_space<vmem>>, vector<32x256xf32>
    %cst_139 = arith.constant dense<0.000000e+00> : vector<48x256xf32>
    %487 = tpu.matmul %483, %486, %cst_139 {dimension_numbers = #tpu.dot_dimension_numbers<[1], [0], [0], [1], [0, 0, 1, 1], [], []>} : vector<48x32xf32>, vector<32x256xf32>, vector<48x256xf32> -> vector<48x256xf32>
    %488 = arith.addf %485, %487 : vector<48x256xf32>
    %c0_140 = arith.constant 0 : index
    %c0_141 = arith.constant 0 : index
    %489 = vector.load %arg9[%c0_140, %c0_141] : memref<1x256xf32, #tpu.memory_space<vmem>>, vector<1x256xf32>
    %490 = vector.broadcast %489 : vector<1x256xf32> to vector<48x256xf32>
    %491 = arith.addf %488, %490 : vector<48x256xf32>
    %492 = vector.shape_cast %491 : vector<48x256xf32> to vector<6x8x256xf32>
    %c0_142 = arith.constant 0 : index
    %c0_143 = arith.constant 0 : index
    %c0_144 = arith.constant 0 : index
    %493 = vector.load %arg16[%c0_142, %c0_143, %c0_144] : memref<6x8x256xf32, #tpu.memory_space<vmem>>, vector<6x8x256xf32>
    tpu.vector_store %arg16[%c0_142, %c0_143, %c0_144], %492 {strides = array<i32>} : memref<6x8x256xf32, #tpu.memory_space<vmem>>, vector<6x8x256xf32>,
    %c0_145 = arith.constant 0 : index
    %c0_146 = arith.constant 0 : index
    %494 = vector.load %arg10[%c0_145, %c0_146] : memref<32x128xf32, #tpu.memory_space<vmem>>, vector<32x128xf32>
    %c0_147 = arith.constant 0 : index
    %c0_148 = arith.constant 0 : index
    %495 = vector.load %arg11[%c0_147, %c0_148] : memref<32x128xf32, #tpu.memory_space<vmem>>, vector<32x128xf32>
    %cst_149 = arith.constant 0.000000e+00 : f32
    %496 = vector.broadcast %cst_149 : f32 to vector<8x32xf32>
    %c0_i32_150 = arith.constant 0 : i32
    %c5_i32_151 = arith.constant 5 : i32
    %497 = arith.subi %c5_i32_151, %c0_i32_150 : i32
    %498 = arith.index_cast %c0_i32_150 : i32 to index
    %c0_152 = arith.constant 0 : index
    %c0_153 = arith.constant 0 : index
    %499 = vector.load %arg16[%498, %c0_152, %c0_153] : memref<6x8x256xf32, #tpu.memory_space<vmem>>, vector<1x8x256xf32>
    %500 = vector.shape_cast %499 : vector<1x8x256xf32> to vector<8x256xf32>
    %501 = vector.extract_strided_slice %500 {offsets = [0, 0], sizes = [8, 128], strides = [1, 1]} : vector<8x256xf32> to vector<8x128xf32>
    %cst_154 = arith.constant dense<0.000000e+00> : vector<8x128xf32>
    %502 = tpu.matmul %496, %494, %cst_154 {dimension_numbers = #tpu.dot_dimension_numbers<[1], [0], [0], [1], [0, 0, 1, 1], [], []>} : vector<8x32xf32>, vector<32x128xf32>, vector<8x128xf32> -> vector<8x128xf32>
    %503 = arith.addf %501, %502 : vector<8x128xf32>
    %504 = arith.index_cast %497 : i32 to index
    %c0_155 = arith.constant 0 : index
    %c0_156 = arith.constant 0 : index
    %505 = vector.load %arg16[%504, %c0_155, %c0_156] : memref<6x8x256xf32, #tpu.memory_space<vmem>>, vector<1x8x256xf32>
    %506 = vector.shape_cast %505 : vector<1x8x256xf32> to vector<8x256xf32>
    %507 = vector.extract_strided_slice %506 {offsets = [0, 128], sizes = [8, 128], strides = [1, 1]} : vector<8x256xf32> to vector<8x128xf32>
    %cst_157 = arith.constant dense<0.000000e+00> : vector<8x128xf32>
    %508 = tpu.matmul %496, %495, %cst_157 {dimension_numbers = #tpu.dot_dimension_numbers<[1], [0], [0], [1], [0, 0, 1, 1], [], []>} : vector<8x32xf32>, vector<32x128xf32>, vector<8x128xf32> -> vector<8x128xf32>
    %509 = arith.addf %507, %508 : vector<8x128xf32>
    %510 = vector.extract_strided_slice %503 {offsets = [0, 0], sizes = [8, 32], strides = [1, 1]} : vector<8x128xf32> to vector<8x32xf32>
    %511 = arith.negf %510 : vector<8x32xf32>
    %512 = math.exp %511 : vector<8x32xf32>
    %cst_158 = arith.constant 1.000000e+00 : f32
    %513 = vector.broadcast %cst_158 : f32 to vector<8x32xf32>
    %514 = arith.addf %513, %512 : vector<8x32xf32>
    %515 = arith.divf %513, %514 : vector<8x32xf32>
    %516 = vector.extract_strided_slice %503 {offsets = [0, 32], sizes = [8, 32], strides = [1, 1]} : vector<8x128xf32> to vector<8x32xf32>
    %517 = arith.negf %516 : vector<8x32xf32>
    %518 = math.exp %517 : vector<8x32xf32>
    %cst_159 = arith.constant 1.000000e+00 : f32
    %519 = vector.broadcast %cst_159 : f32 to vector<8x32xf32>
    %520 = arith.addf %519, %518 : vector<8x32xf32>
    %521 = arith.divf %519, %520 : vector<8x32xf32>
    %522 = vector.extract_strided_slice %503 {offsets = [0, 64], sizes = [8, 32], strides = [1, 1]} : vector<8x128xf32> to vector<8x32xf32>
    %523 = math.tanh %522 : vector<8x32xf32>
    %524 = vector.extract_strided_slice %503 {offsets = [0, 96], sizes = [8, 32], strides = [1, 1]} : vector<8x128xf32> to vector<8x32xf32>
    %525 = arith.negf %524 : vector<8x32xf32>
    %526 = math.exp %525 : vector<8x32xf32>
    %cst_160 = arith.constant 1.000000e+00 : f32
    %527 = vector.broadcast %cst_160 : f32 to vector<8x32xf32>
    %528 = arith.addf %527, %526 : vector<8x32xf32>
    %529 = arith.divf %527, %528 : vector<8x32xf32>
    %530 = arith.mulf %521, %496 : vector<8x32xf32>
    %531 = arith.mulf %515, %523 : vector<8x32xf32>
    %532 = arith.addf %530, %531 : vector<8x32xf32>
    %533 = math.tanh %532 : vector<8x32xf32>
    %534 = arith.mulf %529, %533 : vector<8x32xf32>
    %535 = vector.extract_strided_slice %509 {offsets = [0, 0], sizes = [8, 32], strides = [1, 1]} : vector<8x128xf32> to vector<8x32xf32>
    %536 = arith.negf %535 : vector<8x32xf32>
    %537 = math.exp %536 : vector<8x32xf32>
    %cst_161 = arith.constant 1.000000e+00 : f32
    %538 = vector.broadcast %cst_161 : f32 to vector<8x32xf32>
    %539 = arith.addf %538, %537 : vector<8x32xf32>
    %540 = arith.divf %538, %539 : vector<8x32xf32>
    %541 = vector.extract_strided_slice %509 {offsets = [0, 32], sizes = [8, 32], strides = [1, 1]} : vector<8x128xf32> to vector<8x32xf32>
    %542 = arith.negf %541 : vector<8x32xf32>
    %543 = math.exp %542 : vector<8x32xf32>
    %cst_162 = arith.constant 1.000000e+00 : f32
    %544 = vector.broadcast %cst_162 : f32 to vector<8x32xf32>
    %545 = arith.addf %544, %543 : vector<8x32xf32>
    %546 = arith.divf %544, %545 : vector<8x32xf32>
    %547 = vector.extract_strided_slice %509 {offsets = [0, 64], sizes = [8, 32], strides = [1, 1]} : vector<8x128xf32> to vector<8x32xf32>
    %548 = math.tanh %547 : vector<8x32xf32>
    %549 = vector.extract_strided_slice %509 {offsets = [0, 96], sizes = [8, 32], strides = [1, 1]} : vector<8x128xf32> to vector<8x32xf32>
    %550 = arith.negf %549 : vector<8x32xf32>
    %551 = math.exp %550 : vector<8x32xf32>
    %cst_163 = arith.constant 1.000000e+00 : f32
    %552 = vector.broadcast %cst_163 : f32 to vector<8x32xf32>
    %553 = arith.addf %552, %551 : vector<8x32xf32>
    %554 = arith.divf %552, %553 : vector<8x32xf32>
    %555 = arith.mulf %546, %496 : vector<8x32xf32>
    %556 = arith.mulf %540, %548 : vector<8x32xf32>
    %557 = arith.addf %555, %556 : vector<8x32xf32>
    %558 = math.tanh %557 : vector<8x32xf32>
    %559 = arith.mulf %554, %558 : vector<8x32xf32>
    %560 = arith.index_cast %497 : i32 to index
    %c0_164 = arith.constant 0 : index
    %c0_165 = arith.constant 0 : index
    %561 = vector.load %arg2[%560, %c0_164, %c0_165] : memref<6x8x1xf32, #tpu.memory_space<vmem>>, vector<1x8x1xf32>
    %562 = vector.shape_cast %561 : vector<1x8x1xf32> to vector<8x1xf32>
    %563 = vector.broadcast %562 : vector<8x1xf32> to vector<8x32xf32>
    %564 = arith.mulf %559, %563 : vector<8x32xf32>
    %565 = vector.broadcast %562 : vector<8x1xf32> to vector<8x32xf32>
    %566 = arith.mulf %557, %565 : vector<8x32xf32>
    %567 = arith.index_cast %c0_i32_150 : i32 to index
    %c0_166 = arith.constant 0 : index
    %c0_167 = arith.constant 0 : index
    %568 = vector.load %arg17[%567, %c0_166, %c0_167] : memref<6x8x32xf32, #tpu.memory_space<vmem>>, vector<1x8x32xf32>
    %569 = vector.shape_cast %568 : vector<1x8x32xf32> to vector<8x32xf32>
    %570 = vector.shape_cast %534 : vector<8x32xf32> to vector<1x8x32xf32>
    tpu.vector_store %arg17[%567, %c0_166, %c0_167], %570 {strides = array<i32>} : memref<6x8x32xf32, #tpu.memory_space<vmem>>, vector<1x8x32xf32>,
    %571 = arith.index_cast %497 : i32 to index
    %c0_168 = arith.constant 0 : index
    %c0_169 = arith.constant 0 : index
    %572 = vector.load %arg18[%571, %c0_168, %c0_169] : memref<6x8x32xf32, #tpu.memory_space<vmem>>, vector<1x8x32xf32>
    %573 = vector.shape_cast %572 : vector<1x8x32xf32> to vector<8x32xf32>
    %574 = vector.shape_cast %564 : vector<8x32xf32> to vector<1x8x32xf32>
    tpu.vector_store %arg18[%571, %c0_168, %c0_169], %574 {strides = array<i32>} : memref<6x8x32xf32, #tpu.memory_space<vmem>>, vector<1x8x32xf32>,
    %c1_i32_170 = arith.constant 1 : i32
    %c5_i32_171 = arith.constant 5 : i32
    %575 = arith.subi %c5_i32_171, %c1_i32_170 : i32
    %576 = arith.index_cast %c1_i32_170 : i32 to index
    %c0_172 = arith.constant 0 : index
    %c0_173 = arith.constant 0 : index
    %577 = vector.load %arg16[%576, %c0_172, %c0_173] : memref<6x8x256xf32, #tpu.memory_space<vmem>>, vector<1x8x256xf32>
    %578 = vector.shape_cast %577 : vector<1x8x256xf32> to vector<8x256xf32>
    %579 = vector.extract_strided_slice %578 {offsets = [0, 0], sizes = [8, 128], strides = [1, 1]} : vector<8x256xf32> to vector<8x128xf32>
    %cst_174 = arith.constant dense<0.000000e+00> : vector<8x128xf32>
    %580 = tpu.matmul %534, %494, %cst_174 {dimension_numbers = #tpu.dot_dimension_numbers<[1], [0], [0], [1], [0, 0, 1, 1], [], []>} : vector<8x32xf32>, vector<32x128xf32>, vector<8x128xf32> -> vector<8x128xf32>
    %581 = arith.addf %579, %580 : vector<8x128xf32>
    %582 = arith.index_cast %575 : i32 to index
    %c0_175 = arith.constant 0 : index
    %c0_176 = arith.constant 0 : index
    %583 = vector.load %arg16[%582, %c0_175, %c0_176] : memref<6x8x256xf32, #tpu.memory_space<vmem>>, vector<1x8x256xf32>
    %584 = vector.shape_cast %583 : vector<1x8x256xf32> to vector<8x256xf32>
    %585 = vector.extract_strided_slice %584 {offsets = [0, 128], sizes = [8, 128], strides = [1, 1]} : vector<8x256xf32> to vector<8x128xf32>
    %cst_177 = arith.constant dense<0.000000e+00> : vector<8x128xf32>
    %586 = tpu.matmul %564, %495, %cst_177 {dimension_numbers = #tpu.dot_dimension_numbers<[1], [0], [0], [1], [0, 0, 1, 1], [], []>} : vector<8x32xf32>, vector<32x128xf32>, vector<8x128xf32> -> vector<8x128xf32>
    %587 = arith.addf %585, %586 : vector<8x128xf32>
    %588 = vector.extract_strided_slice %581 {offsets = [0, 0], sizes = [8, 32], strides = [1, 1]} : vector<8x128xf32> to vector<8x32xf32>
    %589 = arith.negf %588 : vector<8x32xf32>
    %590 = math.exp %589 : vector<8x32xf32>
    %cst_178 = arith.constant 1.000000e+00 : f32
    %591 = vector.broadcast %cst_178 : f32 to vector<8x32xf32>
    %592 = arith.addf %591, %590 : vector<8x32xf32>
    %593 = arith.divf %591, %592 : vector<8x32xf32>
    %594 = vector.extract_strided_slice %581 {offsets = [0, 32], sizes = [8, 32], strides = [1, 1]} : vector<8x128xf32> to vector<8x32xf32>
    %595 = arith.negf %594 : vector<8x32xf32>
    %596 = math.exp %595 : vector<8x32xf32>
    %cst_179 = arith.constant 1.000000e+00 : f32
    %597 = vector.broadcast %cst_179 : f32 to vector<8x32xf32>
    %598 = arith.addf %597, %596 : vector<8x32xf32>
    %599 = arith.divf %597, %598 : vector<8x32xf32>
    %600 = vector.extract_strided_slice %581 {offsets = [0, 64], sizes = [8, 32], strides = [1, 1]} : vector<8x128xf32> to vector<8x32xf32>
    %601 = math.tanh %600 : vector<8x32xf32>
    %602 = vector.extract_strided_slice %581 {offsets = [0, 96], sizes = [8, 32], strides = [1, 1]} : vector<8x128xf32> to vector<8x32xf32>
    %603 = arith.negf %602 : vector<8x32xf32>
    %604 = math.exp %603 : vector<8x32xf32>
    %cst_180 = arith.constant 1.000000e+00 : f32
    %605 = vector.broadcast %cst_180 : f32 to vector<8x32xf32>
    %606 = arith.addf %605, %604 : vector<8x32xf32>
    %607 = arith.divf %605, %606 : vector<8x32xf32>
    %608 = arith.mulf %599, %532 : vector<8x32xf32>
    %609 = arith.mulf %593, %601 : vector<8x32xf32>
    %610 = arith.addf %608, %609 : vector<8x32xf32>
    %611 = math.tanh %610 : vector<8x32xf32>
    %612 = arith.mulf %607, %611 : vector<8x32xf32>
    %613 = vector.extract_strided_slice %587 {offsets = [0, 0], sizes = [8, 32], strides = [1, 1]} : vector<8x128xf32> to vector<8x32xf32>
    %614 = arith.negf %613 : vector<8x32xf32>
    %615 = math.exp %614 : vector<8x32xf32>
    %cst_181 = arith.constant 1.000000e+00 : f32
    %616 = vector.broadcast %cst_181 : f32 to vector<8x32xf32>
    %617 = arith.addf %616, %615 : vector<8x32xf32>
    %618 = arith.divf %616, %617 : vector<8x32xf32>
    %619 = vector.extract_strided_slice %587 {offsets = [0, 32], sizes = [8, 32], strides = [1, 1]} : vector<8x128xf32> to vector<8x32xf32>
    %620 = arith.negf %619 : vector<8x32xf32>
    %621 = math.exp %620 : vector<8x32xf32>
    %cst_182 = arith.constant 1.000000e+00 : f32
    %622 = vector.broadcast %cst_182 : f32 to vector<8x32xf32>
    %623 = arith.addf %622, %621 : vector<8x32xf32>
    %624 = arith.divf %622, %623 : vector<8x32xf32>
    %625 = vector.extract_strided_slice %587 {offsets = [0, 64], sizes = [8, 32], strides = [1, 1]} : vector<8x128xf32> to vector<8x32xf32>
    %626 = math.tanh %625 : vector<8x32xf32>
    %627 = vector.extract_strided_slice %587 {offsets = [0, 96], sizes = [8, 32], strides = [1, 1]} : vector<8x128xf32> to vector<8x32xf32>
    %628 = arith.negf %627 : vector<8x32xf32>
    %629 = math.exp %628 : vector<8x32xf32>
    %cst_183 = arith.constant 1.000000e+00 : f32
    %630 = vector.broadcast %cst_183 : f32 to vector<8x32xf32>
    %631 = arith.addf %630, %629 : vector<8x32xf32>
    %632 = arith.divf %630, %631 : vector<8x32xf32>
    %633 = arith.mulf %624, %566 : vector<8x32xf32>
    %634 = arith.mulf %618, %626 : vector<8x32xf32>
    %635 = arith.addf %633, %634 : vector<8x32xf32>
    %636 = math.tanh %635 : vector<8x32xf32>
    %637 = arith.mulf %632, %636 : vector<8x32xf32>
    %638 = arith.index_cast %575 : i32 to index
    %c0_184 = arith.constant 0 : index
    %c0_185 = arith.constant 0 : index
    %639 = vector.load %arg2[%638, %c0_184, %c0_185] : memref<6x8x1xf32, #tpu.memory_space<vmem>>, vector<1x8x1xf32>
    %640 = vector.shape_cast %639 : vector<1x8x1xf32> to vector<8x1xf32>
    %641 = vector.broadcast %640 : vector<8x1xf32> to vector<8x32xf32>
    %642 = arith.mulf %637, %641 : vector<8x32xf32>
    %643 = vector.broadcast %640 : vector<8x1xf32> to vector<8x32xf32>
    %644 = arith.mulf %635, %643 : vector<8x32xf32>
    %645 = arith.index_cast %c1_i32_170 : i32 to index
    %c0_186 = arith.constant 0 : index
    %c0_187 = arith.constant 0 : index
    %646 = vector.load %arg17[%645, %c0_186, %c0_187] : memref<6x8x32xf32, #tpu.memory_space<vmem>>, vector<1x8x32xf32>
    %647 = vector.shape_cast %646 : vector<1x8x32xf32> to vector<8x32xf32>
    %648 = vector.shape_cast %612 : vector<8x32xf32> to vector<1x8x32xf32>
    tpu.vector_store %arg17[%645, %c0_186, %c0_187], %648 {strides = array<i32>} : memref<6x8x32xf32, #tpu.memory_space<vmem>>, vector<1x8x32xf32>,
    %649 = arith.index_cast %575 : i32 to index
    %c0_188 = arith.constant 0 : index
    %c0_189 = arith.constant 0 : index
    %650 = vector.load %arg18[%649, %c0_188, %c0_189] : memref<6x8x32xf32, #tpu.memory_space<vmem>>, vector<1x8x32xf32>
    %651 = vector.shape_cast %650 : vector<1x8x32xf32> to vector<8x32xf32>
    %652 = vector.shape_cast %642 : vector<8x32xf32> to vector<1x8x32xf32>
    tpu.vector_store %arg18[%649, %c0_188, %c0_189], %652 {strides = array<i32>} : memref<6x8x32xf32, #tpu.memory_space<vmem>>, vector<1x8x32xf32>,
    %c2_i32_190 = arith.constant 2 : i32
    %c5_i32_191 = arith.constant 5 : i32
    %653 = arith.subi %c5_i32_191, %c2_i32_190 : i32
    %654 = arith.index_cast %c2_i32_190 : i32 to index
    %c0_192 = arith.constant 0 : index
    %c0_193 = arith.constant 0 : index
    %655 = vector.load %arg16[%654, %c0_192, %c0_193] : memref<6x8x256xf32, #tpu.memory_space<vmem>>, vector<1x8x256xf32>
    %656 = vector.shape_cast %655 : vector<1x8x256xf32> to vector<8x256xf32>
    %657 = vector.extract_strided_slice %656 {offsets = [0, 0], sizes = [8, 128], strides = [1, 1]} : vector<8x256xf32> to vector<8x128xf32>
    %cst_194 = arith.constant dense<0.000000e+00> : vector<8x128xf32>
    %658 = tpu.matmul %612, %494, %cst_194 {dimension_numbers = #tpu.dot_dimension_numbers<[1], [0], [0], [1], [0, 0, 1, 1], [], []>} : vector<8x32xf32>, vector<32x128xf32>, vector<8x128xf32> -> vector<8x128xf32>
    %659 = arith.addf %657, %658 : vector<8x128xf32>
    %660 = arith.index_cast %653 : i32 to index
    %c0_195 = arith.constant 0 : index
    %c0_196 = arith.constant 0 : index
    %661 = vector.load %arg16[%660, %c0_195, %c0_196] : memref<6x8x256xf32, #tpu.memory_space<vmem>>, vector<1x8x256xf32>
    %662 = vector.shape_cast %661 : vector<1x8x256xf32> to vector<8x256xf32>
    %663 = vector.extract_strided_slice %662 {offsets = [0, 128], sizes = [8, 128], strides = [1, 1]} : vector<8x256xf32> to vector<8x128xf32>
    %cst_197 = arith.constant dense<0.000000e+00> : vector<8x128xf32>
    %664 = tpu.matmul %642, %495, %cst_197 {dimension_numbers = #tpu.dot_dimension_numbers<[1], [0], [0], [1], [0, 0, 1, 1], [], []>} : vector<8x32xf32>, vector<32x128xf32>, vector<8x128xf32> -> vector<8x128xf32>
    %665 = arith.addf %663, %664 : vector<8x128xf32>
    %666 = vector.extract_strided_slice %659 {offsets = [0, 0], sizes = [8, 32], strides = [1, 1]} : vector<8x128xf32> to vector<8x32xf32>
    %667 = arith.negf %666 : vector<8x32xf32>
    %668 = math.exp %667 : vector<8x32xf32>
    %cst_198 = arith.constant 1.000000e+00 : f32
    %669 = vector.broadcast %cst_198 : f32 to vector<8x32xf32>
    %670 = arith.addf %669, %668 : vector<8x32xf32>
    %671 = arith.divf %669, %670 : vector<8x32xf32>
    %672 = vector.extract_strided_slice %659 {offsets = [0, 32], sizes = [8, 32], strides = [1, 1]} : vector<8x128xf32> to vector<8x32xf32>
    %673 = arith.negf %672 : vector<8x32xf32>
    %674 = math.exp %673 : vector<8x32xf32>
    %cst_199 = arith.constant 1.000000e+00 : f32
    %675 = vector.broadcast %cst_199 : f32 to vector<8x32xf32>
    %676 = arith.addf %675, %674 : vector<8x32xf32>
    %677 = arith.divf %675, %676 : vector<8x32xf32>
    %678 = vector.extract_strided_slice %659 {offsets = [0, 64], sizes = [8, 32], strides = [1, 1]} : vector<8x128xf32> to vector<8x32xf32>
    %679 = math.tanh %678 : vector<8x32xf32>
    %680 = vector.extract_strided_slice %659 {offsets = [0, 96], sizes = [8, 32], strides = [1, 1]} : vector<8x128xf32> to vector<8x32xf32>
    %681 = arith.negf %680 : vector<8x32xf32>
    %682 = math.exp %681 : vector<8x32xf32>
    %cst_200 = arith.constant 1.000000e+00 : f32
    %683 = vector.broadcast %cst_200 : f32 to vector<8x32xf32>
    %684 = arith.addf %683, %682 : vector<8x32xf32>
    %685 = arith.divf %683, %684 : vector<8x32xf32>
    %686 = arith.mulf %677, %610 : vector<8x32xf32>
    %687 = arith.mulf %671, %679 : vector<8x32xf32>
    %688 = arith.addf %686, %687 : vector<8x32xf32>
    %689 = math.tanh %688 : vector<8x32xf32>
    %690 = arith.mulf %685, %689 : vector<8x32xf32>
    %691 = vector.extract_strided_slice %665 {offsets = [0, 0], sizes = [8, 32], strides = [1, 1]} : vector<8x128xf32> to vector<8x32xf32>
    %692 = arith.negf %691 : vector<8x32xf32>
    %693 = math.exp %692 : vector<8x32xf32>
    %cst_201 = arith.constant 1.000000e+00 : f32
    %694 = vector.broadcast %cst_201 : f32 to vector<8x32xf32>
    %695 = arith.addf %694, %693 : vector<8x32xf32>
    %696 = arith.divf %694, %695 : vector<8x32xf32>
    %697 = vector.extract_strided_slice %665 {offsets = [0, 32], sizes = [8, 32], strides = [1, 1]} : vector<8x128xf32> to vector<8x32xf32>
    %698 = arith.negf %697 : vector<8x32xf32>
    %699 = math.exp %698 : vector<8x32xf32>
    %cst_202 = arith.constant 1.000000e+00 : f32
    %700 = vector.broadcast %cst_202 : f32 to vector<8x32xf32>
    %701 = arith.addf %700, %699 : vector<8x32xf32>
    %702 = arith.divf %700, %701 : vector<8x32xf32>
    %703 = vector.extract_strided_slice %665 {offsets = [0, 64], sizes = [8, 32], strides = [1, 1]} : vector<8x128xf32> to vector<8x32xf32>
    %704 = math.tanh %703 : vector<8x32xf32>
    %705 = vector.extract_strided_slice %665 {offsets = [0, 96], sizes = [8, 32], strides = [1, 1]} : vector<8x128xf32> to vector<8x32xf32>
    %706 = arith.negf %705 : vector<8x32xf32>
    %707 = math.exp %706 : vector<8x32xf32>
    %cst_203 = arith.constant 1.000000e+00 : f32
    %708 = vector.broadcast %cst_203 : f32 to vector<8x32xf32>
    %709 = arith.addf %708, %707 : vector<8x32xf32>
    %710 = arith.divf %708, %709 : vector<8x32xf32>
    %711 = arith.mulf %702, %644 : vector<8x32xf32>
    %712 = arith.mulf %696, %704 : vector<8x32xf32>
    %713 = arith.addf %711, %712 : vector<8x32xf32>
    %714 = math.tanh %713 : vector<8x32xf32>
    %715 = arith.mulf %710, %714 : vector<8x32xf32>
    %716 = arith.index_cast %653 : i32 to index
    %c0_204 = arith.constant 0 : index
    %c0_205 = arith.constant 0 : index
    %717 = vector.load %arg2[%716, %c0_204, %c0_205] : memref<6x8x1xf32, #tpu.memory_space<vmem>>, vector<1x8x1xf32>
    %718 = vector.shape_cast %717 : vector<1x8x1xf32> to vector<8x1xf32>
    %719 = vector.broadcast %718 : vector<8x1xf32> to vector<8x32xf32>
    %720 = arith.mulf %715, %719 : vector<8x32xf32>
    %721 = vector.broadcast %718 : vector<8x1xf32> to vector<8x32xf32>
    %722 = arith.mulf %713, %721 : vector<8x32xf32>
    %723 = arith.index_cast %c2_i32_190 : i32 to index
    %c0_206 = arith.constant 0 : index
    %c0_207 = arith.constant 0 : index
    %724 = vector.load %arg17[%723, %c0_206, %c0_207] : memref<6x8x32xf32, #tpu.memory_space<vmem>>, vector<1x8x32xf32>
    %725 = vector.shape_cast %724 : vector<1x8x32xf32> to vector<8x32xf32>
    %726 = vector.shape_cast %690 : vector<8x32xf32> to vector<1x8x32xf32>
    tpu.vector_store %arg17[%723, %c0_206, %c0_207], %726 {strides = array<i32>} : memref<6x8x32xf32, #tpu.memory_space<vmem>>, vector<1x8x32xf32>,
    %727 = arith.index_cast %653 : i32 to index
    %c0_208 = arith.constant 0 : index
    %c0_209 = arith.constant 0 : index
    %728 = vector.load %arg18[%727, %c0_208, %c0_209] : memref<6x8x32xf32, #tpu.memory_space<vmem>>, vector<1x8x32xf32>
    %729 = vector.shape_cast %728 : vector<1x8x32xf32> to vector<8x32xf32>
    %730 = vector.shape_cast %720 : vector<8x32xf32> to vector<1x8x32xf32>
    tpu.vector_store %arg18[%727, %c0_208, %c0_209], %730 {strides = array<i32>} : memref<6x8x32xf32, #tpu.memory_space<vmem>>, vector<1x8x32xf32>,
    %c3_i32_210 = arith.constant 3 : i32
    %c5_i32_211 = arith.constant 5 : i32
    %731 = arith.subi %c5_i32_211, %c3_i32_210 : i32
    %732 = arith.index_cast %c3_i32_210 : i32 to index
    %c0_212 = arith.constant 0 : index
    %c0_213 = arith.constant 0 : index
    %733 = vector.load %arg16[%732, %c0_212, %c0_213] : memref<6x8x256xf32, #tpu.memory_space<vmem>>, vector<1x8x256xf32>
    %734 = vector.shape_cast %733 : vector<1x8x256xf32> to vector<8x256xf32>
    %735 = vector.extract_strided_slice %734 {offsets = [0, 0], sizes = [8, 128], strides = [1, 1]} : vector<8x256xf32> to vector<8x128xf32>
    %cst_214 = arith.constant dense<0.000000e+00> : vector<8x128xf32>
    %736 = tpu.matmul %690, %494, %cst_214 {dimension_numbers = #tpu.dot_dimension_numbers<[1], [0], [0], [1], [0, 0, 1, 1], [], []>} : vector<8x32xf32>, vector<32x128xf32>, vector<8x128xf32> -> vector<8x128xf32>
    %737 = arith.addf %735, %736 : vector<8x128xf32>
    %738 = arith.index_cast %731 : i32 to index
    %c0_215 = arith.constant 0 : index
    %c0_216 = arith.constant 0 : index
    %739 = vector.load %arg16[%738, %c0_215, %c0_216] : memref<6x8x256xf32, #tpu.memory_space<vmem>>, vector<1x8x256xf32>
    %740 = vector.shape_cast %739 : vector<1x8x256xf32> to vector<8x256xf32>
    %741 = vector.extract_strided_slice %740 {offsets = [0, 128], sizes = [8, 128], strides = [1, 1]} : vector<8x256xf32> to vector<8x128xf32>
    %cst_217 = arith.constant dense<0.000000e+00> : vector<8x128xf32>
    %742 = tpu.matmul %720, %495, %cst_217 {dimension_numbers = #tpu.dot_dimension_numbers<[1], [0], [0], [1], [0, 0, 1, 1], [], []>} : vector<8x32xf32>, vector<32x128xf32>, vector<8x128xf32> -> vector<8x128xf32>
    %743 = arith.addf %741, %742 : vector<8x128xf32>
    %744 = vector.extract_strided_slice %737 {offsets = [0, 0], sizes = [8, 32], strides = [1, 1]} : vector<8x128xf32> to vector<8x32xf32>
    %745 = arith.negf %744 : vector<8x32xf32>
    %746 = math.exp %745 : vector<8x32xf32>
    %cst_218 = arith.constant 1.000000e+00 : f32
    %747 = vector.broadcast %cst_218 : f32 to vector<8x32xf32>
    %748 = arith.addf %747, %746 : vector<8x32xf32>
    %749 = arith.divf %747, %748 : vector<8x32xf32>
    %750 = vector.extract_strided_slice %737 {offsets = [0, 32], sizes = [8, 32], strides = [1, 1]} : vector<8x128xf32> to vector<8x32xf32>
    %751 = arith.negf %750 : vector<8x32xf32>
    %752 = math.exp %751 : vector<8x32xf32>
    %cst_219 = arith.constant 1.000000e+00 : f32
    %753 = vector.broadcast %cst_219 : f32 to vector<8x32xf32>
    %754 = arith.addf %753, %752 : vector<8x32xf32>
    %755 = arith.divf %753, %754 : vector<8x32xf32>
    %756 = vector.extract_strided_slice %737 {offsets = [0, 64], sizes = [8, 32], strides = [1, 1]} : vector<8x128xf32> to vector<8x32xf32>
    %757 = math.tanh %756 : vector<8x32xf32>
    %758 = vector.extract_strided_slice %737 {offsets = [0, 96], sizes = [8, 32], strides = [1, 1]} : vector<8x128xf32> to vector<8x32xf32>
    %759 = arith.negf %758 : vector<8x32xf32>
    %760 = math.exp %759 : vector<8x32xf32>
    %cst_220 = arith.constant 1.000000e+00 : f32
    %761 = vector.broadcast %cst_220 : f32 to vector<8x32xf32>
    %762 = arith.addf %761, %760 : vector<8x32xf32>
    %763 = arith.divf %761, %762 : vector<8x32xf32>
    %764 = arith.mulf %755, %688 : vector<8x32xf32>
    %765 = arith.mulf %749, %757 : vector<8x32xf32>
    %766 = arith.addf %764, %765 : vector<8x32xf32>
    %767 = math.tanh %766 : vector<8x32xf32>
    %768 = arith.mulf %763, %767 : vector<8x32xf32>
    %769 = vector.extract_strided_slice %743 {offsets = [0, 0], sizes = [8, 32], strides = [1, 1]} : vector<8x128xf32> to vector<8x32xf32>
    %770 = arith.negf %769 : vector<8x32xf32>
    %771 = math.exp %770 : vector<8x32xf32>
    %cst_221 = arith.constant 1.000000e+00 : f32
    %772 = vector.broadcast %cst_221 : f32 to vector<8x32xf32>
    %773 = arith.addf %772, %771 : vector<8x32xf32>
    %774 = arith.divf %772, %773 : vector<8x32xf32>
    %775 = vector.extract_strided_slice %743 {offsets = [0, 32], sizes = [8, 32], strides = [1, 1]} : vector<8x128xf32> to vector<8x32xf32>
    %776 = arith.negf %775 : vector<8x32xf32>
    %777 = math.exp %776 : vector<8x32xf32>
    %cst_222 = arith.constant 1.000000e+00 : f32
    %778 = vector.broadcast %cst_222 : f32 to vector<8x32xf32>
    %779 = arith.addf %778, %777 : vector<8x32xf32>
    %780 = arith.divf %778, %779 : vector<8x32xf32>
    %781 = vector.extract_strided_slice %743 {offsets = [0, 64], sizes = [8, 32], strides = [1, 1]} : vector<8x128xf32> to vector<8x32xf32>
    %782 = math.tanh %781 : vector<8x32xf32>
    %783 = vector.extract_strided_slice %743 {offsets = [0, 96], sizes = [8, 32], strides = [1, 1]} : vector<8x128xf32> to vector<8x32xf32>
    %784 = arith.negf %783 : vector<8x32xf32>
    %785 = math.exp %784 : vector<8x32xf32>
    %cst_223 = arith.constant 1.000000e+00 : f32
    %786 = vector.broadcast %cst_223 : f32 to vector<8x32xf32>
    %787 = arith.addf %786, %785 : vector<8x32xf32>
    %788 = arith.divf %786, %787 : vector<8x32xf32>
    %789 = arith.mulf %780, %722 : vector<8x32xf32>
    %790 = arith.mulf %774, %782 : vector<8x32xf32>
    %791 = arith.addf %789, %790 : vector<8x32xf32>
    %792 = math.tanh %791 : vector<8x32xf32>
    %793 = arith.mulf %788, %792 : vector<8x32xf32>
    %794 = arith.index_cast %731 : i32 to index
    %c0_224 = arith.constant 0 : index
    %c0_225 = arith.constant 0 : index
    %795 = vector.load %arg2[%794, %c0_224, %c0_225] : memref<6x8x1xf32, #tpu.memory_space<vmem>>, vector<1x8x1xf32>
    %796 = vector.shape_cast %795 : vector<1x8x1xf32> to vector<8x1xf32>
    %797 = vector.broadcast %796 : vector<8x1xf32> to vector<8x32xf32>
    %798 = arith.mulf %793, %797 : vector<8x32xf32>
    %799 = vector.broadcast %796 : vector<8x1xf32> to vector<8x32xf32>
    %800 = arith.mulf %791, %799 : vector<8x32xf32>
    %801 = arith.index_cast %c3_i32_210 : i32 to index
    %c0_226 = arith.constant 0 : index
    %c0_227 = arith.constant 0 : index
    %802 = vector.load %arg17[%801, %c0_226, %c0_227] : memref<6x8x32xf32, #tpu.memory_space<vmem>>, vector<1x8x32xf32>
    %803 = vector.shape_cast %802 : vector<1x8x32xf32> to vector<8x32xf32>
    %804 = vector.shape_cast %768 : vector<8x32xf32> to vector<1x8x32xf32>
    tpu.vector_store %arg17[%801, %c0_226, %c0_227], %804 {strides = array<i32>} : memref<6x8x32xf32, #tpu.memory_space<vmem>>, vector<1x8x32xf32>,
    %805 = arith.index_cast %731 : i32 to index
    %c0_228 = arith.constant 0 : index
    %c0_229 = arith.constant 0 : index
    %806 = vector.load %arg18[%805, %c0_228, %c0_229] : memref<6x8x32xf32, #tpu.memory_space<vmem>>, vector<1x8x32xf32>
    %807 = vector.shape_cast %806 : vector<1x8x32xf32> to vector<8x32xf32>
    %808 = vector.shape_cast %798 : vector<8x32xf32> to vector<1x8x32xf32>
    tpu.vector_store %arg18[%805, %c0_228, %c0_229], %808 {strides = array<i32>} : memref<6x8x32xf32, #tpu.memory_space<vmem>>, vector<1x8x32xf32>,
    %c4_i32_230 = arith.constant 4 : i32
    %c5_i32_231 = arith.constant 5 : i32
    %809 = arith.subi %c5_i32_231, %c4_i32_230 : i32
    %810 = arith.index_cast %c4_i32_230 : i32 to index
    %c0_232 = arith.constant 0 : index
    %c0_233 = arith.constant 0 : index
    %811 = vector.load %arg16[%810, %c0_232, %c0_233] : memref<6x8x256xf32, #tpu.memory_space<vmem>>, vector<1x8x256xf32>
    %812 = vector.shape_cast %811 : vector<1x8x256xf32> to vector<8x256xf32>
    %813 = vector.extract_strided_slice %812 {offsets = [0, 0], sizes = [8, 128], strides = [1, 1]} : vector<8x256xf32> to vector<8x128xf32>
    %cst_234 = arith.constant dense<0.000000e+00> : vector<8x128xf32>
    %814 = tpu.matmul %768, %494, %cst_234 {dimension_numbers = #tpu.dot_dimension_numbers<[1], [0], [0], [1], [0, 0, 1, 1], [], []>} : vector<8x32xf32>, vector<32x128xf32>, vector<8x128xf32> -> vector<8x128xf32>
    %815 = arith.addf %813, %814 : vector<8x128xf32>
    %816 = arith.index_cast %809 : i32 to index
    %c0_235 = arith.constant 0 : index
    %c0_236 = arith.constant 0 : index
    %817 = vector.load %arg16[%816, %c0_235, %c0_236] : memref<6x8x256xf32, #tpu.memory_space<vmem>>, vector<1x8x256xf32>
    %818 = vector.shape_cast %817 : vector<1x8x256xf32> to vector<8x256xf32>
    %819 = vector.extract_strided_slice %818 {offsets = [0, 128], sizes = [8, 128], strides = [1, 1]} : vector<8x256xf32> to vector<8x128xf32>
    %cst_237 = arith.constant dense<0.000000e+00> : vector<8x128xf32>
    %820 = tpu.matmul %798, %495, %cst_237 {dimension_numbers = #tpu.dot_dimension_numbers<[1], [0], [0], [1], [0, 0, 1, 1], [], []>} : vector<8x32xf32>, vector<32x128xf32>, vector<8x128xf32> -> vector<8x128xf32>
    %821 = arith.addf %819, %820 : vector<8x128xf32>
    %822 = vector.extract_strided_slice %815 {offsets = [0, 0], sizes = [8, 32], strides = [1, 1]} : vector<8x128xf32> to vector<8x32xf32>
    %823 = arith.negf %822 : vector<8x32xf32>
    %824 = math.exp %823 : vector<8x32xf32>
    %cst_238 = arith.constant 1.000000e+00 : f32
    %825 = vector.broadcast %cst_238 : f32 to vector<8x32xf32>
    %826 = arith.addf %825, %824 : vector<8x32xf32>
    %827 = arith.divf %825, %826 : vector<8x32xf32>
    %828 = vector.extract_strided_slice %815 {offsets = [0, 32], sizes = [8, 32], strides = [1, 1]} : vector<8x128xf32> to vector<8x32xf32>
    %829 = arith.negf %828 : vector<8x32xf32>
    %830 = math.exp %829 : vector<8x32xf32>
    %cst_239 = arith.constant 1.000000e+00 : f32
    %831 = vector.broadcast %cst_239 : f32 to vector<8x32xf32>
    %832 = arith.addf %831, %830 : vector<8x32xf32>
    %833 = arith.divf %831, %832 : vector<8x32xf32>
    %834 = vector.extract_strided_slice %815 {offsets = [0, 64], sizes = [8, 32], strides = [1, 1]} : vector<8x128xf32> to vector<8x32xf32>
    %835 = math.tanh %834 : vector<8x32xf32>
    %836 = vector.extract_strided_slice %815 {offsets = [0, 96], sizes = [8, 32], strides = [1, 1]} : vector<8x128xf32> to vector<8x32xf32>
    %837 = arith.negf %836 : vector<8x32xf32>
    %838 = math.exp %837 : vector<8x32xf32>
    %cst_240 = arith.constant 1.000000e+00 : f32
    %839 = vector.broadcast %cst_240 : f32 to vector<8x32xf32>
    %840 = arith.addf %839, %838 : vector<8x32xf32>
    %841 = arith.divf %839, %840 : vector<8x32xf32>
    %842 = arith.mulf %833, %766 : vector<8x32xf32>
    %843 = arith.mulf %827, %835 : vector<8x32xf32>
    %844 = arith.addf %842, %843 : vector<8x32xf32>
    %845 = math.tanh %844 : vector<8x32xf32>
    %846 = arith.mulf %841, %845 : vector<8x32xf32>
    %847 = vector.extract_strided_slice %821 {offsets = [0, 0], sizes = [8, 32], strides = [1, 1]} : vector<8x128xf32> to vector<8x32xf32>
    %848 = arith.negf %847 : vector<8x32xf32>
    %849 = math.exp %848 : vector<8x32xf32>
    %cst_241 = arith.constant 1.000000e+00 : f32
    %850 = vector.broadcast %cst_241 : f32 to vector<8x32xf32>
    %851 = arith.addf %850, %849 : vector<8x32xf32>
    %852 = arith.divf %850, %851 : vector<8x32xf32>
    %853 = vector.extract_strided_slice %821 {offsets = [0, 32], sizes = [8, 32], strides = [1, 1]} : vector<8x128xf32> to vector<8x32xf32>
    %854 = arith.negf %853 : vector<8x32xf32>
    %855 = math.exp %854 : vector<8x32xf32>
    %cst_242 = arith.constant 1.000000e+00 : f32
    %856 = vector.broadcast %cst_242 : f32 to vector<8x32xf32>
    %857 = arith.addf %856, %855 : vector<8x32xf32>
    %858 = arith.divf %856, %857 : vector<8x32xf32>
    %859 = vector.extract_strided_slice %821 {offsets = [0, 64], sizes = [8, 32], strides = [1, 1]} : vector<8x128xf32> to vector<8x32xf32>
    %860 = math.tanh %859 : vector<8x32xf32>
    %861 = vector.extract_strided_slice %821 {offsets = [0, 96], sizes = [8, 32], strides = [1, 1]} : vector<8x128xf32> to vector<8x32xf32>
    %862 = arith.negf %861 : vector<8x32xf32>
    %863 = math.exp %862 : vector<8x32xf32>
    %cst_243 = arith.constant 1.000000e+00 : f32
    %864 = vector.broadcast %cst_243 : f32 to vector<8x32xf32>
    %865 = arith.addf %864, %863 : vector<8x32xf32>
    %866 = arith.divf %864, %865 : vector<8x32xf32>
    %867 = arith.mulf %858, %800 : vector<8x32xf32>
    %868 = arith.mulf %852, %860 : vector<8x32xf32>
    %869 = arith.addf %867, %868 : vector<8x32xf32>
    %870 = math.tanh %869 : vector<8x32xf32>
    %871 = arith.mulf %866, %870 : vector<8x32xf32>
    %872 = arith.index_cast %809 : i32 to index
    %c0_244 = arith.constant 0 : index
    %c0_245 = arith.constant 0 : index
    %873 = vector.load %arg2[%872, %c0_244, %c0_245] : memref<6x8x1xf32, #tpu.memory_space<vmem>>, vector<1x8x1xf32>
    %874 = vector.shape_cast %873 : vector<1x8x1xf32> to vector<8x1xf32>
    %875 = vector.broadcast %874 : vector<8x1xf32> to vector<8x32xf32>
    %876 = arith.mulf %871, %875 : vector<8x32xf32>
    %877 = vector.broadcast %874 : vector<8x1xf32> to vector<8x32xf32>
    %878 = arith.mulf %869, %877 : vector<8x32xf32>
    %879 = arith.index_cast %c4_i32_230 : i32 to index
    %c0_246 = arith.constant 0 : index
    %c0_247 = arith.constant 0 : index
    %880 = vector.load %arg17[%879, %c0_246, %c0_247] : memref<6x8x32xf32, #tpu.memory_space<vmem>>, vector<1x8x32xf32>
    %881 = vector.shape_cast %880 : vector<1x8x32xf32> to vector<8x32xf32>
    %882 = vector.shape_cast %846 : vector<8x32xf32> to vector<1x8x32xf32>
    tpu.vector_store %arg17[%879, %c0_246, %c0_247], %882 {strides = array<i32>} : memref<6x8x32xf32, #tpu.memory_space<vmem>>, vector<1x8x32xf32>,
    %883 = arith.index_cast %809 : i32 to index
    %c0_248 = arith.constant 0 : index
    %c0_249 = arith.constant 0 : index
    %884 = vector.load %arg18[%883, %c0_248, %c0_249] : memref<6x8x32xf32, #tpu.memory_space<vmem>>, vector<1x8x32xf32>
    %885 = vector.shape_cast %884 : vector<1x8x32xf32> to vector<8x32xf32>
    %886 = vector.shape_cast %876 : vector<8x32xf32> to vector<1x8x32xf32>
    tpu.vector_store %arg18[%883, %c0_248, %c0_249], %886 {strides = array<i32>} : memref<6x8x32xf32, #tpu.memory_space<vmem>>, vector<1x8x32xf32>,
    %c5_i32_250 = arith.constant 5 : i32
    %c5_i32_251 = arith.constant 5 : i32
    %887 = arith.subi %c5_i32_251, %c5_i32_250 : i32
    %888 = arith.index_cast %c5_i32_250 : i32 to index
    %c0_252 = arith.constant 0 : index
    %c0_253 = arith.constant 0 : index
    %889 = vector.load %arg16[%888, %c0_252, %c0_253] : memref<6x8x256xf32, #tpu.memory_space<vmem>>, vector<1x8x256xf32>
    %890 = vector.shape_cast %889 : vector<1x8x256xf32> to vector<8x256xf32>
    %891 = vector.extract_strided_slice %890 {offsets = [0, 0], sizes = [8, 128], strides = [1, 1]} : vector<8x256xf32> to vector<8x128xf32>
    %cst_254 = arith.constant dense<0.000000e+00> : vector<8x128xf32>
    %892 = tpu.matmul %846, %494, %cst_254 {dimension_numbers = #tpu.dot_dimension_numbers<[1], [0], [0], [1], [0, 0, 1, 1], [], []>} : vector<8x32xf32>, vector<32x128xf32>, vector<8x128xf32> -> vector<8x128xf32>
    %893 = arith.addf %891, %892 : vector<8x128xf32>
    %894 = arith.index_cast %887 : i32 to index
    %c0_255 = arith.constant 0 : index
    %c0_256 = arith.constant 0 : index
    %895 = vector.load %arg16[%894, %c0_255, %c0_256] : memref<6x8x256xf32, #tpu.memory_space<vmem>>, vector<1x8x256xf32>
    %896 = vector.shape_cast %895 : vector<1x8x256xf32> to vector<8x256xf32>
    %897 = vector.extract_strided_slice %896 {offsets = [0, 128], sizes = [8, 128], strides = [1, 1]} : vector<8x256xf32> to vector<8x128xf32>
    %cst_257 = arith.constant dense<0.000000e+00> : vector<8x128xf32>
    %898 = tpu.matmul %876, %495, %cst_257 {dimension_numbers = #tpu.dot_dimension_numbers<[1], [0], [0], [1], [0, 0, 1, 1], [], []>} : vector<8x32xf32>, vector<32x128xf32>, vector<8x128xf32> -> vector<8x128xf32>
    %899 = arith.addf %897, %898 : vector<8x128xf32>
    %900 = vector.extract_strided_slice %893 {offsets = [0, 0], sizes = [8, 32], strides = [1, 1]} : vector<8x128xf32> to vector<8x32xf32>
    %901 = arith.negf %900 : vector<8x32xf32>
    %902 = math.exp %901 : vector<8x32xf32>
    %cst_258 = arith.constant 1.000000e+00 : f32
    %903 = vector.broadcast %cst_258 : f32 to vector<8x32xf32>
    %904 = arith.addf %903, %902 : vector<8x32xf32>
    %905 = arith.divf %903, %904 : vector<8x32xf32>
    %906 = vector.extract_strided_slice %893 {offsets = [0, 32], sizes = [8, 32], strides = [1, 1]} : vector<8x128xf32> to vector<8x32xf32>
    %907 = arith.negf %906 : vector<8x32xf32>
    %908 = math.exp %907 : vector<8x32xf32>
    %cst_259 = arith.constant 1.000000e+00 : f32
    %909 = vector.broadcast %cst_259 : f32 to vector<8x32xf32>
    %910 = arith.addf %909, %908 : vector<8x32xf32>
    %911 = arith.divf %909, %910 : vector<8x32xf32>
    %912 = vector.extract_strided_slice %893 {offsets = [0, 64], sizes = [8, 32], strides = [1, 1]} : vector<8x128xf32> to vector<8x32xf32>
    %913 = math.tanh %912 : vector<8x32xf32>
    %914 = vector.extract_strided_slice %893 {offsets = [0, 96], sizes = [8, 32], strides = [1, 1]} : vector<8x128xf32> to vector<8x32xf32>
    %915 = arith.negf %914 : vector<8x32xf32>
    %916 = math.exp %915 : vector<8x32xf32>
    %cst_260 = arith.constant 1.000000e+00 : f32
    %917 = vector.broadcast %cst_260 : f32 to vector<8x32xf32>
    %918 = arith.addf %917, %916 : vector<8x32xf32>
    %919 = arith.divf %917, %918 : vector<8x32xf32>
    %920 = arith.mulf %911, %844 : vector<8x32xf32>
    %921 = arith.mulf %905, %913 : vector<8x32xf32>
    %922 = arith.addf %920, %921 : vector<8x32xf32>
    %923 = math.tanh %922 : vector<8x32xf32>
    %924 = arith.mulf %919, %923 : vector<8x32xf32>
    %925 = vector.extract_strided_slice %899 {offsets = [0, 0], sizes = [8, 32], strides = [1, 1]} : vector<8x128xf32> to vector<8x32xf32>
    %926 = arith.negf %925 : vector<8x32xf32>
    %927 = math.exp %926 : vector<8x32xf32>
    %cst_261 = arith.constant 1.000000e+00 : f32
    %928 = vector.broadcast %cst_261 : f32 to vector<8x32xf32>
    %929 = arith.addf %928, %927 : vector<8x32xf32>
    %930 = arith.divf %928, %929 : vector<8x32xf32>
    %931 = vector.extract_strided_slice %899 {offsets = [0, 32], sizes = [8, 32], strides = [1, 1]} : vector<8x128xf32> to vector<8x32xf32>
    %932 = arith.negf %931 : vector<8x32xf32>
    %933 = math.exp %932 : vector<8x32xf32>
    %cst_262 = arith.constant 1.000000e+00 : f32
    %934 = vector.broadcast %cst_262 : f32 to vector<8x32xf32>
    %935 = arith.addf %934, %933 : vector<8x32xf32>
    %936 = arith.divf %934, %935 : vector<8x32xf32>
    %937 = vector.extract_strided_slice %899 {offsets = [0, 64], sizes = [8, 32], strides = [1, 1]} : vector<8x128xf32> to vector<8x32xf32>
    %938 = math.tanh %937 : vector<8x32xf32>
    %939 = vector.extract_strided_slice %899 {offsets = [0, 96], sizes = [8, 32], strides = [1, 1]} : vector<8x128xf32> to vector<8x32xf32>
    %940 = arith.negf %939 : vector<8x32xf32>
    %941 = math.exp %940 : vector<8x32xf32>
    %cst_263 = arith.constant 1.000000e+00 : f32
    %942 = vector.broadcast %cst_263 : f32 to vector<8x32xf32>
    %943 = arith.addf %942, %941 : vector<8x32xf32>
    %944 = arith.divf %942, %943 : vector<8x32xf32>
    %945 = arith.mulf %936, %878 : vector<8x32xf32>
    %946 = arith.mulf %930, %938 : vector<8x32xf32>
    %947 = arith.addf %945, %946 : vector<8x32xf32>
    %948 = math.tanh %947 : vector<8x32xf32>
    %949 = arith.mulf %944, %948 : vector<8x32xf32>
    %950 = arith.index_cast %887 : i32 to index
    %c0_264 = arith.constant 0 : index
    %c0_265 = arith.constant 0 : index
    %951 = vector.load %arg2[%950, %c0_264, %c0_265] : memref<6x8x1xf32, #tpu.memory_space<vmem>>, vector<1x8x1xf32>
    %952 = vector.shape_cast %951 : vector<1x8x1xf32> to vector<8x1xf32>
    %953 = vector.broadcast %952 : vector<8x1xf32> to vector<8x32xf32>
    %954 = arith.mulf %949, %953 : vector<8x32xf32>
    %955 = vector.broadcast %952 : vector<8x1xf32> to vector<8x32xf32>
    %956 = arith.mulf %947, %955 : vector<8x32xf32>
    %957 = arith.index_cast %c5_i32_250 : i32 to index
    %c0_266 = arith.constant 0 : index
    %c0_267 = arith.constant 0 : index
    %958 = vector.load %arg17[%957, %c0_266, %c0_267] : memref<6x8x32xf32, #tpu.memory_space<vmem>>, vector<1x8x32xf32>
    %959 = vector.shape_cast %958 : vector<1x8x32xf32> to vector<8x32xf32>
    %960 = vector.shape_cast %924 : vector<8x32xf32> to vector<1x8x32xf32>
    tpu.vector_store %arg17[%957, %c0_266, %c0_267], %960 {strides = array<i32>} : memref<6x8x32xf32, #tpu.memory_space<vmem>>, vector<1x8x32xf32>,
    %961 = arith.index_cast %887 : i32 to index
    %c0_268 = arith.constant 0 : index
    %c0_269 = arith.constant 0 : index
    %962 = vector.load %arg18[%961, %c0_268, %c0_269] : memref<6x8x32xf32, #tpu.memory_space<vmem>>, vector<1x8x32xf32>
    %963 = vector.shape_cast %962 : vector<1x8x32xf32> to vector<8x32xf32>
    %964 = vector.shape_cast %954 : vector<8x32xf32> to vector<1x8x32xf32>
    tpu.vector_store %arg18[%961, %c0_268, %c0_269], %964 {strides = array<i32>} : memref<6x8x32xf32, #tpu.memory_space<vmem>>, vector<1x8x32xf32>,
    %c6_i32_270 = arith.constant 6 : i32
    %c0_271 = arith.constant 0 : index
    %c0_272 = arith.constant 0 : index
    %c0_273 = arith.constant 0 : index
    %965 = vector.load %arg17[%c0_271, %c0_272, %c0_273] : memref<6x8x32xf32, #tpu.memory_space<vmem>>, vector<6x8x32xf32>
    %966 = vector.shape_cast %965 : vector<6x8x32xf32> to vector<48x32xf32>
    %c0_274 = arith.constant 0 : index
    %c0_275 = arith.constant 0 : index
    %c0_276 = arith.constant 0 : index
    %967 = vector.load %arg18[%c0_274, %c0_275, %c0_276] : memref<6x8x32xf32, #tpu.memory_space<vmem>>, vector<6x8x32xf32>
    %968 = vector.shape_cast %967 : vector<6x8x32xf32> to vector<48x32xf32>
    %c0_277 = arith.constant 0 : index
    %c0_278 = arith.constant 0 : index
    %969 = vector.load %arg12[%c0_277, %c0_278] : memref<32x2xf32, #tpu.memory_space<vmem>>, vector<32x2xf32>
    %cst_279 = arith.constant dense<0.000000e+00> : vector<48x2xf32>
    %970 = tpu.matmul %966, %969, %cst_279 {dimension_numbers = #tpu.dot_dimension_numbers<[1], [0], [0], [1], [0, 0, 1, 1], [], []>} : vector<48x32xf32>, vector<32x2xf32>, vector<48x2xf32> -> vector<48x2xf32>
    %c0_280 = arith.constant 0 : index
    %c0_281 = arith.constant 0 : index
    %971 = vector.load %arg13[%c0_280, %c0_281] : memref<32x2xf32, #tpu.memory_space<vmem>>, vector<32x2xf32>
    %cst_282 = arith.constant dense<0.000000e+00> : vector<48x2xf32>
    %972 = tpu.matmul %968, %971, %cst_282 {dimension_numbers = #tpu.dot_dimension_numbers<[1], [0], [0], [1], [0, 0, 1, 1], [], []>} : vector<48x32xf32>, vector<32x2xf32>, vector<48x2xf32> -> vector<48x2xf32>
    %973 = arith.addf %970, %972 : vector<48x2xf32>
    %c0_283 = arith.constant 0 : index
    %c0_284 = arith.constant 0 : index
    %974 = vector.load %arg14[%c0_283, %c0_284] : memref<1x2xf32, #tpu.memory_space<vmem>>, vector<1x2xf32>
    %975 = vector.broadcast %974 : vector<1x2xf32> to vector<48x2xf32>
    %976 = arith.addf %973, %975 : vector<48x2xf32>
    %977 = vector.shape_cast %976 : vector<48x2xf32> to vector<6x8x2xf32>
    %c0_285 = arith.constant 0 : index
    %c0_286 = arith.constant 0 : index
    %c0_287 = arith.constant 0 : index
    %978 = vector.load %arg15[%c0_285, %c0_286, %c0_287] : memref<6x8x2xf32, #tpu.memory_space<vmem>>, vector<6x8x2xf32>
    tpu.vector_store %arg15[%c0_285, %c0_286, %c0_287], %977 {strides = array<i32>} : memref<6x8x2xf32, #tpu.memory_space<vmem>>, vector<6x8x2xf32>,
    return
  }
  func.func @transform_0(%arg0: i32) -> (i32, i32, i32) {
    %c0_i32 = arith.constant 0 : i32
    %c0_i32_0 = arith.constant 0 : i32
    %c0_i32_1 = arith.constant 0 : i32
    return %c0_i32, %arg0, %c0_i32_0 : i32, i32, i32
  }
  func.func @transform_1(%arg0: i32) -> (i32, i32, i32) {
    %c0_i32 = arith.constant 0 : i32
    %c0_i32_0 = arith.constant 0 : i32
    %c0_i32_1 = arith.constant 0 : i32
    return %c0_i32, %arg0, %c0_i32_0 : i32, i32, i32
  }
  func.func @transform_2(%arg0: i32) -> (i32, i32) {
    %c0_i32 = arith.constant 0 : i32
    %c0_i32_0 = arith.constant 0 : i32
    %c0_i32_1 = arith.constant 0 : i32
    return %c0_i32, %c0_i32_0 : i32, i32
  }
  func.func @transform_3(%arg0: i32) -> (i32, i32) {
    %c0_i32 = arith.constant 0 : i32
    %c0_i32_0 = arith.constant 0 : i32
    %c0_i32_1 = arith.constant 0 : i32
    return %c0_i32, %c0_i32_0 : i32, i32
  }
  func.func @transform_4(%arg0: i32) -> (i32, i32) {
    %c0_i32 = arith.constant 0 : i32
    %c0_i32_0 = arith.constant 0 : i32
    %c0_i32_1 = arith.constant 0 : i32
    return %c0_i32, %c0_i32_0 : i32, i32
  }
  func.func @transform_5(%arg0: i32) -> (i32, i32) {
    %c0_i32 = arith.constant 0 : i32
    %c0_i32_0 = arith.constant 0 : i32
    %c0_i32_1 = arith.constant 0 : i32
    return %c0_i32, %c0_i32_0 : i32, i32
  }
  func.func @transform_6(%arg0: i32) -> (i32, i32) {
    %c0_i32 = arith.constant 0 : i32
    %c0_i32_0 = arith.constant 0 : i32
    %c0_i32_1 = arith.constant 0 : i32
    return %c0_i32, %c0_i32_0 : i32, i32
  }
  func.func @transform_7(%arg0: i32) -> (i32, i32) {
    %c0_i32 = arith.constant 0 : i32
    %c0_i32_0 = arith.constant 0 : i32
    %c0_i32_1 = arith.constant 0 : i32
    return %c0_i32, %c0_i32_0 : i32, i32
  }
  func.func @transform_8(%arg0: i32) -> (i32, i32) {
    %c0_i32 = arith.constant 0 : i32
    %c0_i32_0 = arith.constant 0 : i32
    %c0_i32_1 = arith.constant 0 : i32
    return %c0_i32, %c0_i32_0 : i32, i32
  }
  func.func @transform_9(%arg0: i32) -> (i32, i32) {
    %c0_i32 = arith.constant 0 : i32
    %c0_i32_0 = arith.constant 0 : i32
    %c0_i32_1 = arith.constant 0 : i32
    return %c0_i32, %c0_i32_0 : i32, i32
  }
  func.func @transform_10(%arg0: i32) -> (i32, i32) {
    %c0_i32 = arith.constant 0 : i32
    %c0_i32_0 = arith.constant 0 : i32
    %c0_i32_1 = arith.constant 0 : i32
    return %c0_i32, %c0_i32_0 : i32, i32
  }
  func.func @transform_11(%arg0: i32) -> (i32, i32) {
    %c0_i32 = arith.constant 0 : i32
    %c0_i32_0 = arith.constant 0 : i32
    %c0_i32_1 = arith.constant 0 : i32
    return %c0_i32, %c0_i32_0 : i32, i32
  }
  func.func @transform_12(%arg0: i32) -> (i32, i32) {
    %c0_i32 = arith.constant 0 : i32
    %c0_i32_0 = arith.constant 0 : i32
    %c0_i32_1 = arith.constant 0 : i32
    return %c0_i32, %c0_i32_0 : i32, i32
  }
  func.func @transform_13(%arg0: i32) -> (i32, i32) {
    %c0_i32 = arith.constant 0 : i32
    %c0_i32_0 = arith.constant 0 : i32
    %c0_i32_1 = arith.constant 0 : i32
    return %c0_i32, %c0_i32_0 : i32, i32
  }
  func.func @transform_14(%arg0: i32) -> (i32, i32, i32) {
    %c0_i32 = arith.constant 0 : i32
    %c0_i32_0 = arith.constant 0 : i32
    %c0_i32_1 = arith.constant 0 : i32
    return %c0_i32, %arg0, %c0_i32_0 : i32, i32, i32
  }
}

</mosaic_0001>

<llo_original>
// kernel: tpu_custom_call.1
$region0: #{tpu_custom_call.1}
  #allocation0 [shape = 'u32[]', space=smem, size = 0x4, offset = 0x4, fixed_abs, tag = 'smem constant byte address 0x4 - core index']
  #allocation1 [shape = 'u32[144,128]{1,0:T(1,128)}', space=vmem, size = 0x12000, scoped, tag = 'internal scratch']
  #allocation2 [shape = 'f32[6,8,256]{2,1,0:T(8,128)}', space=vmem, size = 0xc000, scoped, tag = 'scratch operand']
  #allocation3 [shape = 'f32[6,8,32]{2,1,0:T(8,128)}', space=vmem, size = 0x6000, scoped, tag = 'scratch operand']
  #allocation4 [shape = 'f32[6,8,32]{2,1,0:T(8,128)}', space=vmem, size = 0x6000, scoped, tag = 'scratch operand']
  %s0 = inlined_call_operand.hbm [shape: f32[6,8,32], index: 0, kind: input, shape index: {}]
  %s1 = inlined_call_operand.vmem [shape: f32[6,8,1], index: 1, kind: input, shape index: {}]
  %s2 = inlined_call_operand.vmem [shape: f32[32,256], index: 2, kind: input, shape index: {}]
  %s3 = inlined_call_operand.hbm [shape: f32[1,256], index: 3, kind: input, shape index: {}]
  %s4 = inlined_call_operand.hbm [shape: f32[32,128], index: 4, kind: input, shape index: {}]
  %s5 = inlined_call_operand.hbm [shape: f32[32,128], index: 5, kind: input, shape index: {}]
  %s6 = inlined_call_operand.vmem [shape: f32[32,256], index: 6, kind: input, shape index: {}]
  %s7 = inlined_call_operand.hbm [shape: f32[32,256], index: 7, kind: input, shape index: {}]
  %s8 = inlined_call_operand.vmem [shape: f32[1,256], index: 8, kind: input, shape index: {}]
  %s9 = inlined_call_operand.hbm [shape: f32[32,128], index: 9, kind: input, shape index: {}]
  %s10 = inlined_call_operand.hbm [shape: f32[32,128], index: 10, kind: input, shape index: {}]
  %s11 = inlined_call_operand.vmem [shape: f32[32,2], index: 11, kind: input, shape index: {}]
  %s12 = inlined_call_operand.vmem [shape: f32[32,2], index: 12, kind: input, shape index: {}]
  %s13 = inlined_call_operand.vmem [shape: f32[1,2], index: 13, kind: input, shape index: {}]
  %s14 = inlined_call_operand.vmem [shape: f32[6,8,2], index: 14, kind: output, shape index: {}]
  %s15 = sld [smem:[#allocation0]]
  $region94: #{tpu_custom_call.1} parent=0
    _
  %s17 = ssub.s32 1, %s15
  %s18 = scalar_select 0, %s17, %s15
  $region1: #{tpu_custom_call.1} parent=0
    #allocation5 [shape = 'u8[24576]{0}', space=vmem, size = 0x6000, scoped, tag = 'input window, operand 0, single buffered']
    #allocation6 [shape = 's32[1]{0}', space=sflag, size = 0x4, scoped, tag = 'scoped memory for tpu_custom_call.1']
    #allocation7 [shape = 'u8[1024]{0}', space=vmem, size = 0x400, scoped, tag = 'input window, operand 3, single buffered']
    #allocation8 [shape = 's32[1]{0}', space=sflag, size = 0x4, scoped, tag = 'scoped memory for tpu_custom_call.1']
    #allocation9 [shape = 'u8[16384]{0}', space=vmem, size = 0x4000, scoped, tag = 'input window, operand 4, single buffered']
    #allocation10 [shape = 'u8[16384]{0}', space=vmem, size = 0x4000, scoped, tag = 'input window, operand 5, single buffered']
    #allocation11 [shape = 's32[1]{0}', space=sflag, size = 0x4, scoped, tag = 'scoped memory for tpu_custom_call.1']
    #allocation12 [shape = 'u8[32768]{0}', space=vmem, size = 0x8000, scoped, tag = 'input window, operand 7, single buffered']
    #allocation13 [shape = 'u8[16384]{0}', space=vmem, size = 0x4000, scoped, tag = 'input window, operand 9, single buffered']
    #allocation14 [shape = 's32[1]{0}', space=sflag, size = 0x4, scoped, tag = 'scoped memory for tpu_custom_call.1']
    #allocation15 [shape = 'u8[16384]{0}', space=vmem, size = 0x4000, scoped, tag = 'input window, operand 10, single buffered']
    %19 = vsyncpa [#allocation6], 0
    %20 = vsyncpa [#allocation8], 0
    %21 = vsyncpa [#allocation11], 0
    %22 = vsyncpa [#allocation14], 0
    // Predicated region
    $region2: #{tpu_custom_call.1} parent=1 // pred_check
      _
    $region3: #{tpu_custom_call.1} parent=1 // pred_check_branch
      %24 = sbr.rel (0) target = $region5
    $region4: #{tpu_custom_call.1} parent=1 // pred_region
      %s26 = ssub.s32 768, 768
      %27 = vsyncadd [#allocation6], %s26
      %s28 = sshll.u32 [#allocation5], 4
      %s29 = int_to_ptr.vmem [resolvable:$true] %s28
      %34 = dma.hbm_to_vmem [thread:$0]  %s0, 768, %s29, [#allocation6], 128, 128, 8
    $region5: #{tpu_custom_call.1} parent=1 // pred_fallthru
      _
    // Predicated region
    $region6: #{tpu_custom_call.1} parent=1 // pred_check
      _
    $region7: #{tpu_custom_call.1} parent=1 // pred_check_branch
      %36 = sbr.rel (0) target = $region9
    $region8: #{tpu_custom_call.1} parent=1 // pred_region
      _
    $region9: #{tpu_custom_call.1} parent=1 // pred_fallthru
      _
    // Predicated region
    $region10: #{tpu_custom_call.1} parent=1 // pred_check
      _
    $region11: #{tpu_custom_call.1} parent=1 // pred_check_branch
      %38 = sbr.rel (0) target = $region13
    $region12: #{tpu_custom_call.1} parent=1 // pred_region
      _
    $region13: #{tpu_custom_call.1} parent=1 // pred_fallthru
      _
    // Predicated region
    $region14: #{tpu_custom_call.1} parent=1 // pred_check
      _
    $region15: #{tpu_custom_call.1} parent=1 // pred_check_branch
      %40 = sbr.rel (0) target = $region17
    $region16: #{tpu_custom_call.1} parent=1 // pred_region
      %s42 = ssub.s32 32, 32
      %43 = vsyncadd [#allocation8], %s42
      %s45 = sshll.u32 [#allocation7], 4
      %s46 = int_to_ptr.vmem [resolvable:$true] %s45
      %48 = dma.hbm_to_vmem [thread:$0]  %s3, 32, %s46, [#allocation8]
    $region17: #{tpu_custom_call.1} parent=1 // pred_fallthru
      _
    // Predicated region
    $region18: #{tpu_custom_call.1} parent=1 // pred_check
      _
    $region19: #{tpu_custom_call.1} parent=1 // pred_check_branch
      %50 = sbr.rel (0) target = $region21
    $region20: #{tpu_custom_call.1} parent=1 // pred_region
      %s52 = ssub.s32 512, 512
      %53 = vsyncadd [#allocation8], %s52
      %s54 = sshll.u32 [#allocation9], 4
      %s55 = int_to_ptr.vmem [resolvable:$true] %s54
      %60 = dma.hbm_to_vmem [thread:$0]  %s4, 512, %s55, [#allocation8], 128, 128, 8
    $region21: #{tpu_custom_call.1} parent=1 // pred_fallthru
      _
    // Predicated region
    $region22: #{tpu_custom_call.1} parent=1 // pred_check
      _
    $region23: #{tpu_custom_call.1} parent=1 // pred_check_branch
      %62 = sbr.rel (0) target = $region25
    $region24: #{tpu_custom_call.1} parent=1 // pred_region
      %s64 = ssub.s32 512, 512
      %65 = vsyncadd [#allocation11], %s64
      %s66 = sshll.u32 [#allocation10], 4
      %s67 = int_to_ptr.vmem [resolvable:$true] %s66
      %72 = dma.hbm_to_vmem [thread:$0]  %s5, 512, %s67, [#allocation11], 128, 128, 8
    $region25: #{tpu_custom_call.1} parent=1 // pred_fallthru
      _
    // Predicated region
    $region26: #{tpu_custom_call.1} parent=1 // pred_check
      _
    $region27: #{tpu_custom_call.1} parent=1 // pred_check_branch
      %74 = sbr.rel (0) target = $region29
    $region28: #{tpu_custom_call.1} parent=1 // pred_region
      _
    $region29: #{tpu_custom_call.1} parent=1 // pred_fallthru
      _
    // Predicated region
    $region30: #{tpu_custom_call.1} parent=1 // pred_check
      _
    $region31: #{tpu_custom_call.1} parent=1 // pred_check_branch
      %76 = sbr.rel (0) target = $region33
    $region32: #{tpu_custom_call.1} parent=1 // pred_region
      %s78 = ssub.s32 1024, 1024
      %79 = vsyncadd [#allocation11], %s78
      %s80 = sshll.u32 [#allocation12], 4
      %s81 = int_to_ptr.vmem [resolvable:$true] %s80
      %86 = dma.hbm_to_vmem [thread:$0]  %s7, 1024, %s81, [#allocation11], 256, 256, 16
    $region33: #{tpu_custom_call.1} parent=1 // pred_fallthru
      _
    // Predicated region
    $region34: #{tpu_custom_call.1} parent=1 // pred_check
      _
    $region35: #{tpu_custom_call.1} parent=1 // pred_check_branch
      %88 = sbr.rel (0) target = $region37
    $region36: #{tpu_custom_call.1} parent=1 // pred_region
      _
    $region37: #{tpu_custom_call.1} parent=1 // pred_fallthru
      _
    // Predicated region
    $region38: #{tpu_custom_call.1} parent=1 // pred_check
      _
    $region39: #{tpu_custom_call.1} parent=1 // pred_check_branch
      %90 = sbr.rel (0) target = $region41
    $region40: #{tpu_custom_call.1} parent=1 // pred_region
      %s92 = ssub.s32 512, 512
      %93 = vsyncadd [#allocation14], %s92
      %s94 = sshll.u32 [#allocation13], 4
      %s95 = int_to_ptr.vmem [resolvable:$true] %s94
      %100 = dma.hbm_to_vmem [thread:$0]  %s9, 512, %s95, [#allocation14], 128, 128, 8
    $region41: #{tpu_custom_call.1} parent=1 // pred_fallthru
      _
    // Predicated region
    $region42: #{tpu_custom_call.1} parent=1 // pred_check
      _
    $region43: #{tpu_custom_call.1} parent=1 // pred_check_branch
      %102 = sbr.rel (0) target = $region45
    $region44: #{tpu_custom_call.1} parent=1 // pred_region
      %s104 = ssub.s32 512, 512
      %105 = vsyncadd [#allocation14], %s104
      %s106 = sshll.u32 [#allocation15], 4
      %s107 = int_to_ptr.vmem [resolvable:$true] %s106
      %112 = dma.hbm_to_vmem [thread:$0]  %s10, 512, %s107, [#allocation14], 128, 128, 8
    $region45: #{tpu_custom_call.1} parent=1 // pred_fallthru
      _
    // Predicated region
    $region46: #{tpu_custom_call.1} parent=1 // pred_check
      _
    $region47: #{tpu_custom_call.1} parent=1 // pred_check_branch
      %114 = sbr.rel (0) target = $region49
    $region48: #{tpu_custom_call.1} parent=1 // pred_region
      _
    $region49: #{tpu_custom_call.1} parent=1 // pred_fallthru
      _
    // Predicated region
    $region50: #{tpu_custom_call.1} parent=1 // pred_check
      _
    $region51: #{tpu_custom_call.1} parent=1 // pred_check_branch
      %116 = sbr.rel (0) target = $region53
    $region52: #{tpu_custom_call.1} parent=1 // pred_region
      _
    $region53: #{tpu_custom_call.1} parent=1 // pred_fallthru
      _
    // Predicated region
    $region54: #{tpu_custom_call.1} parent=1 // pred_check
      _
    $region55: #{tpu_custom_call.1} parent=1 // pred_check_branch
      %118 = sbr.rel (0) target = $region57
    $region56: #{tpu_custom_call.1} parent=1 // pred_region
      _
    $region57: #{tpu_custom_call.1} parent=1 // pred_fallthru
      _
    // Predicated region
    $region58: #{tpu_custom_call.1} parent=1 // pred_check
      _
    $region59: #{tpu_custom_call.1} parent=1 // pred_check_branch
      %120 = sbr.rel (0) target = $region61
    $region60: #{tpu_custom_call.1} parent=1 // pred_region
      %121 = dma.done [#allocation6], 768
    $region61: #{tpu_custom_call.1} parent=1 // pred_fallthru
      _
    // Predicated region
    $region62: #{tpu_custom_call.1} parent=1 // pred_check
      _
    $region63: #{tpu_custom_call.1} parent=1 // pred_check_branch
      %123 = sbr.rel (0) target = $region65
    $region64: #{tpu_custom_call.1} parent=1 // pred_region
      %124 = dma.done [#allocation8], 32
    $region65: #{tpu_custom_call.1} parent=1 // pred_fallthru
      _
    // Predicated region
    $region66: #{tpu_custom_call.1} parent=1 // pred_check
      _
    $region67: #{tpu_custom_call.1} parent=1 // pred_check_branch
      %126 = sbr.rel (0) target = $region69
    $region68: #{tpu_custom_call.1} parent=1 // pred_region
      %127 = dma.done [#allocation8], 512
    $region69: #{tpu_custom_call.1} parent=1 // pred_fallthru
      _
    // Predicated region
    $region70: #{tpu_custom_call.1} parent=1 // pred_check
      _
    $region71: #{tpu_custom_call.1} parent=1 // pred_check_branch
      %129 = sbr.rel (0) target = $region73
    $region72: #{tpu_custom_call.1} parent=1 // pred_region
      %130 = dma.done [#allocation11], 512
    $region73: #{tpu_custom_call.1} parent=1 // pred_fallthru
      _
    // Predicated region
    $region74: #{tpu_custom_call.1} parent=1 // pred_check
      _
    $region75: #{tpu_custom_call.1} parent=1 // pred_check_branch
      %132 = sbr.rel (0) target = $region77
    $region76: #{tpu_custom_call.1} parent=1 // pred_region
      %133 = dma.done [#allocation11], 1024
    $region77: #{tpu_custom_call.1} parent=1 // pred_fallthru
      _
    // Predicated region
    $region78: #{tpu_custom_call.1} parent=1 // pred_check
      _
    $region79: #{tpu_custom_call.1} parent=1 // pred_check_branch
      %135 = sbr.rel (0) target = $region81
    $region80: #{tpu_custom_call.1} parent=1 // pred_region
      %136 = dma.done [#allocation14], 512
    $region81: #{tpu_custom_call.1} parent=1 // pred_fallthru
      _
    // Predicated region
    $region82: #{tpu_custom_call.1} parent=1 // pred_check
      _
    $region83: #{tpu_custom_call.1} parent=1 // pred_check_branch
      %138 = sbr.rel (0) target = $region85
    $region84: #{tpu_custom_call.1} parent=1 // pred_region
      %139 = dma.done [#allocation14], 512
    $region85: #{tpu_custom_call.1} parent=1 // pred_fallthru
      _
    %v140 = vld [vmem:[#allocation5] sm:$0xff]
    %v141 = vld [vmem:[#allocation5 + $0x8] sm:$0xff]
    %v142 = vld [vmem:[#allocation5 + $0x10] sm:$0xff]
    %v143 = vld [vmem:[#allocation5 + $0x18] sm:$0xff]
    %v144 = vld [vmem:[#allocation5 + $0x20] sm:$0xff]
    %v145 = vld [vmem:[#allocation5 + $0x28] sm:$0xff]
    %v146 = vld [vmem:[%s2] sm:$0xff]
    %v147 = vld [vmem:[%s2 + $0x8] sm:$0xff]
    %v148 = vld [vmem:[%s2 + $0x10] sm:$0xff]
    %v149 = vld [vmem:[%s2 + $0x18] sm:$0xff]
    %v150 = vld [vmem:[%s2 + $0x20] sm:$0xff]
    %v151 = vld [vmem:[%s2 + $0x28] sm:$0xff]
    %v152 = vld [vmem:[%s2 + $0x30] sm:$0xff]
    %v153 = vld [vmem:[%s2 + $0x38] sm:$0xff]
    %v154 = vld [vmem:[#allocation7] sm:$0x3]
    %v156 = vlaneseq
    %v157 = vshrl.u32 %v156, 7
    %v158 = vsub.s32 0, %v157
    %v159 = vrot.slane %v154, %v158
    %v160 = vlaneseq
    %v161 = vshrl.u32 %v160, 7
    %v162 = vsub.s32 1, %v161
    %v163 = vrot.slane %v154, %v162
    %vm166 = vcmask 261120
    %v168 = vsel %vm166, %v140, 0
    %v171 = vsel %vm166, %v141, 0
    %v174 = vsel %vm166, %v142, 0
    %v177 = vsel %vm166, %v143, 0
    %v180 = vsel %vm166, %v144, 0
    %v183 = vsel %vm166, %v145, 0
    %185 = vmatprep.subr.mxu0 0.0
    %186 = vmatpush1.msra.mxu0 0.0
    %187 = vmatprep.subr.mxu0 0.0
    %188 = vmatpush1.msra.mxu0 0.0
    %189 = vmatprep.subr.mxu0 0.0
    %190 = vmatpush1.msra.mxu0 0.0
    %191 = vmatprep.subr.mxu0 0.0
    %192 = vmatpush1.msra.mxu0 0.0
    %193 = vmatprep.subr.mxu0 0.0
    %194 = vmatpush1.msra.mxu0 0.0
    %195 = vmatprep.subr.mxu0 0.0
    %196 = vmatpush1.msra.mxu0 0.0
    %197 = vmatprep.subr.mxu0 0.0
    %198 = vmatpush1.msra.mxu0 0.0
    %199 = vmatprep.subr.mxu0 0.0
    %200 = vmatpush1.msra.mxu0 0.0
    %201 = vmatprep.subr.mxu0 0.0
    %202 = vmatpush1.msra.mxu0 0.0
    %203 = vmatprep.subr.mxu0 0.0
    %204 = vmatpush1.msra.mxu0 0.0
    %205 = vmatprep.subr.mxu0 0.0
    %206 = vmatpush1.msra.mxu0 0.0
    %207 = vmatprep.subr.mxu0 0.0
    %208 = vmatpush1.msra.mxu0 0.0
    %209 = vmatprep.subr.mxu0 %v153
    %210 = vmatpush1.msra.mxu0 %v152
    %211 = vmatprep.subr.mxu0 %v151
    %212 = vmatpush1.msra.mxu0 %v150
    %213 = vmatprep.subr.mxu0 %v149
    %214 = vmatpush1.msra.mxu0 %v148
    %215 = vmatprep.subr.mxu0 %v147
    %216 = vmatpush1.msra.mxu0 %v146
    %217 = vmatprep.subr.mxu0 0.0
    %218 = vmatpush2.msra.mxu0 0.0
    %219 = vmatprep.subr.mxu0 0.0
    %220 = vmatpush2.msra.mxu0 0.0
    %221 = vmatprep.subr.mxu0 0.0
    %222 = vmatpush2.msra.mxu0 0.0
    %223 = vmatprep.subr.mxu0 0.0
    %224 = vmatpush2.msra.mxu0 0.0
    %225 = vmatprep.subr.mxu0 0.0
    %226 = vmatpush2.msra.mxu0 0.0
    %227 = vmatprep.subr.mxu0 0.0
    %228 = vmatpush2.msra.mxu0 0.0
    %229 = vmatprep.subr.mxu0 0.0
    %230 = vmatpush2.msra.mxu0 0.0
    %231 = vmatprep.subr.mxu0 0.0
    %232 = vmatpush2.msra.mxu0 0.0
    %233 = vmatprep.subr.mxu0 0.0
    %234 = vmatpush2.msra.mxu0 0.0
    %235 = vmatprep.subr.mxu0 0.0
    %236 = vmatpush2.msra.mxu0 0.0
    %237 = vmatprep.subr.mxu0 0.0
    %238 = vmatpush2.msra.mxu0 0.0
    %239 = vmatprep.subr.mxu0 0.0
    %240 = vmatpush2.msra.mxu0 0.0
    %241 = vmatprep.subr.mxu0 0.0
    %242 = vmatpush2.msra.mxu0 0.0
    %243 = vmatprep.subr.mxu0 0.0
    %244 = vmatpush2.msra.mxu0 0.0
    %245 = vmatprep.subr.mxu0 0.0
    %246 = vmatpush2.msra.mxu0 0.0
    %247 = vmatprep.subr.mxu0 0.0
    %248 = vmatpush2.msra.mxu0 0.0
    %249 = vmatprep.mubr.f32.mxu0 0.0
    %250 = vmatmul.mubr.f32.gmra.mxu0 %v168
    %v251 = vpop.f32.mrf.mxu0
    %v252 = vadd.f32 %v159, %v251
    %v253 = vpop.f32.mrf.mxu0
    %v254 = vadd.f32 %v163, %v253
    %255 = vmatprep.mubr.f32.mxu0 0.0
    %256 = vmatmul.mubr.f32.gmra.mxu0 %v171
    %v257 = vpop.f32.mrf.mxu0
    %v258 = vadd.f32 %v159, %v257
    %v259 = vpop.f32.mrf.mxu0
    %v260 = vadd.f32 %v163, %v259
    %261 = vmatprep.mubr.f32.mxu0 0.0
    %262 = vmatmul.mubr.f32.gmra.mxu0 %v174
    %v263 = vpop.f32.mrf.mxu0
    %v264 = vadd.f32 %v159, %v263
    %v265 = vpop.f32.mrf.mxu0
    %v266 = vadd.f32 %v163, %v265
    %267 = vmatprep.mubr.f32.mxu0 0.0
    %268 = vmatmul.mubr.f32.gmra.mxu0 %v177
    %v269 = vpop.f32.mrf.mxu0
    %v270 = vadd.f32 %v159, %v269
    %v271 = vpop.f32.mrf.mxu0
    %v272 = vadd.f32 %v163, %v271
    %273 = vmatprep.mubr.f32.mxu0 0.0
    %274 = vmatmul.mubr.f32.gmra.mxu0 %v180
    %v275 = vpop.f32.mrf.mxu0
    %v276 = vadd.f32 %v159, %v275
    %v277 = vpop.f32.mrf.mxu0
    %v278 = vadd.f32 %v163, %v277
    %279 = vmatprep.mubr.f32.mxu0 0.0
    %280 = vmatmul.mubr.f32.gmra.mxu0 %v183
    %v281 = vpop.f32.mrf.mxu0
    %v282 = vadd.f32 %v159, %v281
    %v283 = vpop.f32.mrf.mxu0
    %v284 = vadd.f32 %v163, %v283
    %285 = vdwg.mxu0
    %286 = vst [vmem:[#allocation2] sm:$0xff] %v252
    %287 = vst [vmem:[#allocation2 + $0x8] sm:$0xff] %v254
    %288 = vst [vmem:[#allocation2 + $0x10] sm:$0xff] %v258
    %289 = vst [vmem:[#allocation2 + $0x18] sm:$0xff] %v260
    %290 = vst [vmem:[#allocation2 + $0x20] sm:$0xff] %v264
    %291 = vst [vmem:[#allocation2 + $0x28] sm:$0xff] %v266
    %292 = vst [vmem:[#allocation2 + $0x30] sm:$0xff] %v270
    %293 = vst [vmem:[#allocation2 + $0x38] sm:$0xff] %v272
    %294 = vst [vmem:[#allocation2 + $0x40] sm:$0xff] %v276
    %295 = vst [vmem:[#allocation2 + $0x48] sm:$0xff] %v278
    %296 = vst [vmem:[#allocation2 + $0x50] sm:$0xff] %v282
    %297 = vst [vmem:[#allocation2 + $0x58] sm:$0xff] %v284
    %v298 = vld [vmem:[#allocation9] sm:$0xff]
    %v299 = vld [vmem:[#allocation9 + $0x8] sm:$0xff]
    %v300 = vld [vmem:[#allocation9 + $0x10] sm:$0xff]
    %v301 = vld [vmem:[#allocation9 + $0x18] sm:$0xff]
    %v302 = vld [vmem:[#allocation10] sm:$0xff]
    %v303 = vld [vmem:[#allocation10 + $0x8] sm:$0xff]
    %v304 = vld [vmem:[#allocation10 + $0x10] sm:$0xff]
    %v305 = vld [vmem:[#allocation10 + $0x18] sm:$0xff]
    %v306 = vld [vmem:[#allocation2] sm:$0xff]
    %v308 = vsel %vm166, 0.0, 0
    %310 = vmatprep.subr.mxu0 0.0
    %311 = vmatpush1.msra.mxu0 0.0
    %312 = vmatprep.subr.mxu0 0.0
    %313 = vmatpush1.msra.mxu0 0.0
    %314 = vmatprep.subr.mxu0 0.0
    %315 = vmatpush1.msra.mxu0 0.0
    %316 = vmatprep.subr.mxu0 0.0
    %317 = vmatpush1.msra.mxu0 0.0
    %318 = vmatprep.subr.mxu0 0.0
    %319 = vmatpush1.msra.mxu0 0.0
    %320 = vmatprep.subr.mxu0 0.0
    %321 = vmatpush1.msra.mxu0 0.0
    %322 = vmatprep.subr.mxu0 0.0
    %323 = vmatpush1.msra.mxu0 0.0
    %324 = vmatprep.subr.mxu0 0.0
    %325 = vmatpush1.msra.mxu0 0.0
    %326 = vmatprep.subr.mxu0 0.0
    %327 = vmatpush1.msra.mxu0 0.0
    %328 = vmatprep.subr.mxu0 0.0
    %329 = vmatpush1.msra.mxu0 0.0
    %330 = vmatprep.subr.mxu0 0.0
    %331 = vmatpush1.msra.mxu0 0.0
    %332 = vmatprep.subr.mxu0 0.0
    %333 = vmatpush1.msra.mxu0 0.0
    %334 = vmatprep.subr.mxu0 0.0
    %335 = vmatpush1.msra.mxu0 %v301
    %336 = vmatprep.subr.mxu0 0.0
    %337 = vmatpush1.msra.mxu0 %v300
    %338 = vmatprep.subr.mxu0 0.0
    %339 = vmatpush1.msra.mxu0 %v299
    %340 = vmatprep.subr.mxu0 0.0
    %341 = vmatpush1.msra.mxu0 %v298
    %342 = vmatprep.subr.mxu0 0.0
    %343 = vmatpush2.msra.mxu0 0.0
    %344 = vmatprep.subr.mxu0 0.0
    %345 = vmatpush2.msra.mxu0 0.0
    %346 = vmatprep.subr.mxu0 0.0
    %347 = vmatpush2.msra.mxu0 0.0
    %348 = vmatprep.subr.mxu0 0.0
    %349 = vmatpush2.msra.mxu0 0.0
    %350 = vmatprep.subr.mxu0 0.0
    %351 = vmatpush2.msra.mxu0 0.0
    %352 = vmatprep.subr.mxu0 0.0
    %353 = vmatpush2.msra.mxu0 0.0
    %354 = vmatprep.subr.mxu0 0.0
    %355 = vmatpush2.msra.mxu0 0.0
    %356 = vmatprep.subr.mxu0 0.0
    %357 = vmatpush2.msra.mxu0 0.0
    %358 = vmatprep.subr.mxu0 0.0
    %359 = vmatpush2.msra.mxu0 0.0
    %360 = vmatprep.subr.mxu0 0.0
    %361 = vmatpush2.msra.mxu0 0.0
    %362 = vmatprep.subr.mxu0 0.0
    %363 = vmatpush2.msra.mxu0 0.0
    %364 = vmatprep.subr.mxu0 0.0
    %365 = vmatpush2.msra.mxu0 0.0
    %366 = vmatprep.subr.mxu0 0.0
    %367 = vmatpush2.msra.mxu0 0.0
    %368 = vmatprep.subr.mxu0 0.0
    %369 = vmatpush2.msra.mxu0 0.0
    %370 = vmatprep.subr.mxu0 0.0
    %371 = vmatpush2.msra.mxu0 0.0
    %372 = vmatprep.subr.mxu0 0.0
    %373 = vmatpush2.msra.mxu0 0.0
    %374 = vmatprep.mubr.f32.mxu0 0.0
    %375 = vmatmul.mubr.f32.gmra.mxu0 %v308
    %v376 = vpop.f32.mrf.mxu0
    %v377 = vadd.f32 0.0, %v376
    %v378 = vpop.f32.mrf.mxu0
    %379 = vdwg.mxu0
    %v380 = vadd.f32 %v306, %v377
    %s381 = scalar_lea.vmem [#allocation2], 80
    %v382 = vld [vmem:[%s381 + $0x8] sm:$0xff]
    %383 = vmatprep.subr.mxu0 0.0
    %384 = vmatpush1.msra.mxu0 0.0
    %385 = vmatprep.subr.mxu0 0.0
    %386 = vmatpush1.msra.mxu0 0.0
    %387 = vmatprep.subr.mxu0 0.0
    %388 = vmatpush1.msra.mxu0 0.0
    %389 = vmatprep.subr.mxu0 0.0
    %390 = vmatpush1.msra.mxu0 0.0
    %391 = vmatprep.subr.mxu0 0.0
    %392 = vmatpush1.msra.mxu0 0.0
    %393 = vmatprep.subr.mxu0 0.0
    %394 = vmatpush1.msra.mxu0 0.0
    %395 = vmatprep.subr.mxu0 0.0
    %396 = vmatpush1.msra.mxu0 0.0
    %397 = vmatprep.subr.mxu0 0.0
    %398 = vmatpush1.msra.mxu0 0.0
    %399 = vmatprep.subr.mxu0 0.0
    %400 = vmatpush1.msra.mxu0 0.0
    %401 = vmatprep.subr.mxu0 0.0
    %402 = vmatpush1.msra.mxu0 0.0
    %403 = vmatprep.subr.mxu0 0.0
    %404 = vmatpush1.msra.mxu0 0.0
    %405 = vmatprep.subr.mxu0 0.0
    %406 = vmatpush1.msra.mxu0 0.0
    %407 = vmatprep.subr.mxu0 0.0
    %408 = vmatpush1.msra.mxu0 %v305
    %409 = vmatprep.subr.mxu0 0.0
    %410 = vmatpush1.msra.mxu0 %v304
    %411 = vmatprep.subr.mxu0 0.0
    %412 = vmatpush1.msra.mxu0 %v303
    %413 = vmatprep.subr.mxu0 0.0
    %414 = vmatpush1.msra.mxu0 %v302
    %415 = vmatprep.subr.mxu0 0.0
    %416 = vmatpush2.msra.mxu0 0.0
    %417 = vmatprep.subr.mxu0 0.0
    %418 = vmatpush2.msra.mxu0 0.0
    %419 = vmatprep.subr.mxu0 0.0
    %420 = vmatpush2.msra.mxu0 0.0
    %421 = vmatprep.subr.mxu0 0.0
    %422 = vmatpush2.msra.mxu0 0.0
    %423 = vmatprep.subr.mxu0 0.0
    %424 = vmatpush2.msra.mxu0 0.0
    %425 = vmatprep.subr.mxu0 0.0
    %426 = vmatpush2.msra.mxu0 0.0
    %427 = vmatprep.subr.mxu0 0.0
    %428 = vmatpush2.msra.mxu0 0.0
    %429 = vmatprep.subr.mxu0 0.0
    %430 = vmatpush2.msra.mxu0 0.0
    %431 = vmatprep.subr.mxu0 0.0
    %432 = vmatpush2.msra.mxu0 0.0
    %433 = vmatprep.subr.mxu0 0.0
    %434 = vmatpush2.msra.mxu0 0.0
    %435 = vmatprep.subr.mxu0 0.0
    %436 = vmatpush2.msra.mxu0 0.0
    %437 = vmatprep.subr.mxu0 0.0
    %438 = vmatpush2.msra.mxu0 0.0
    %439 = vmatprep.subr.mxu0 0.0
    %440 = vmatpush2.msra.mxu0 0.0
    %441 = vmatprep.subr.mxu0 0.0
    %442 = vmatpush2.msra.mxu0 0.0
    %443 = vmatprep.subr.mxu0 0.0
    %444 = vmatpush2.msra.mxu0 0.0
    %445 = vmatprep.subr.mxu0 0.0
    %446 = vmatpush2.msra.mxu0 0.0
    %447 = vmatprep.mubr.f32.mxu0 0.0
    %448 = vmatmul.mubr.f32.gmra.mxu0 %v308
    %v449 = vpop.f32.mrf.mxu0
    %v450 = vadd.f32 0.0, %v449
    %v451 = vpop.f32.mrf.mxu0
    %452 = vdwg.mxu0
    %v453 = vadd.f32 %v382, %v450
    %v454 = vxor.u32 %v380, 2147483648
    %v455 = vmul.f32 %v454, 1.442695
    %v456 = vpow.pop %v455
    %v457 = vadd.f32 %v456, 1.0
    %v458 = vrcp.pop %v457
    %v459 = vmul.f32 1.0, %v458
    %v460 = vtanh.pop %v380
    %v461 = vmul.f32 %v459, 0.0
    %463 = vrot.lane.b32.xlu0 %v460, 64
    %v464 = vpop.permute.xlu0 %463
    %v466 = vmul.f32 %v459, %v464
    %468 = vrot.lane.b32.xlu0 %v466, 32
    %v469 = vpop.permute.xlu0 %468
    %v471 = vadd.f32 %v461, %v469
    %v472 = vtanh.pop %v471
    %474 = vrot.lane.b32.xlu0 %v472, 64
    %v475 = vpop.permute.xlu0 %474
    %v477 = vmul.f32 %v459, %v475
    %v478 = vxor.u32 %v453, 2147483648
    %v479 = vmul.f32 %v478, 1.442695
    %v480 = vpow.pop %v479
    %v481 = vadd.f32 %v480, 1.0
    %v482 = vrcp.pop %v481
    %v483 = vmul.f32 1.0, %v482
    %v484 = vtanh.pop %v453
    %v485 = vmul.f32 %v483, 0.0
    %487 = vrot.lane.b32.xlu0 %v484, 64
    %v488 = vpop.permute.xlu0 %487
    %v490 = vmul.f32 %v483, %v488
    %492 = vrot.lane.b32.xlu0 %v490, 32
    %v493 = vpop.permute.xlu0 %492
    %v495 = vadd.f32 %v485, %v493
    %v496 = vtanh.pop %v495
    %498 = vrot.lane.b32.xlu0 %v496, 64
    %v499 = vpop.permute.xlu0 %498
    %v501 = vmul.f32 %v483, %v499
    %s502 = scalar_lea.vmem %s1, 40
    %v503 = vld [vmem:[%s502] sm:$0xff]
    %505 = vset.pattern.permute.xlu0 0
    %506 = vperm.xlu0 %505, %v503
    %v507 = vpop.permute.xlu0 %506
    %v509 = vmul.f32 %v501, %v507
    %v510 = vmul.f32 %v495, %v507
    %512 = vrot.lane.b32.xlu0 %v477, 32
    %v513 = vpop.permute.xlu0 %512
    %515 = vst.msk [vmem:[#allocation3] sm:$0xff] %vm166, %v513
    %517 = vrot.lane.b32.xlu0 %v509, 32
    %v518 = vpop.permute.xlu0 %517
    %s520 = scalar_lea.vmem [#allocation4], 40
    %521 = vst.msk [vmem:[%s520] sm:$0xff] %vm166, %v518
    %s522 = scalar_lea.vmem [#allocation2], 16
    %v523 = vld [vmem:[%s522] sm:$0xff]
    %v524 = vsel %vm166, %v513, 0
    %526 = vmatprep.subr.mxu0 0.0
    %527 = vmatpush1.msra.mxu0 0.0
    %528 = vmatprep.subr.mxu0 0.0
    %529 = vmatpush1.msra.mxu0 0.0
    %530 = vmatprep.subr.mxu0 0.0
    %531 = vmatpush1.msra.mxu0 0.0
    %532 = vmatprep.subr.mxu0 0.0
    %533 = vmatpush1.msra.mxu0 0.0
    %534 = vmatprep.subr.mxu0 0.0
    %535 = vmatpush1.msra.mxu0 0.0
    %536 = vmatprep.subr.mxu0 0.0
    %537 = vmatpush1.msra.mxu0 0.0
    %538 = vmatprep.subr.mxu0 0.0
    %539 = vmatpush1.msra.mxu0 0.0
    %540 = vmatprep.subr.mxu0 0.0
    %541 = vmatpush1.msra.mxu0 0.0
    %542 = vmatprep.subr.mxu0 0.0
    %543 = vmatpush1.msra.mxu0 0.0
    %544 = vmatprep.subr.mxu0 0.0
    %545 = vmatpush1.msra.mxu0 0.0
    %546 = vmatprep.subr.mxu0 0.0
    %547 = vmatpush1.msra.mxu0 0.0
    %548 = vmatprep.subr.mxu0 0.0
    %549 = vmatpush1.msra.mxu0 0.0
    %550 = vmatprep.subr.mxu0 0.0
    %551 = vmatpush1.msra.mxu0 %v301
    %552 = vmatprep.subr.mxu0 0.0
    %553 = vmatpush1.msra.mxu0 %v300
    %554 = vmatprep.subr.mxu0 0.0
    %555 = vmatpush1.msra.mxu0 %v299
    %556 = vmatprep.subr.mxu0 0.0
    %557 = vmatpush1.msra.mxu0 %v298
    %558 = vmatprep.subr.mxu0 0.0
    %559 = vmatpush2.msra.mxu0 0.0
    %560 = vmatprep.subr.mxu0 0.0
    %561 = vmatpush2.msra.mxu0 0.0
    %562 = vmatprep.subr.mxu0 0.0
    %563 = vmatpush2.msra.mxu0 0.0
    %564 = vmatprep.subr.mxu0 0.0
    %565 = vmatpush2.msra.mxu0 0.0
    %566 = vmatprep.subr.mxu0 0.0
    %567 = vmatpush2.msra.mxu0 0.0
    %568 = vmatprep.subr.mxu0 0.0
    %569 = vmatpush2.msra.mxu0 0.0
    %570 = vmatprep.subr.mxu0 0.0
    %571 = vmatpush2.msra.mxu0 0.0
    %572 = vmatprep.subr.mxu0 0.0
    %573 = vmatpush2.msra.mxu0 0.0
    %574 = vmatprep.subr.mxu0 0.0
    %575 = vmatpush2.msra.mxu0 0.0
    %576 = vmatprep.subr.mxu0 0.0
    %577 = vmatpush2.msra.mxu0 0.0
    %578 = vmatprep.subr.mxu0 0.0
    %579 = vmatpush2.msra.mxu0 0.0
    %580 = vmatprep.subr.mxu0 0.0
    %581 = vmatpush2.msra.mxu0 0.0
    %582 = vmatprep.subr.mxu0 0.0
    %583 = vmatpush2.msra.mxu0 0.0
    %584 = vmatprep.subr.mxu0 0.0
    %585 = vmatpush2.msra.mxu0 0.0
    %586 = vmatprep.subr.mxu0 0.0
    %587 = vmatpush2.msra.mxu0 0.0
    %588 = vmatprep.subr.mxu0 0.0
    %589 = vmatpush2.msra.mxu0 0.0
    %590 = vmatprep.mubr.f32.mxu0 0.0
    %591 = vmatmul.mubr.f32.gmra.mxu0 %v524
    %v592 = vpop.f32.mrf.mxu0
    %v593 = vadd.f32 0.0, %v592
    %v594 = vpop.f32.mrf.mxu0
    %595 = vdwg.mxu0
    %v596 = vadd.f32 %v523, %v593
    %s597 = scalar_lea.vmem [#allocation2], 64
    %v598 = vld [vmem:[%s597 + $0x8] sm:$0xff]
    %v599 = vsel %vm166, %v518, 0
    %601 = vmatprep.subr.mxu0 0.0
    %602 = vmatpush1.msra.mxu0 0.0
    %603 = vmatprep.subr.mxu0 0.0
    %604 = vmatpush1.msra.mxu0 0.0
    %605 = vmatprep.subr.mxu0 0.0
    %606 = vmatpush1.msra.mxu0 0.0
    %607 = vmatprep.subr.mxu0 0.0
    %608 = vmatpush1.msra.mxu0 0.0
    %609 = vmatprep.subr.mxu0 0.0
    %610 = vmatpush1.msra.mxu0 0.0
    %611 = vmatprep.subr.mxu0 0.0
    %612 = vmatpush1.msra.mxu0 0.0
    %613 = vmatprep.subr.mxu0 0.0
    %614 = vmatpush1.msra.mxu0 0.0
    %615 = vmatprep.subr.mxu0 0.0
    %616 = vmatpush1.msra.mxu0 0.0
    %617 = vmatprep.subr.mxu0 0.0
    %618 = vmatpush1.msra.mxu0 0.0
    %619 = vmatprep.subr.mxu0 0.0
    %620 = vmatpush1.msra.mxu0 0.0
    %621 = vmatprep.subr.mxu0 0.0
    %622 = vmatpush1.msra.mxu0 0.0
    %623 = vmatprep.subr.mxu0 0.0
    %624 = vmatpush1.msra.mxu0 0.0
    %625 = vmatprep.subr.mxu0 0.0
    %626 = vmatpush1.msra.mxu0 %v305
    %627 = vmatprep.subr.mxu0 0.0
    %628 = vmatpush1.msra.mxu0 %v304
    %629 = vmatprep.subr.mxu0 0.0
    %630 = vmatpush1.msra.mxu0 %v303
    %631 = vmatprep.subr.mxu0 0.0
    %632 = vmatpush1.msra.mxu0 %v302
    %633 = vmatprep.subr.mxu0 0.0
    %634 = vmatpush2.msra.mxu0 0.0
    %635 = vmatprep.subr.mxu0 0.0
    %636 = vmatpush2.msra.mxu0 0.0
    %637 = vmatprep.subr.mxu0 0.0
    %638 = vmatpush2.msra.mxu0 0.0
    %639 = vmatprep.subr.mxu0 0.0
    %640 = vmatpush2.msra.mxu0 0.0
    %641 = vmatprep.subr.mxu0 0.0
    %642 = vmatpush2.msra.mxu0 0.0
    %643 = vmatprep.subr.mxu0 0.0
    %644 = vmatpush2.msra.mxu0 0.0
    %645 = vmatprep.subr.mxu0 0.0
    %646 = vmatpush2.msra.mxu0 0.0
    %647 = vmatprep.subr.mxu0 0.0
    %648 = vmatpush2.msra.mxu0 0.0
    %649 = vmatprep.subr.mxu0 0.0
    %650 = vmatpush2.msra.mxu0 0.0
    %651 = vmatprep.subr.mxu0 0.0
    %652 = vmatpush2.msra.mxu0 0.0
    %653 = vmatprep.subr.mxu0 0.0
    %654 = vmatpush2.msra.mxu0 0.0
    %655 = vmatprep.subr.mxu0 0.0
    %656 = vmatpush2.msra.mxu0 0.0
    %657 = vmatprep.subr.mxu0 0.0
    %658 = vmatpush2.msra.mxu0 0.0
    %659 = vmatprep.subr.mxu0 0.0
    %660 = vmatpush2.msra.mxu0 0.0
    %661 = vmatprep.subr.mxu0 0.0
    %662 = vmatpush2.msra.mxu0 0.0
    %663 = vmatprep.subr.mxu0 0.0
    %664 = vmatpush2.msra.mxu0 0.0
    %665 = vmatprep.mubr.f32.mxu0 0.0
    %666 = vmatmul.mubr.f32.gmra.mxu0 %v599
    %v667 = vpop.f32.mrf.mxu0
    %v668 = vadd.f32 0.0, %v667
    %v669 = vpop.f32.mrf.mxu0
    %670 = vdwg.mxu0
    %v671 = vadd.f32 %v598, %v668
    %v672 = vxor.u32 %v596, 2147483648
    %v673 = vmul.f32 %v672, 1.442695
    %v674 = vpow.pop %v673
    %v675 = vadd.f32 %v674, 1.0
    %v676 = vrcp.pop %v675
    %v677 = vmul.f32 1.0, %v676
    %v678 = vtanh.pop %v596
    %v679 = vmul.f32 %v677, %v471
    %681 = vrot.lane.b32.xlu0 %v678, 64
    %v682 = vpop.permute.xlu0 %681
    %v684 = vmul.f32 %v677, %v682
    %686 = vrot.lane.b32.xlu0 %v684, 32
    %v687 = vpop.permute.xlu0 %686
    %v689 = vadd.f32 %v679, %v687
    %v690 = vtanh.pop %v689
    %692 = vrot.lane.b32.xlu0 %v690, 64
    %v693 = vpop.permute.xlu0 %692
    %v695 = vmul.f32 %v677, %v693
    %v696 = vxor.u32 %v671, 2147483648
    %v697 = vmul.f32 %v696, 1.442695
    %v698 = vpow.pop %v697
    %v699 = vadd.f32 %v698, 1.0
    %v700 = vrcp.pop %v699
    %v701 = vmul.f32 1.0, %v700
    %v702 = vtanh.pop %v671
    %v703 = vmul.f32 %v701, %v510
    %705 = vrot.lane.b32.xlu0 %v702, 64
    %v706 = vpop.permute.xlu0 %705
    %v708 = vmul.f32 %v701, %v706
    %710 = vrot.lane.b32.xlu0 %v708, 32
    %v711 = vpop.permute.xlu0 %710
    %v713 = vadd.f32 %v703, %v711
    %v714 = vtanh.pop %v713
    %716 = vrot.lane.b32.xlu0 %v714, 64
    %v717 = vpop.permute.xlu0 %716
    %v719 = vmul.f32 %v701, %v717
    %s720 = scalar_lea.vmem %s1, 32
    %v721 = vld [vmem:[%s720] sm:$0xff]
    %723 = vset.pattern.permute.xlu0 0
    %724 = vperm.xlu0 %723, %v721
    %v725 = vpop.permute.xlu0 %724
    %v727 = vmul.f32 %v719, %v725
    %v728 = vmul.f32 %v713, %v725
    %730 = vrot.lane.b32.xlu0 %v695, 32
    %v731 = vpop.permute.xlu0 %730
    %s733 = scalar_lea.vmem [#allocation3], 8
    %734 = vst.msk [vmem:[%s733] sm:$0xff] %vm166, %v731
    %736 = vrot.lane.b32.xlu0 %v727, 32
    %v737 = vpop.permute.xlu0 %736
    %s739 = scalar_lea.vmem [#allocation4], 32
    %740 = vst.msk [vmem:[%s739] sm:$0xff] %vm166, %v737
    %s741 = scalar_lea.vmem [#allocation2], 32
    %v742 = vld [vmem:[%s741] sm:$0xff]
    %v743 = vsel %vm166, %v731, 0
    %745 = vmatprep.subr.mxu0 0.0
    %746 = vmatpush1.msra.mxu0 0.0
    %747 = vmatprep.subr.mxu0 0.0
    %748 = vmatpush1.msra.mxu0 0.0
    %749 = vmatprep.subr.mxu0 0.0
    %750 = vmatpush1.msra.mxu0 0.0
    %751 = vmatprep.subr.mxu0 0.0
    %752 = vmatpush1.msra.mxu0 0.0
    %753 = vmatprep.subr.mxu0 0.0
    %754 = vmatpush1.msra.mxu0 0.0
    %755 = vmatprep.subr.mxu0 0.0
    %756 = vmatpush1.msra.mxu0 0.0
    %757 = vmatprep.subr.mxu0 0.0
    %758 = vmatpush1.msra.mxu0 0.0
    %759 = vmatprep.subr.mxu0 0.0
    %760 = vmatpush1.msra.mxu0 0.0
    %761 = vmatprep.subr.mxu0 0.0
    %762 = vmatpush1.msra.mxu0 0.0
    %763 = vmatprep.subr.mxu0 0.0
    %764 = vmatpush1.msra.mxu0 0.0
    %765 = vmatprep.subr.mxu0 0.0
    %766 = vmatpush1.msra.mxu0 0.0
    %767 = vmatprep.subr.mxu0 0.0
    %768 = vmatpush1.msra.mxu0 0.0
    %769 = vmatprep.subr.mxu0 0.0
    %770 = vmatpush1.msra.mxu0 %v301
    %771 = vmatprep.subr.mxu0 0.0
    %772 = vmatpush1.msra.mxu0 %v300
    %773 = vmatprep.subr.mxu0 0.0
    %774 = vmatpush1.msra.mxu0 %v299
    %775 = vmatprep.subr.mxu0 0.0
    %776 = vmatpush1.msra.mxu0 %v298
    %777 = vmatprep.subr.mxu0 0.0
    %778 = vmatpush2.msra.mxu0 0.0
    %779 = vmatprep.subr.mxu0 0.0
    %780 = vmatpush2.msra.mxu0 0.0
    %781 = vmatprep.subr.mxu0 0.0
    %782 = vmatpush2.msra.mxu0 0.0
    %783 = vmatprep.subr.mxu0 0.0
    %784 = vmatpush2.msra.mxu0 0.0
    %785 = vmatprep.subr.mxu0 0.0
    %786 = vmatpush2.msra.mxu0 0.0
    %787 = vmatprep.subr.mxu0 0.0
    %788 = vmatpush2.msra.mxu0 0.0
    %789 = vmatprep.subr.mxu0 0.0
    %790 = vmatpush2.msra.mxu0 0.0
    %791 = vmatprep.subr.mxu0 0.0
    %792 = vmatpush2.msra.mxu0 0.0
    %793 = vmatprep.subr.mxu0 0.0
    %794 = vmatpush2.msra.mxu0 0.0
    %795 = vmatprep.subr.mxu0 0.0
    %796 = vmatpush2.msra.mxu0 0.0
    %797 = vmatprep.subr.mxu0 0.0
    %798 = vmatpush2.msra.mxu0 0.0
    %799 = vmatprep.subr.mxu0 0.0
    %800 = vmatpush2.msra.mxu0 0.0
    %801 = vmatprep.subr.mxu0 0.0
    %802 = vmatpush2.msra.mxu0 0.0
    %803 = vmatprep.subr.mxu0 0.0
    %804 = vmatpush2.msra.mxu0 0.0
    %805 = vmatprep.subr.mxu0 0.0
    %806 = vmatpush2.msra.mxu0 0.0
    %807 = vmatprep.subr.mxu0 0.0
    %808 = vmatpush2.msra.mxu0 0.0
    %809 = vmatprep.mubr.f32.mxu0 0.0
    %810 = vmatmul.mubr.f32.gmra.mxu0 %v743
    %v811 = vpop.f32.mrf.mxu0
    %v812 = vadd.f32 0.0, %v811
    %v813 = vpop.f32.mrf.mxu0
    %814 = vdwg.mxu0
    %v815 = vadd.f32 %v742, %v812
    %s816 = scalar_lea.vmem [#allocation2], 48
    %v817 = vld [vmem:[%s816 + $0x8] sm:$0xff]
    %v818 = vsel %vm166, %v737, 0
    %820 = vmatprep.subr.mxu0 0.0
    %821 = vmatpush1.msra.mxu0 0.0
    %822 = vmatprep.subr.mxu0 0.0
    %823 = vmatpush1.msra.mxu0 0.0
    %824 = vmatprep.subr.mxu0 0.0
    %825 = vmatpush1.msra.mxu0 0.0
    %826 = vmatprep.subr.mxu0 0.0
    %827 = vmatpush1.msra.mxu0 0.0
    %828 = vmatprep.subr.mxu0 0.0
    %829 = vmatpush1.msra.mxu0 0.0
    %830 = vmatprep.subr.mxu0 0.0
    %831 = vmatpush1.msra.mxu0 0.0
    %832 = vmatprep.subr.mxu0 0.0
    %833 = vmatpush1.msra.mxu0 0.0
    %834 = vmatprep.subr.mxu0 0.0
    %835 = vmatpush1.msra.mxu0 0.0
    %836 = vmatprep.subr.mxu0 0.0
    %837 = vmatpush1.msra.mxu0 0.0
    %838 = vmatprep.subr.mxu0 0.0
    %839 = vmatpush1.msra.mxu0 0.0
    %840 = vmatprep.subr.mxu0 0.0
    %841 = vmatpush1.msra.mxu0 0.0
    %842 = vmatprep.subr.mxu0 0.0
    %843 = vmatpush1.msra.mxu0 0.0
    %844 = vmatprep.subr.mxu0 0.0
    %845 = vmatpush1.msra.mxu0 %v305
    %846 = vmatprep.subr.mxu0 0.0
    %847 = vmatpush1.msra.mxu0 %v304
    %848 = vmatprep.subr.mxu0 0.0
    %849 = vmatpush1.msra.mxu0 %v303
    %850 = vmatprep.subr.mxu0 0.0
    %851 = vmatpush1.msra.mxu0 %v302
    %852 = vmatprep.subr.mxu0 0.0
    %853 = vmatpush2.msra.mxu0 0.0
    %854 = vmatprep.subr.mxu0 0.0
    %855 = vmatpush2.msra.mxu0 0.0
    %856 = vmatprep.subr.mxu0 0.0
    %857 = vmatpush2.msra.mxu0 0.0
    %858 = vmatprep.subr.mxu0 0.0
    %859 = vmatpush2.msra.mxu0 0.0
    %860 = vmatprep.subr.mxu0 0.0
    %861 = vmatpush2.msra.mxu0 0.0
    %862 = vmatprep.subr.mxu0 0.0
    %863 = vmatpush2.msra.mxu0 0.0
    %864 = vmatprep.subr.mxu0 0.0
    %865 = vmatpush2.msra.mxu0 0.0
    %866 = vmatprep.subr.mxu0 0.0
    %867 = vmatpush2.msra.mxu0 0.0
    %868 = vmatprep.subr.mxu0 0.0
    %869 = vmatpush2.msra.mxu0 0.0
    %870 = vmatprep.subr.mxu0 0.0
    %871 = vmatpush2.msra.mxu0 0.0
    %872 = vmatprep.subr.mxu0 0.0
    %873 = vmatpush2.msra.mxu0 0.0
    %874 = vmatprep.subr.mxu0 0.0
    %875 = vmatpush2.msra.mxu0 0.0
    %876 = vmatprep.subr.mxu0 0.0
    %877 = vmatpush2.msra.mxu0 0.0
    %878 = vmatprep.subr.mxu0 0.0
    %879 = vmatpush2.msra.mxu0 0.0
    %880 = vmatprep.subr.mxu0 0.0
    %881 = vmatpush2.msra.mxu0 0.0
    %882 = vmatprep.subr.mxu0 0.0
    %883 = vmatpush2.msra.mxu0 0.0
    %884 = vmatprep.mubr.f32.mxu0 0.0
    %885 = vmatmul.mubr.f32.gmra.mxu0 %v818
    %v886 = vpop.f32.mrf.mxu0
    %v887 = vadd.f32 0.0, %v886
    %v888 = vpop.f32.mrf.mxu0
    %889 = vdwg.mxu0
    %v890 = vadd.f32 %v817, %v887
    %v891 = vxor.u32 %v815, 2147483648
    %v892 = vmul.f32 %v891, 1.442695
    %v893 = vpow.pop %v892
    %v894 = vadd.f32 %v893, 1.0
    %v895 = vrcp.pop %v894
    %v896 = vmul.f32 1.0, %v895
    %v897 = vtanh.pop %v815
    %v898 = vmul.f32 %v896, %v689
    %900 = vrot.lane.b32.xlu0 %v897, 64
    %v901 = vpop.permute.xlu0 %900
    %v903 = vmul.f32 %v896, %v901
    %905 = vrot.lane.b32.xlu0 %v903, 32
    %v906 = vpop.permute.xlu0 %905
    %v908 = vadd.f32 %v898, %v906
    %v909 = vtanh.pop %v908
    %911 = vrot.lane.b32.xlu0 %v909, 64
    %v912 = vpop.permute.xlu0 %911
    %v914 = vmul.f32 %v896, %v912
    %v915 = vxor.u32 %v890, 2147483648
    %v916 = vmul.f32 %v915, 1.442695
    %v917 = vpow.pop %v916
    %v918 = vadd.f32 %v917, 1.0
    %v919 = vrcp.pop %v918
    %v920 = vmul.f32 1.0, %v919
    %v921 = vtanh.pop %v890
    %v922 = vmul.f32 %v920, %v728
    %924 = vrot.lane.b32.xlu0 %v921, 64
    %v925 = vpop.permute.xlu0 %924
    %v927 = vmul.f32 %v920, %v925
    %929 = vrot.lane.b32.xlu0 %v927, 32
    %v930 = vpop.permute.xlu0 %929
    %v932 = vadd.f32 %v922, %v930
    %v933 = vtanh.pop %v932
    %935 = vrot.lane.b32.xlu0 %v933, 64
    %v936 = vpop.permute.xlu0 %935
    %v938 = vmul.f32 %v920, %v936
    %s939 = scalar_lea.vmem %s1, 24
    %v940 = vld [vmem:[%s939] sm:$0xff]
    %942 = vset.pattern.permute.xlu0 0
    %943 = vperm.xlu0 %942, %v940
    %v944 = vpop.permute.xlu0 %943
    %v946 = vmul.f32 %v938, %v944
    %v947 = vmul.f32 %v932, %v944
    %949 = vrot.lane.b32.xlu0 %v914, 32
    %v950 = vpop.permute.xlu0 %949
    %s952 = scalar_lea.vmem [#allocation3], 16
    %953 = vst.msk [vmem:[%s952] sm:$0xff] %vm166, %v950
    %955 = vrot.lane.b32.xlu0 %v946, 32
    %v956 = vpop.permute.xlu0 %955
    %s958 = scalar_lea.vmem [#allocation4], 24
    %959 = vst.msk [vmem:[%s958] sm:$0xff] %vm166, %v956
    %v960 = vld [vmem:[%s816] sm:$0xff]
    %v961 = vsel %vm166, %v950, 0
    %963 = vmatprep.subr.mxu0 0.0
    %964 = vmatpush1.msra.mxu0 0.0
    %965 = vmatprep.subr.mxu0 0.0
    %966 = vmatpush1.msra.mxu0 0.0
    %967 = vmatprep.subr.mxu0 0.0
    %968 = vmatpush1.msra.mxu0 0.0
    %969 = vmatprep.subr.mxu0 0.0
    %970 = vmatpush1.msra.mxu0 0.0
    %971 = vmatprep.subr.mxu0 0.0
    %972 = vmatpush1.msra.mxu0 0.0
    %973 = vmatprep.subr.mxu0 0.0
    %974 = vmatpush1.msra.mxu0 0.0
    %975 = vmatprep.subr.mxu0 0.0
    %976 = vmatpush1.msra.mxu0 0.0
    %977 = vmatprep.subr.mxu0 0.0
    %978 = vmatpush1.msra.mxu0 0.0
    %979 = vmatprep.subr.mxu0 0.0
    %980 = vmatpush1.msra.mxu0 0.0
    %981 = vmatprep.subr.mxu0 0.0
    %982 = vmatpush1.msra.mxu0 0.0
    %983 = vmatprep.subr.mxu0 0.0
    %984 = vmatpush1.msra.mxu0 0.0
    %985 = vmatprep.subr.mxu0 0.0
    %986 = vmatpush1.msra.mxu0 0.0
    %987 = vmatprep.subr.mxu0 0.0
    %988 = vmatpush1.msra.mxu0 %v301
    %989 = vmatprep.subr.mxu0 0.0
    %990 = vmatpush1.msra.mxu0 %v300
    %991 = vmatprep.subr.mxu0 0.0
    %992 = vmatpush1.msra.mxu0 %v299
    %993 = vmatprep.subr.mxu0 0.0
    %994 = vmatpush1.msra.mxu0 %v298
    %995 = vmatprep.subr.mxu0 0.0
    %996 = vmatpush2.msra.mxu0 0.0
    %997 = vmatprep.subr.mxu0 0.0
    %998 = vmatpush2.msra.mxu0 0.0
    %999 = vmatprep.subr.mxu0 0.0
    %1000 = vmatpush2.msra.mxu0 0.0
    %1001 = vmatprep.subr.mxu0 0.0
    %1002 = vmatpush2.msra.mxu0 0.0
    %1003 = vmatprep.subr.mxu0 0.0
    %1004 = vmatpush2.msra.mxu0 0.0
    %1005 = vmatprep.subr.mxu0 0.0
    %1006 = vmatpush2.msra.mxu0 0.0
    %1007 = vmatprep.subr.mxu0 0.0
    %1008 = vmatpush2.msra.mxu0 0.0
    %1009 = vmatprep.subr.mxu0 0.0
    %1010 = vmatpush2.msra.mxu0 0.0
    %1011 = vmatprep.subr.mxu0 0.0
    %1012 = vmatpush2.msra.mxu0 0.0
    %1013 = vmatprep.subr.mxu0 0.0
    %1014 = vmatpush2.msra.mxu0 0.0
    %1015 = vmatprep.subr.mxu0 0.0
    %1016 = vmatpush2.msra.mxu0 0.0
    %1017 = vmatprep.subr.mxu0 0.0
    %1018 = vmatpush2.msra.mxu0 0.0
    %1019 = vmatprep.subr.mxu0 0.0
    %1020 = vmatpush2.msra.mxu0 0.0
    %1021 = vmatprep.subr.mxu0 0.0
    %1022 = vmatpush2.msra.mxu0 0.0
    %1023 = vmatprep.subr.mxu0 0.0
    %1024 = vmatpush2.msra.mxu0 0.0
    %1025 = vmatprep.subr.mxu0 0.0
    %1026 = vmatpush2.msra.mxu0 0.0
    %1027 = vmatprep.mubr.f32.mxu0 0.0
    %1028 = vmatmul.mubr.f32.gmra.mxu0 %v961
    %v1029 = vpop.f32.mrf.mxu0
    %v1030 = vadd.f32 0.0, %v1029
    %v1031 = vpop.f32.mrf.mxu0
    %1032 = vdwg.mxu0
    %v1033 = vadd.f32 %v960, %v1030
    %v1034 = vld [vmem:[%s741 + $0x8] sm:$0xff]
    %v1035 = vsel %vm166, %v956, 0
    %1037 = vmatprep.subr.mxu0 0.0
    %1038 = vmatpush1.msra.mxu0 0.0
    %1039 = vmatprep.subr.mxu0 0.0
    %1040 = vmatpush1.msra.mxu0 0.0
    %1041 = vmatprep.subr.mxu0 0.0
    %1042 = vmatpush1.msra.mxu0 0.0
    %1043 = vmatprep.subr.mxu0 0.0
    %1044 = vmatpush1.msra.mxu0 0.0
    %1045 = vmatprep.subr.mxu0 0.0
    %1046 = vmatpush1.msra.mxu0 0.0
    %1047 = vmatprep.subr.mxu0 0.0
    %1048 = vmatpush1.msra.mxu0 0.0
    %1049 = vmatprep.subr.mxu0 0.0
    %1050 = vmatpush1.msra.mxu0 0.0
    %1051 = vmatprep.subr.mxu0 0.0
    %1052 = vmatpush1.msra.mxu0 0.0
    %1053 = vmatprep.subr.mxu0 0.0
    %1054 = vmatpush1.msra.mxu0 0.0
    %1055 = vmatprep.subr.mxu0 0.0
    %1056 = vmatpush1.msra.mxu0 0.0
    %1057 = vmatprep.subr.mxu0 0.0
    %1058 = vmatpush1.msra.mxu0 0.0
    %1059 = vmatprep.subr.mxu0 0.0
    %1060 = vmatpush1.msra.mxu0 0.0
    %1061 = vmatprep.subr.mxu0 0.0
    %1062 = vmatpush1.msra.mxu0 %v305
    %1063 = vmatprep.subr.mxu0 0.0
    %1064 = vmatpush1.msra.mxu0 %v304
    %1065 = vmatprep.subr.mxu0 0.0
    %1066 = vmatpush1.msra.mxu0 %v303
    %1067 = vmatprep.subr.mxu0 0.0
    %1068 = vmatpush1.msra.mxu0 %v302
    %1069 = vmatprep.subr.mxu0 0.0
    %1070 = vmatpush2.msra.mxu0 0.0
    %1071 = vmatprep.subr.mxu0 0.0
    %1072 = vmatpush2.msra.mxu0 0.0
    %1073 = vmatprep.subr.mxu0 0.0
    %1074 = vmatpush2.msra.mxu0 0.0
    %1075 = vmatprep.subr.mxu0 0.0
    %1076 = vmatpush2.msra.mxu0 0.0
    %1077 = vmatprep.subr.mxu0 0.0
    %1078 = vmatpush2.msra.mxu0 0.0
    %1079 = vmatprep.subr.mxu0 0.0
    %1080 = vmatpush2.msra.mxu0 0.0
    %1081 = vmatprep.subr.mxu0 0.0
    %1082 = vmatpush2.msra.mxu0 0.0
    %1083 = vmatprep.subr.mxu0 0.0
    %1084 = vmatpush2.msra.mxu0 0.0
    %1085 = vmatprep.subr.mxu0 0.0
    %1086 = vmatpush2.msra.mxu0 0.0
    %1087 = vmatprep.subr.mxu0 0.0
    %1088 = vmatpush2.msra.mxu0 0.0
    %1089 = vmatprep.subr.mxu0 0.0
    %1090 = vmatpush2.msra.mxu0 0.0
    %1091 = vmatprep.subr.mxu0 0.0
    %1092 = vmatpush2.msra.mxu0 0.0
    %1093 = vmatprep.subr.mxu0 0.0
    %1094 = vmatpush2.msra.mxu0 0.0
    %1095 = vmatprep.subr.mxu0 0.0
    %1096 = vmatpush2.msra.mxu0 0.0
    %1097 = vmatprep.subr.mxu0 0.0
    %1098 = vmatpush2.msra.mxu0 0.0
    %1099 = vmatprep.subr.mxu0 0.0
    %1100 = vmatpush2.msra.mxu0 0.0
    %1101 = vmatprep.mubr.f32.mxu0 0.0
    %1102 = vmatmul.mubr.f32.gmra.mxu0 %v1035
    %v1103 = vpop.f32.mrf.mxu0
    %v1104 = vadd.f32 0.0, %v1103
    %v1105 = vpop.f32.mrf.mxu0
    %1106 = vdwg.mxu0
    %v1107 = vadd.f32 %v1034, %v1104
    %v1108 = vxor.u32 %v1033, 2147483648
    %v1109 = vmul.f32 %v1108, 1.442695
    %v1110 = vpow.pop %v1109
    %v1111 = vadd.f32 %v1110, 1.0
    %v1112 = vrcp.pop %v1111
    %v1113 = vmul.f32 1.0, %v1112
    %v1114 = vtanh.pop %v1033
    %v1115 = vmul.f32 %v1113, %v908
    %1117 = vrot.lane.b32.xlu0 %v1114, 64
    %v1118 = vpop.permute.xlu0 %1117
    %v1120 = vmul.f32 %v1113, %v1118
    %1122 = vrot.lane.b32.xlu0 %v1120, 32
    %v1123 = vpop.permute.xlu0 %1122
    %v1125 = vadd.f32 %v1115, %v1123
    %v1126 = vtanh.pop %v1125
    %1128 = vrot.lane.b32.xlu0 %v1126, 64
    %v1129 = vpop.permute.xlu0 %1128
    %v1131 = vmul.f32 %v1113, %v1129
    %v1132 = vxor.u32 %v1107, 2147483648
    %v1133 = vmul.f32 %v1132, 1.442695
    %v1134 = vpow.pop %v1133
    %v1135 = vadd.f32 %v1134, 1.0
    %v1136 = vrcp.pop %v1135
    %v1137 = vmul.f32 1.0, %v1136
    %v1138 = vtanh.pop %v1107
    %v1139 = vmul.f32 %v1137, %v947
    %1141 = vrot.lane.b32.xlu0 %v1138, 64
    %v1142 = vpop.permute.xlu0 %1141
    %v1144 = vmul.f32 %v1137, %v1142
    %1146 = vrot.lane.b32.xlu0 %v1144, 32
    %v1147 = vpop.permute.xlu0 %1146
    %v1149 = vadd.f32 %v1139, %v1147
    %v1150 = vtanh.pop %v1149
    %1152 = vrot.lane.b32.xlu0 %v1150, 64
    %v1153 = vpop.permute.xlu0 %1152
    %v1155 = vmul.f32 %v1137, %v1153
    %s1156 = scalar_lea.vmem %s1, 16
    %v1157 = vld [vmem:[%s1156] sm:$0xff]
    %1159 = vset.pattern.permute.xlu0 0
    %1160 = vperm.xlu0 %1159, %v1157
    %v1161 = vpop.permute.xlu0 %1160
    %v1163 = vmul.f32 %v1155, %v1161
    %v1164 = vmul.f32 %v1149, %v1161
    %1166 = vrot.lane.b32.xlu0 %v1131, 32
    %v1167 = vpop.permute.xlu0 %1166
    %s1169 = scalar_lea.vmem [#allocation3], 24
    %1170 = vst.msk [vmem:[%s1169] sm:$0xff] %vm166, %v1167
    %1172 = vrot.lane.b32.xlu0 %v1163, 32
    %v1173 = vpop.permute.xlu0 %1172
    %s1175 = scalar_lea.vmem [#allocation4], 16
    %1176 = vst.msk [vmem:[%s1175] sm:$0xff] %vm166, %v1173
    %v1177 = vld [vmem:[%s597] sm:$0xff]
    %v1178 = vsel %vm166, %v1167, 0
    %1180 = vmatprep.subr.mxu0 0.0
    %1181 = vmatpush1.msra.mxu0 0.0
    %1182 = vmatprep.subr.mxu0 0.0
    %1183 = vmatpush1.msra.mxu0 0.0
    %1184 = vmatprep.subr.mxu0 0.0
    %1185 = vmatpush1.msra.mxu0 0.0
    %1186 = vmatprep.subr.mxu0 0.0
    %1187 = vmatpush1.msra.mxu0 0.0
    %1188 = vmatprep.subr.mxu0 0.0
    %1189 = vmatpush1.msra.mxu0 0.0
    %1190 = vmatprep.subr.mxu0 0.0
    %1191 = vmatpush1.msra.mxu0 0.0
    %1192 = vmatprep.subr.mxu0 0.0
    %1193 = vmatpush1.msra.mxu0 0.0
    %1194 = vmatprep.subr.mxu0 0.0
    %1195 = vmatpush1.msra.mxu0 0.0
    %1196 = vmatprep.subr.mxu0 0.0
    %1197 = vmatpush1.msra.mxu0 0.0
    %1198 = vmatprep.subr.mxu0 0.0
    %1199 = vmatpush1.msra.mxu0 0.0
    %1200 = vmatprep.subr.mxu0 0.0
    %1201 = vmatpush1.msra.mxu0 0.0
    %1202 = vmatprep.subr.mxu0 0.0
    %1203 = vmatpush1.msra.mxu0 0.0
    %1204 = vmatprep.subr.mxu0 0.0
    %1205 = vmatpush1.msra.mxu0 %v301
    %1206 = vmatprep.subr.mxu0 0.0
    %1207 = vmatpush1.msra.mxu0 %v300
    %1208 = vmatprep.subr.mxu0 0.0
    %1209 = vmatpush1.msra.mxu0 %v299
    %1210 = vmatprep.subr.mxu0 0.0
    %1211 = vmatpush1.msra.mxu0 %v298
    %1212 = vmatprep.subr.mxu0 0.0
    %1213 = vmatpush2.msra.mxu0 0.0
    %1214 = vmatprep.subr.mxu0 0.0
    %1215 = vmatpush2.msra.mxu0 0.0
    %1216 = vmatprep.subr.mxu0 0.0
    %1217 = vmatpush2.msra.mxu0 0.0
    %1218 = vmatprep.subr.mxu0 0.0
    %1219 = vmatpush2.msra.mxu0 0.0
    %1220 = vmatprep.subr.mxu0 0.0
    %1221 = vmatpush2.msra.mxu0 0.0
    %1222 = vmatprep.subr.mxu0 0.0
    %1223 = vmatpush2.msra.mxu0 0.0
    %1224 = vmatprep.subr.mxu0 0.0
    %1225 = vmatpush2.msra.mxu0 0.0
    %1226 = vmatprep.subr.mxu0 0.0
    %1227 = vmatpush2.msra.mxu0 0.0
    %1228 = vmatprep.subr.mxu0 0.0
    %1229 = vmatpush2.msra.mxu0 0.0
    %1230 = vmatprep.subr.mxu0 0.0
    %1231 = vmatpush2.msra.mxu0 0.0
    %1232 = vmatprep.subr.mxu0 0.0
    %1233 = vmatpush2.msra.mxu0 0.0
    %1234 = vmatprep.subr.mxu0 0.0
    %1235 = vmatpush2.msra.mxu0 0.0
    %1236 = vmatprep.subr.mxu0 0.0
    %1237 = vmatpush2.msra.mxu0 0.0
    %1238 = vmatprep.subr.mxu0 0.0
    %1239 = vmatpush2.msra.mxu0 0.0
    %1240 = vmatprep.subr.mxu0 0.0
    %1241 = vmatpush2.msra.mxu0 0.0
    %1242 = vmatprep.subr.mxu0 0.0
    %1243 = vmatpush2.msra.mxu0 0.0
    %1244 = vmatprep.mubr.f32.mxu0 0.0
    %1245 = vmatmul.mubr.f32.gmra.mxu0 %v1178
    %v1246 = vpop.f32.mrf.mxu0
    %v1247 = vadd.f32 0.0, %v1246
    %v1248 = vpop.f32.mrf.mxu0
    %1249 = vdwg.mxu0
    %v1250 = vadd.f32 %v1177, %v1247
    %v1251 = vld [vmem:[%s522 + $0x8] sm:$0xff]
    %v1252 = vsel %vm166, %v1173, 0
    %1254 = vmatprep.subr.mxu0 0.0
    %1255 = vmatpush1.msra.mxu0 0.0
    %1256 = vmatprep.subr.mxu0 0.0
    %1257 = vmatpush1.msra.mxu0 0.0
    %1258 = vmatprep.subr.mxu0 0.0
    %1259 = vmatpush1.msra.mxu0 0.0
    %1260 = vmatprep.subr.mxu0 0.0
    %1261 = vmatpush1.msra.mxu0 0.0
    %1262 = vmatprep.subr.mxu0 0.0
    %1263 = vmatpush1.msra.mxu0 0.0
    %1264 = vmatprep.subr.mxu0 0.0
    %1265 = vmatpush1.msra.mxu0 0.0
    %1266 = vmatprep.subr.mxu0 0.0
    %1267 = vmatpush1.msra.mxu0 0.0
    %1268 = vmatprep.subr.mxu0 0.0
    %1269 = vmatpush1.msra.mxu0 0.0
    %1270 = vmatprep.subr.mxu0 0.0
    %1271 = vmatpush1.msra.mxu0 0.0
    %1272 = vmatprep.subr.mxu0 0.0
    %1273 = vmatpush1.msra.mxu0 0.0
    %1274 = vmatprep.subr.mxu0 0.0
    %1275 = vmatpush1.msra.mxu0 0.0
    %1276 = vmatprep.subr.mxu0 0.0
    %1277 = vmatpush1.msra.mxu0 0.0
    %1278 = vmatprep.subr.mxu0 0.0
    %1279 = vmatpush1.msra.mxu0 %v305
    %1280 = vmatprep.subr.mxu0 0.0
    %1281 = vmatpush1.msra.mxu0 %v304
    %1282 = vmatprep.subr.mxu0 0.0
    %1283 = vmatpush1.msra.mxu0 %v303
    %1284 = vmatprep.subr.mxu0 0.0
    %1285 = vmatpush1.msra.mxu0 %v302
    %1286 = vmatprep.subr.mxu0 0.0
    %1287 = vmatpush2.msra.mxu0 0.0
    %1288 = vmatprep.subr.mxu0 0.0
    %1289 = vmatpush2.msra.mxu0 0.0
    %1290 = vmatprep.subr.mxu0 0.0
    %1291 = vmatpush2.msra.mxu0 0.0
    %1292 = vmatprep.subr.mxu0 0.0
    %1293 = vmatpush2.msra.mxu0 0.0
    %1294 = vmatprep.subr.mxu0 0.0
    %1295 = vmatpush2.msra.mxu0 0.0
    %1296 = vmatprep.subr.mxu0 0.0
    %1297 = vmatpush2.msra.mxu0 0.0
    %1298 = vmatprep.subr.mxu0 0.0
    %1299 = vmatpush2.msra.mxu0 0.0
    %1300 = vmatprep.subr.mxu0 0.0
    %1301 = vmatpush2.msra.mxu0 0.0
    %1302 = vmatprep.subr.mxu0 0.0
    %1303 = vmatpush2.msra.mxu0 0.0
    %1304 = vmatprep.subr.mxu0 0.0
    %1305 = vmatpush2.msra.mxu0 0.0
    %1306 = vmatprep.subr.mxu0 0.0
    %1307 = vmatpush2.msra.mxu0 0.0
    %1308 = vmatprep.subr.mxu0 0.0
    %1309 = vmatpush2.msra.mxu0 0.0
    %1310 = vmatprep.subr.mxu0 0.0
    %1311 = vmatpush2.msra.mxu0 0.0
    %1312 = vmatprep.subr.mxu0 0.0
    %1313 = vmatpush2.msra.mxu0 0.0
    %1314 = vmatprep.subr.mxu0 0.0
    %1315 = vmatpush2.msra.mxu0 0.0
    %1316 = vmatprep.subr.mxu0 0.0
    %1317 = vmatpush2.msra.mxu0 0.0
    %1318 = vmatprep.mubr.f32.mxu0 0.0
    %1319 = vmatmul.mubr.f32.gmra.mxu0 %v1252
    %v1320 = vpop.f32.mrf.mxu0
    %v1321 = vadd.f32 0.0, %v1320
    %v1322 = vpop.f32.mrf.mxu0
    %1323 = vdwg.mxu0
    %v1324 = vadd.f32 %v1251, %v1321
    %v1325 = vxor.u32 %v1250, 2147483648
    %v1326 = vmul.f32 %v1325, 1.442695
    %v1327 = vpow.pop %v1326
    %v1328 = vadd.f32 %v1327, 1.0
    %v1329 = vrcp.pop %v1328
    %v1330 = vmul.f32 1.0, %v1329
    %v1331 = vtanh.pop %v1250
    %v1332 = vmul.f32 %v1330, %v1125
    %1334 = vrot.lane.b32.xlu0 %v1331, 64
    %v1335 = vpop.permute.xlu0 %1334
    %v1337 = vmul.f32 %v1330, %v1335
    %1339 = vrot.lane.b32.xlu0 %v1337, 32
    %v1340 = vpop.permute.xlu0 %1339
    %v1342 = vadd.f32 %v1332, %v1340
    %v1343 = vtanh.pop %v1342
    %1345 = vrot.lane.b32.xlu0 %v1343, 64
    %v1346 = vpop.permute.xlu0 %1345
    %v1348 = vmul.f32 %v1330, %v1346
    %v1349 = vxor.u32 %v1324, 2147483648
    %v1350 = vmul.f32 %v1349, 1.442695
    %v1351 = vpow.pop %v1350
    %v1352 = vadd.f32 %v1351, 1.0
    %v1353 = vrcp.pop %v1352
    %v1354 = vmul.f32 1.0, %v1353
    %v1355 = vtanh.pop %v1324
    %v1356 = vmul.f32 %v1354, %v1164
    %1358 = vrot.lane.b32.xlu0 %v1355, 64
    %v1359 = vpop.permute.xlu0 %1358
    %v1361 = vmul.f32 %v1354, %v1359
    %1363 = vrot.lane.b32.xlu0 %v1361, 32
    %v1364 = vpop.permute.xlu0 %1363
    %v1366 = vadd.f32 %v1356, %v1364
    %v1367 = vtanh.pop %v1366
    %1369 = vrot.lane.b32.xlu0 %v1367, 64
    %v1370 = vpop.permute.xlu0 %1369
    %v1372 = vmul.f32 %v1354, %v1370
    %s1373 = scalar_lea.vmem %s1, 8
    %v1374 = vld [vmem:[%s1373] sm:$0xff]
    %1376 = vset.pattern.permute.xlu0 0
    %1377 = vperm.xlu0 %1376, %v1374
    %v1378 = vpop.permute.xlu0 %1377
    %v1380 = vmul.f32 %v1372, %v1378
    %v1381 = vmul.f32 %v1366, %v1378
    %1383 = vrot.lane.b32.xlu0 %v1348, 32
    %v1384 = vpop.permute.xlu0 %1383
    %s1386 = scalar_lea.vmem [#allocation3], 32
    %1387 = vst.msk [vmem:[%s1386] sm:$0xff] %vm166, %v1384
    %1389 = vrot.lane.b32.xlu0 %v1380, 32
    %v1390 = vpop.permute.xlu0 %1389
    %s1392 = scalar_lea.vmem [#allocation4], 8
    %1393 = vst.msk [vmem:[%s1392] sm:$0xff] %vm166, %v1390
    %v1394 = vld [vmem:[%s381] sm:$0xff]
    %v1395 = vsel %vm166, %v1384, 0
    %1397 = vmatprep.subr.mxu0 0.0
    %1398 = vmatpush1.msra.mxu0 0.0
    %1399 = vmatprep.subr.mxu0 0.0
    %1400 = vmatpush1.msra.mxu0 0.0
    %1401 = vmatprep.subr.mxu0 0.0
    %1402 = vmatpush1.msra.mxu0 0.0
    %1403 = vmatprep.subr.mxu0 0.0
    %1404 = vmatpush1.msra.mxu0 0.0
    %1405 = vmatprep.subr.mxu0 0.0
    %1406 = vmatpush1.msra.mxu0 0.0
    %1407 = vmatprep.subr.mxu0 0.0
    %1408 = vmatpush1.msra.mxu0 0.0
    %1409 = vmatprep.subr.mxu0 0.0
    %1410 = vmatpush1.msra.mxu0 0.0
    %1411 = vmatprep.subr.mxu0 0.0
    %1412 = vmatpush1.msra.mxu0 0.0
    %1413 = vmatprep.subr.mxu0 0.0
    %1414 = vmatpush1.msra.mxu0 0.0
    %1415 = vmatprep.subr.mxu0 0.0
    %1416 = vmatpush1.msra.mxu0 0.0
    %1417 = vmatprep.subr.mxu0 0.0
    %1418 = vmatpush1.msra.mxu0 0.0
    %1419 = vmatprep.subr.mxu0 0.0
    %1420 = vmatpush1.msra.mxu0 0.0
    %1421 = vmatprep.subr.mxu0 0.0
    %1422 = vmatpush1.msra.mxu0 %v301
    %1423 = vmatprep.subr.mxu0 0.0
    %1424 = vmatpush1.msra.mxu0 %v300
    %1425 = vmatprep.subr.mxu0 0.0
    %1426 = vmatpush1.msra.mxu0 %v299
    %1427 = vmatprep.subr.mxu0 0.0
    %1428 = vmatpush1.msra.mxu0 %v298
    %1429 = vmatprep.subr.mxu0 0.0
    %1430 = vmatpush2.msra.mxu0 0.0
    %1431 = vmatprep.subr.mxu0 0.0
    %1432 = vmatpush2.msra.mxu0 0.0
    %1433 = vmatprep.subr.mxu0 0.0
    %1434 = vmatpush2.msra.mxu0 0.0
    %1435 = vmatprep.subr.mxu0 0.0
    %1436 = vmatpush2.msra.mxu0 0.0
    %1437 = vmatprep.subr.mxu0 0.0
    %1438 = vmatpush2.msra.mxu0 0.0
    %1439 = vmatprep.subr.mxu0 0.0
    %1440 = vmatpush2.msra.mxu0 0.0
    %1441 = vmatprep.subr.mxu0 0.0
    %1442 = vmatpush2.msra.mxu0 0.0
    %1443 = vmatprep.subr.mxu0 0.0
    %1444 = vmatpush2.msra.mxu0 0.0
    %1445 = vmatprep.subr.mxu0 0.0
    %1446 = vmatpush2.msra.mxu0 0.0
    %1447 = vmatprep.subr.mxu0 0.0
    %1448 = vmatpush2.msra.mxu0 0.0
    %1449 = vmatprep.subr.mxu0 0.0
    %1450 = vmatpush2.msra.mxu0 0.0
    %1451 = vmatprep.subr.mxu0 0.0
    %1452 = vmatpush2.msra.mxu0 0.0
    %1453 = vmatprep.subr.mxu0 0.0
    %1454 = vmatpush2.msra.mxu0 0.0
    %1455 = vmatprep.subr.mxu0 0.0
    %1456 = vmatpush2.msra.mxu0 0.0
    %1457 = vmatprep.subr.mxu0 0.0
    %1458 = vmatpush2.msra.mxu0 0.0
    %1459 = vmatprep.subr.mxu0 0.0
    %1460 = vmatpush2.msra.mxu0 0.0
    %1461 = vmatprep.mubr.f32.mxu0 0.0
    %1462 = vmatmul.mubr.f32.gmra.mxu0 %v1395
    %v1463 = vpop.f32.mrf.mxu0
    %v1464 = vadd.f32 0.0, %v1463
    %v1465 = vpop.f32.mrf.mxu0
    %1466 = vdwg.mxu0
    %v1467 = vadd.f32 %v1394, %v1464
    %v1468 = vld [vmem:[#allocation2 + $0x8] sm:$0xff]
    %v1469 = vsel %vm166, %v1390, 0
    %1471 = vmatprep.subr.mxu0 0.0
    %1472 = vmatpush1.msra.mxu0 0.0
    %1473 = vmatprep.subr.mxu0 0.0
    %1474 = vmatpush1.msra.mxu0 0.0
    %1475 = vmatprep.subr.mxu0 0.0
    %1476 = vmatpush1.msra.mxu0 0.0
    %1477 = vmatprep.subr.mxu0 0.0
    %1478 = vmatpush1.msra.mxu0 0.0
    %1479 = vmatprep.subr.mxu0 0.0
    %1480 = vmatpush1.msra.mxu0 0.0
    %1481 = vmatprep.subr.mxu0 0.0
    %1482 = vmatpush1.msra.mxu0 0.0
    %1483 = vmatprep.subr.mxu0 0.0
    %1484 = vmatpush1.msra.mxu0 0.0
    %1485 = vmatprep.subr.mxu0 0.0
    %1486 = vmatpush1.msra.mxu0 0.0
    %1487 = vmatprep.subr.mxu0 0.0
    %1488 = vmatpush1.msra.mxu0 0.0
    %1489 = vmatprep.subr.mxu0 0.0
    %1490 = vmatpush1.msra.mxu0 0.0
    %1491 = vmatprep.subr.mxu0 0.0
    %1492 = vmatpush1.msra.mxu0 0.0
    %1493 = vmatprep.subr.mxu0 0.0
    %1494 = vmatpush1.msra.mxu0 0.0
    %1495 = vmatprep.subr.mxu0 0.0
    %1496 = vmatpush1.msra.mxu0 %v305
    %1497 = vmatprep.subr.mxu0 0.0
    %1498 = vmatpush1.msra.mxu0 %v304
    %1499 = vmatprep.subr.mxu0 0.0
    %1500 = vmatpush1.msra.mxu0 %v303
    %1501 = vmatprep.subr.mxu0 0.0
    %1502 = vmatpush1.msra.mxu0 %v302
    %1503 = vmatprep.subr.mxu0 0.0
    %1504 = vmatpush2.msra.mxu0 0.0
    %1505 = vmatprep.subr.mxu0 0.0
    %1506 = vmatpush2.msra.mxu0 0.0
    %1507 = vmatprep.subr.mxu0 0.0
    %1508 = vmatpush2.msra.mxu0 0.0
    %1509 = vmatprep.subr.mxu0 0.0
    %1510 = vmatpush2.msra.mxu0 0.0
    %1511 = vmatprep.subr.mxu0 0.0
    %1512 = vmatpush2.msra.mxu0 0.0
    %1513 = vmatprep.subr.mxu0 0.0
    %1514 = vmatpush2.msra.mxu0 0.0
    %1515 = vmatprep.subr.mxu0 0.0
    %1516 = vmatpush2.msra.mxu0 0.0
    %1517 = vmatprep.subr.mxu0 0.0
    %1518 = vmatpush2.msra.mxu0 0.0
    %1519 = vmatprep.subr.mxu0 0.0
    %1520 = vmatpush2.msra.mxu0 0.0
    %1521 = vmatprep.subr.mxu0 0.0
    %1522 = vmatpush2.msra.mxu0 0.0
    %1523 = vmatprep.subr.mxu0 0.0
    %1524 = vmatpush2.msra.mxu0 0.0
    %1525 = vmatprep.subr.mxu0 0.0
    %1526 = vmatpush2.msra.mxu0 0.0
    %1527 = vmatprep.subr.mxu0 0.0
    %1528 = vmatpush2.msra.mxu0 0.0
    %1529 = vmatprep.subr.mxu0 0.0
    %1530 = vmatpush2.msra.mxu0 0.0
    %1531 = vmatprep.subr.mxu0 0.0
    %1532 = vmatpush2.msra.mxu0 0.0
    %1533 = vmatprep.subr.mxu0 0.0
    %1534 = vmatpush2.msra.mxu0 0.0
    %1535 = vmatprep.mubr.f32.mxu0 0.0
    %1536 = vmatmul.mubr.f32.gmra.mxu0 %v1469
    %v1537 = vpop.f32.mrf.mxu0
    %v1538 = vadd.f32 0.0, %v1537
    %v1539 = vpop.f32.mrf.mxu0
    %1540 = vdwg.mxu0
    %v1541 = vadd.f32 %v1468, %v1538
    %v1542 = vxor.u32 %v1467, 2147483648
    %v1543 = vmul.f32 %v1542, 1.442695
    %v1544 = vpow.pop %v1543
    %v1545 = vadd.f32 %v1544, 1.0
    %v1546 = vrcp.pop %v1545
    %v1547 = vmul.f32 1.0, %v1546
    %v1548 = vtanh.pop %v1467
    %v1549 = vmul.f32 %v1547, %v1342
    %1551 = vrot.lane.b32.xlu0 %v1548, 64
    %v1552 = vpop.permute.xlu0 %1551
    %v1554 = vmul.f32 %v1547, %v1552
    %1556 = vrot.lane.b32.xlu0 %v1554, 32
    %v1557 = vpop.permute.xlu0 %1556
    %v1559 = vadd.f32 %v1549, %v1557
    %v1560 = vtanh.pop %v1559
    %1562 = vrot.lane.b32.xlu0 %v1560, 64
    %v1563 = vpop.permute.xlu0 %1562
    %v1565 = vmul.f32 %v1547, %v1563
    %v1566 = vxor.u32 %v1541, 2147483648
    %v1567 = vmul.f32 %v1566, 1.442695
    %v1568 = vpow.pop %v1567
    %v1569 = vadd.f32 %v1568, 1.0
    %v1570 = vrcp.pop %v1569
    %v1571 = vmul.f32 1.0, %v1570
    %v1572 = vtanh.pop %v1541
    %v1573 = vmul.f32 %v1571, %v1381
    %1575 = vrot.lane.b32.xlu0 %v1572, 64
    %v1576 = vpop.permute.xlu0 %1575
    %v1578 = vmul.f32 %v1571, %v1576
    %1580 = vrot.lane.b32.xlu0 %v1578, 32
    %v1581 = vpop.permute.xlu0 %1580
    %v1583 = vadd.f32 %v1573, %v1581
    %v1584 = vtanh.pop %v1583
    %1586 = vrot.lane.b32.xlu0 %v1584, 64
    %v1587 = vpop.permute.xlu0 %1586
    %v1589 = vmul.f32 %v1571, %v1587
    %v1590 = vld [vmem:[%s1] sm:$0xff]
    %1592 = vset.pattern.permute.xlu0 0
    %1593 = vperm.xlu0 %1592, %v1590
    %v1594 = vpop.permute.xlu0 %1593
    %v1596 = vmul.f32 %v1589, %v1594
    %1598 = vrot.lane.b32.xlu0 %v1565, 32
    %v1599 = vpop.permute.xlu0 %1598
    %s1601 = scalar_lea.vmem [#allocation3], 40
    %1602 = vst.msk [vmem:[%s1601] sm:$0xff] %vm166, %v1599
    %1604 = vrot.lane.b32.xlu0 %v1596, 32
    %v1605 = vpop.permute.xlu0 %1604
    %1607 = vst.msk [vmem:[#allocation4] sm:$0xff] %vm166, %v1605
    %v1608 = vld [vmem:[#allocation3] sm:$0xff]
    %v1609 = vld [vmem:[#allocation3 + $0x8] sm:$0xff]
    %v1610 = vld [vmem:[#allocation3 + $0x10] sm:$0xff]
    %v1611 = vld [vmem:[#allocation3 + $0x18] sm:$0xff]
    %v1612 = vld [vmem:[#allocation3 + $0x20] sm:$0xff]
    %v1613 = vld [vmem:[#allocation3 + $0x28] sm:$0xff]
    %v1614 = vld [vmem:[#allocation4] sm:$0xff]
    %v1615 = vld [vmem:[#allocation4 + $0x8] sm:$0xff]
    %v1616 = vld [vmem:[#allocation4 + $0x10] sm:$0xff]
    %v1617 = vld [vmem:[#allocation4 + $0x18] sm:$0xff]
    %v1618 = vld [vmem:[#allocation4 + $0x20] sm:$0xff]
    %v1619 = vld [vmem:[#allocation4 + $0x28] sm:$0xff]
    %v1620 = vld [vmem:[%s6] sm:$0xff]
    %v1621 = vld [vmem:[%s6 + $0x8] sm:$0xff]
    %v1622 = vld [vmem:[%s6 + $0x10] sm:$0xff]
    %v1623 = vld [vmem:[%s6 + $0x18] sm:$0xff]
    %v1624 = vld [vmem:[%s6 + $0x20] sm:$0xff]
    %v1625 = vld [vmem:[%s6 + $0x28] sm:$0xff]
    %v1626 = vld [vmem:[%s6 + $0x30] sm:$0xff]
    %v1627 = vld [vmem:[%s6 + $0x38] sm:$0xff]
    %v1628 = vld [vmem:[#allocation12] sm:$0xff]
    %v1629 = vld [vmem:[#allocation12 + $0x8] sm:$0xff]
    %v1630 = vld [vmem:[#allocation12 + $0x10] sm:$0xff]
    %v1631 = vld [vmem:[#allocation12 + $0x18] sm:$0xff]
    %v1632 = vld [vmem:[#allocation12 + $0x20] sm:$0xff]
    %v1633 = vld [vmem:[#allocation12 + $0x28] sm:$0xff]
    %v1634 = vld [vmem:[#allocation12 + $0x30] sm:$0xff]
    %v1635 = vld [vmem:[#allocation12 + $0x38] sm:$0xff]
    %v1637 = vsel %vm166, %v1614, 0
    %v1640 = vsel %vm166, %v1615, 0
    %v1643 = vsel %vm166, %v1616, 0
    %v1646 = vsel %vm166, %v1617, 0
    %v1649 = vsel %vm166, %v1618, 0
    %v1652 = vsel %vm166, %v1619, 0
    %1654 = vmatprep.subr.mxu0 0.0
    %1655 = vmatpush1.msra.mxu0 0.0
    %1656 = vmatprep.subr.mxu0 0.0
    %1657 = vmatpush1.msra.mxu0 0.0
    %1658 = vmatprep.subr.mxu0 0.0
    %1659 = vmatpush1.msra.mxu0 0.0
    %1660 = vmatprep.subr.mxu0 0.0
    %1661 = vmatpush1.msra.mxu0 0.0
    %1662 = vmatprep.subr.mxu0 0.0
    %1663 = vmatpush1.msra.mxu0 0.0
    %1664 = vmatprep.subr.mxu0 0.0
    %1665 = vmatpush1.msra.mxu0 0.0
    %1666 = vmatprep.subr.mxu0 0.0
    %1667 = vmatpush1.msra.mxu0 0.0
    %1668 = vmatprep.subr.mxu0 0.0
    %1669 = vmatpush1.msra.mxu0 0.0
    %1670 = vmatprep.subr.mxu0 0.0
    %1671 = vmatpush1.msra.mxu0 0.0
    %1672 = vmatprep.subr.mxu0 0.0
    %1673 = vmatpush1.msra.mxu0 0.0
    %1674 = vmatprep.subr.mxu0 0.0
    %1675 = vmatpush1.msra.mxu0 0.0
    %1676 = vmatprep.subr.mxu0 0.0
    %1677 = vmatpush1.msra.mxu0 0.0
    %1678 = vmatprep.subr.mxu0 %v1635
    %1679 = vmatpush1.msra.mxu0 %v1634
    %1680 = vmatprep.subr.mxu0 %v1633
    %1681 = vmatpush1.msra.mxu0 %v1632
    %1682 = vmatprep.subr.mxu0 %v1631
    %1683 = vmatpush1.msra.mxu0 %v1630
    %1684 = vmatprep.subr.mxu0 %v1629
    %1685 = vmatpush1.msra.mxu0 %v1628
    %1686 = vmatprep.subr.mxu0 0.0
    %1687 = vmatpush2.msra.mxu0 0.0
    %1688 = vmatprep.subr.mxu0 0.0
    %1689 = vmatpush2.msra.mxu0 0.0
    %1690 = vmatprep.subr.mxu0 0.0
    %1691 = vmatpush2.msra.mxu0 0.0
    %1692 = vmatprep.subr.mxu0 0.0
    %1693 = vmatpush2.msra.mxu0 0.0
    %1694 = vmatprep.subr.mxu0 0.0
    %1695 = vmatpush2.msra.mxu0 0.0
    %1696 = vmatprep.subr.mxu0 0.0
    %1697 = vmatpush2.msra.mxu0 0.0
    %1698 = vmatprep.subr.mxu0 0.0
    %1699 = vmatpush2.msra.mxu0 0.0
    %1700 = vmatprep.subr.mxu0 0.0
    %1701 = vmatpush2.msra.mxu0 0.0
    %1702 = vmatprep.subr.mxu0 0.0
    %1703 = vmatpush2.msra.mxu0 0.0
    %1704 = vmatprep.subr.mxu0 0.0
    %1705 = vmatpush2.msra.mxu0 0.0
    %1706 = vmatprep.subr.mxu0 0.0
    %1707 = vmatpush2.msra.mxu0 0.0
    %1708 = vmatprep.subr.mxu0 0.0
    %1709 = vmatpush2.msra.mxu0 0.0
    %1710 = vmatprep.subr.mxu0 0.0
    %1711 = vmatpush2.msra.mxu0 0.0
    %1712 = vmatprep.subr.mxu0 0.0
    %1713 = vmatpush2.msra.mxu0 0.0
    %1714 = vmatprep.subr.mxu0 0.0
    %1715 = vmatpush2.msra.mxu0 0.0
    %1716 = vmatprep.subr.mxu0 0.0
    %1717 = vmatpush2.msra.mxu0 0.0
    %1718 = vmatprep.mubr.f32.mxu0 0.0
    %1719 = vmatmul.mubr.f32.gmra.mxu0 %v1637
    %v1720 = vpop.f32.mrf.mxu0
    %v1721 = vadd.f32 0.0, %v1720
    %v1722 = vpop.f32.mrf.mxu0
    %v1723 = vadd.f32 0.0, %v1722
    %1724 = vmatprep.mubr.f32.mxu0 0.0
    %1725 = vmatmul.mubr.f32.gmra.mxu0 %v1640
    %v1726 = vpop.f32.mrf.mxu0
    %v1727 = vadd.f32 0.0, %v1726
    %v1728 = vpop.f32.mrf.mxu0
    %v1729 = vadd.f32 0.0, %v1728
    %1730 = vmatprep.mubr.f32.mxu0 0.0
    %1731 = vmatmul.mubr.f32.gmra.mxu0 %v1643
    %v1732 = vpop.f32.mrf.mxu0
    %v1733 = vadd.f32 0.0, %v1732
    %v1734 = vpop.f32.mrf.mxu0
    %v1735 = vadd.f32 0.0, %v1734
    %1736 = vmatprep.mubr.f32.mxu0 0.0
    %1737 = vmatmul.mubr.f32.gmra.mxu0 %v1646
    %v1738 = vpop.f32.mrf.mxu0
    %v1739 = vadd.f32 0.0, %v1738
    %v1740 = vpop.f32.mrf.mxu0
    %v1741 = vadd.f32 0.0, %v1740
    %1742 = vmatprep.mubr.f32.mxu0 0.0
    %1743 = vmatmul.mubr.f32.gmra.mxu0 %v1649
    %v1744 = vpop.f32.mrf.mxu0
    %v1745 = vadd.f32 0.0, %v1744
    %v1746 = vpop.f32.mrf.mxu0
    %v1747 = vadd.f32 0.0, %v1746
    %1748 = vmatprep.mubr.f32.mxu0 0.0
    %1749 = vmatmul.mubr.f32.gmra.mxu0 %v1652
    %v1750 = vpop.f32.mrf.mxu0
    %v1751 = vadd.f32 0.0, %v1750
    %v1752 = vpop.f32.mrf.mxu0
    %v1753 = vadd.f32 0.0, %v1752
    %1754 = vdwg.mxu0
    %v1756 = vsel %vm166, %v1608, 0
    %v1759 = vsel %vm166, %v1609, 0
    %v1762 = vsel %vm166, %v1610, 0
    %v1765 = vsel %vm166, %v1611, 0
    %v1768 = vsel %vm166, %v1612, 0
    %v1771 = vsel %vm166, %v1613, 0
    %1773 = vmatprep.subr.mxu0 0.0
    %1774 = vmatpush1.msra.mxu0 0.0
    %1775 = vmatprep.subr.mxu0 0.0
    %1776 = vmatpush1.msra.mxu0 0.0
    %1777 = vmatprep.subr.mxu0 0.0
    %1778 = vmatpush1.msra.mxu0 0.0
    %1779 = vmatprep.subr.mxu0 0.0
    %1780 = vmatpush1.msra.mxu0 0.0
    %1781 = vmatprep.subr.mxu0 0.0
    %1782 = vmatpush1.msra.mxu0 0.0
    %1783 = vmatprep.subr.mxu0 0.0
    %1784 = vmatpush1.msra.mxu0 0.0
    %1785 = vmatprep.subr.mxu0 0.0
    %1786 = vmatpush1.msra.mxu0 0.0
    %1787 = vmatprep.subr.mxu0 0.0
    %1788 = vmatpush1.msra.mxu0 0.0
    %1789 = vmatprep.subr.mxu0 0.0
    %1790 = vmatpush1.msra.mxu0 0.0
    %1791 = vmatprep.subr.mxu0 0.0
    %1792 = vmatpush1.msra.mxu0 0.0
    %1793 = vmatprep.subr.mxu0 0.0
    %1794 = vmatpush1.msra.mxu0 0.0
    %1795 = vmatprep.subr.mxu0 0.0
    %1796 = vmatpush1.msra.mxu0 0.0
    %1797 = vmatprep.subr.mxu0 %v1627
    %1798 = vmatpush1.msra.mxu0 %v1626
    %1799 = vmatprep.subr.mxu0 %v1625
    %1800 = vmatpush1.msra.mxu0 %v1624
    %1801 = vmatprep.subr.mxu0 %v1623
    %1802 = vmatpush1.msra.mxu0 %v1622
    %1803 = vmatprep.subr.mxu0 %v1621
    %1804 = vmatpush1.msra.mxu0 %v1620
    %1805 = vmatprep.subr.mxu0 0.0
    %1806 = vmatpush2.msra.mxu0 0.0
    %1807 = vmatprep.subr.mxu0 0.0
    %1808 = vmatpush2.msra.mxu0 0.0
    %1809 = vmatprep.subr.mxu0 0.0
    %1810 = vmatpush2.msra.mxu0 0.0
    %1811 = vmatprep.subr.mxu0 0.0
    %1812 = vmatpush2.msra.mxu0 0.0
    %1813 = vmatprep.subr.mxu0 0.0
    %1814 = vmatpush2.msra.mxu0 0.0
    %1815 = vmatprep.subr.mxu0 0.0
    %1816 = vmatpush2.msra.mxu0 0.0
    %1817 = vmatprep.subr.mxu0 0.0
    %1818 = vmatpush2.msra.mxu0 0.0
    %1819 = vmatprep.subr.mxu0 0.0
    %1820 = vmatpush2.msra.mxu0 0.0
    %1821 = vmatprep.subr.mxu0 0.0
    %1822 = vmatpush2.msra.mxu0 0.0
    %1823 = vmatprep.subr.mxu0 0.0
    %1824 = vmatpush2.msra.mxu0 0.0
    %1825 = vmatprep.subr.mxu0 0.0
    %1826 = vmatpush2.msra.mxu0 0.0
    %1827 = vmatprep.subr.mxu0 0.0
    %1828 = vmatpush2.msra.mxu0 0.0
    %1829 = vmatprep.subr.mxu0 0.0
    %1830 = vmatpush2.msra.mxu0 0.0
    %1831 = vmatprep.subr.mxu0 0.0
    %1832 = vmatpush2.msra.mxu0 0.0
    %1833 = vmatprep.subr.mxu0 0.0
    %1834 = vmatpush2.msra.mxu0 0.0
    %1835 = vmatprep.subr.mxu0 0.0
    %1836 = vmatpush2.msra.mxu0 0.0
    %1837 = vmatprep.mubr.f32.mxu0 0.0
    %1838 = vmatmul.mubr.f32.gmra.mxu0 %v1756
    %v1839 = vpop.f32.mrf.mxu0
    %v1840 = vadd.f32 %v1721, %v1839
    %v1841 = vpop.f32.mrf.mxu0
    %v1842 = vadd.f32 %v1723, %v1841
    %1843 = vmatprep.mubr.f32.mxu0 0.0
    %1844 = vmatmul.mubr.f32.gmra.mxu0 %v1759
    %v1845 = vpop.f32.mrf.mxu0
    %v1846 = vadd.f32 %v1727, %v1845
    %v1847 = vpop.f32.mrf.mxu0
    %v1848 = vadd.f32 %v1729, %v1847
    %1849 = vmatprep.mubr.f32.mxu0 0.0
    %1850 = vmatmul.mubr.f32.gmra.mxu0 %v1762
    %v1851 = vpop.f32.mrf.mxu0
    %v1852 = vadd.f32 %v1733, %v1851
    %v1853 = vpop.f32.mrf.mxu0
    %v1854 = vadd.f32 %v1735, %v1853
    %1855 = vmatprep.mubr.f32.mxu0 0.0
    %1856 = vmatmul.mubr.f32.gmra.mxu0 %v1765
    %v1857 = vpop.f32.mrf.mxu0
    %v1858 = vadd.f32 %v1739, %v1857
    %v1859 = vpop.f32.mrf.mxu0
    %v1860 = vadd.f32 %v1741, %v1859
    %1861 = vmatprep.mubr.f32.mxu0 0.0
    %1862 = vmatmul.mubr.f32.gmra.mxu0 %v1768
    %v1863 = vpop.f32.mrf.mxu0
    %v1864 = vadd.f32 %v1745, %v1863
    %v1865 = vpop.f32.mrf.mxu0
    %v1866 = vadd.f32 %v1747, %v1865
    %1867 = vmatprep.mubr.f32.mxu0 0.0
    %1868 = vmatmul.mubr.f32.gmra.mxu0 %v1771
    %v1869 = vpop.f32.mrf.mxu0
    %v1870 = vadd.f32 %v1751, %v1869
    %v1871 = vpop.f32.mrf.mxu0
    %v1872 = vadd.f32 %v1753, %v1871
    %1873 = vdwg.mxu0
    %v1874 = vld [vmem:[%s8] sm:$0x3]
    %v1876 = vlaneseq
    %v1877 = vshrl.u32 %v1876, 7
    %v1878 = vsub.s32 0, %v1877
    %v1879 = vrot.slane %v1874, %v1878
    %v1880 = vlaneseq
    %v1881 = vshrl.u32 %v1880, 7
    %v1882 = vsub.s32 1, %v1881
    %v1883 = vrot.slane %v1874, %v1882
    %v1886 = vadd.f32 %v1840, %v1879
    %v1887 = vadd.f32 %v1842, %v1883
    %v1888 = vadd.f32 %v1846, %v1879
    %v1889 = vadd.f32 %v1848, %v1883
    %v1890 = vadd.f32 %v1852, %v1879
    %v1891 = vadd.f32 %v1854, %v1883
    %v1892 = vadd.f32 %v1858, %v1879
    %v1893 = vadd.f32 %v1860, %v1883
    %v1894 = vadd.f32 %v1864, %v1879
    %v1895 = vadd.f32 %v1866, %v1883
    %v1896 = vadd.f32 %v1870, %v1879
    %v1897 = vadd.f32 %v1872, %v1883
    %1898 = vst [vmem:[#allocation2] sm:$0xff] %v1886
    %1899 = vst [vmem:[#allocation2 + $0x8] sm:$0xff] %v1887
    %1900 = vst [vmem:[#allocation2 + $0x10] sm:$0xff] %v1888
    %1901 = vst [vmem:[#allocation2 + $0x18] sm:$0xff] %v1889
    %1902 = vst [vmem:[#allocation2 + $0x20] sm:$0xff] %v1890
    %1903 = vst [vmem:[#allocation2 + $0x28] sm:$0xff] %v1891
    %1904 = vst [vmem:[#allocation2 + $0x30] sm:$0xff] %v1892
    %1905 = vst [vmem:[#allocation2 + $0x38] sm:$0xff] %v1893
    %1906 = vst [vmem:[#allocation2 + $0x40] sm:$0xff] %v1894
    %1907 = vst [vmem:[#allocation2 + $0x48] sm:$0xff] %v1895
    %1908 = vst [vmem:[#allocation2 + $0x50] sm:$0xff] %v1896
    %1909 = vst [vmem:[#allocation2 + $0x58] sm:$0xff] %v1897
    %v1910 = vld [vmem:[#allocation13] sm:$0xff]
    %v1911 = vld [vmem:[#allocation13 + $0x8] sm:$0xff]
    %v1912 = vld [vmem:[#allocation13 + $0x10] sm:$0xff]
    %v1913 = vld [vmem:[#allocation13 + $0x18] sm:$0xff]
    %v1914 = vld [vmem:[#allocation15] sm:$0xff]
    %v1915 = vld [vmem:[#allocation15 + $0x8] sm:$0xff]
    %v1916 = vld [vmem:[#allocation15 + $0x10] sm:$0xff]
    %v1917 = vld [vmem:[#allocation15 + $0x18] sm:$0xff]
    %v1918 = vld [vmem:[#allocation2] sm:$0xff]
    %1919 = vmatprep.subr.mxu0 0.0
    %1920 = vmatpush1.msra.mxu0 0.0
    %1921 = vmatprep.subr.mxu0 0.0
    %1922 = vmatpush1.msra.mxu0 0.0
    %1923 = vmatprep.subr.mxu0 0.0
    %1924 = vmatpush1.msra.mxu0 0.0
    %1925 = vmatprep.subr.mxu0 0.0
    %1926 = vmatpush1.msra.mxu0 0.0
    %1927 = vmatprep.subr.mxu0 0.0
    %1928 = vmatpush1.msra.mxu0 0.0
    %1929 = vmatprep.subr.mxu0 0.0
    %1930 = vmatpush1.msra.mxu0 0.0
    %1931 = vmatprep.subr.mxu0 0.0
    %1932 = vmatpush1.msra.mxu0 0.0
    %1933 = vmatprep.subr.mxu0 0.0
    %1934 = vmatpush1.msra.mxu0 0.0
    %1935 = vmatprep.subr.mxu0 0.0
    %1936 = vmatpush1.msra.mxu0 0.0
    %1937 = vmatprep.subr.mxu0 0.0
    %1938 = vmatpush1.msra.mxu0 0.0
    %1939 = vmatprep.subr.mxu0 0.0
    %1940 = vmatpush1.msra.mxu0 0.0
    %1941 = vmatprep.subr.mxu0 0.0
    %1942 = vmatpush1.msra.mxu0 0.0
    %1943 = vmatprep.subr.mxu0 0.0
    %1944 = vmatpush1.msra.mxu0 %v1913
    %1945 = vmatprep.subr.mxu0 0.0
    %1946 = vmatpush1.msra.mxu0 %v1912
    %1947 = vmatprep.subr.mxu0 0.0
    %1948 = vmatpush1.msra.mxu0 %v1911
    %1949 = vmatprep.subr.mxu0 0.0
    %1950 = vmatpush1.msra.mxu0 %v1910
    %1951 = vmatprep.subr.mxu0 0.0
    %1952 = vmatpush2.msra.mxu0 0.0
    %1953 = vmatprep.subr.mxu0 0.0
    %1954 = vmatpush2.msra.mxu0 0.0
    %1955 = vmatprep.subr.mxu0 0.0
    %1956 = vmatpush2.msra.mxu0 0.0
    %1957 = vmatprep.subr.mxu0 0.0
    %1958 = vmatpush2.msra.mxu0 0.0
    %1959 = vmatprep.subr.mxu0 0.0
    %1960 = vmatpush2.msra.mxu0 0.0
    %1961 = vmatprep.subr.mxu0 0.0
    %1962 = vmatpush2.msra.mxu0 0.0
    %1963 = vmatprep.subr.mxu0 0.0
    %1964 = vmatpush2.msra.mxu0 0.0
    %1965 = vmatprep.subr.mxu0 0.0
    %1966 = vmatpush2.msra.mxu0 0.0
    %1967 = vmatprep.subr.mxu0 0.0
    %1968 = vmatpush2.msra.mxu0 0.0
    %1969 = vmatprep.subr.mxu0 0.0
    %1970 = vmatpush2.msra.mxu0 0.0
    %1971 = vmatprep.subr.mxu0 0.0
    %1972 = vmatpush2.msra.mxu0 0.0
    %1973 = vmatprep.subr.mxu0 0.0
    %1974 = vmatpush2.msra.mxu0 0.0
    %1975 = vmatprep.subr.mxu0 0.0
    %1976 = vmatpush2.msra.mxu0 0.0
    %1977 = vmatprep.subr.mxu0 0.0
    %1978 = vmatpush2.msra.mxu0 0.0
    %1979 = vmatprep.subr.mxu0 0.0
    %1980 = vmatpush2.msra.mxu0 0.0
    %1981 = vmatprep.subr.mxu0 0.0
    %1982 = vmatpush2.msra.mxu0 0.0
    %1983 = vmatprep.mubr.f32.mxu0 0.0
    %1984 = vmatmul.mubr.f32.gmra.mxu0 %v308
    %v1985 = vpop.f32.mrf.mxu0
    %v1986 = vadd.f32 0.0, %v1985
    %v1987 = vpop.f32.mrf.mxu0
    %1988 = vdwg.mxu0
    %v1989 = vadd.f32 %v1918, %v1986
    %v1990 = vld [vmem:[%s381 + $0x8] sm:$0xff]
    %1991 = vmatprep.subr.mxu0 0.0
    %1992 = vmatpush1.msra.mxu0 0.0
    %1993 = vmatprep.subr.mxu0 0.0
    %1994 = vmatpush1.msra.mxu0 0.0
    %1995 = vmatprep.subr.mxu0 0.0
    %1996 = vmatpush1.msra.mxu0 0.0
    %1997 = vmatprep.subr.mxu0 0.0
    %1998 = vmatpush1.msra.mxu0 0.0
    %1999 = vmatprep.subr.mxu0 0.0
    %2000 = vmatpush1.msra.mxu0 0.0
    %2001 = vmatprep.subr.mxu0 0.0
    %2002 = vmatpush1.msra.mxu0 0.0
    %2003 = vmatprep.subr.mxu0 0.0
    %2004 = vmatpush1.msra.mxu0 0.0
    %2005 = vmatprep.subr.mxu0 0.0
    %2006 = vmatpush1.msra.mxu0 0.0
    %2007 = vmatprep.subr.mxu0 0.0
    %2008 = vmatpush1.msra.mxu0 0.0
    %2009 = vmatprep.subr.mxu0 0.0
    %2010 = vmatpush1.msra.mxu0 0.0
    %2011 = vmatprep.subr.mxu0 0.0
    %2012 = vmatpush1.msra.mxu0 0.0
    %2013 = vmatprep.subr.mxu0 0.0
    %2014 = vmatpush1.msra.mxu0 0.0
    %2015 = vmatprep.subr.mxu0 0.0
    %2016 = vmatpush1.msra.mxu0 %v1917
    %2017 = vmatprep.subr.mxu0 0.0
    %2018 = vmatpush1.msra.mxu0 %v1916
    %2019 = vmatprep.subr.mxu0 0.0
    %2020 = vmatpush1.msra.mxu0 %v1915
    %2021 = vmatprep.subr.mxu0 0.0
    %2022 = vmatpush1.msra.mxu0 %v1914
    %2023 = vmatprep.subr.mxu0 0.0
    %2024 = vmatpush2.msra.mxu0 0.0
    %2025 = vmatprep.subr.mxu0 0.0
    %2026 = vmatpush2.msra.mxu0 0.0
    %2027 = vmatprep.subr.mxu0 0.0
    %2028 = vmatpush2.msra.mxu0 0.0
    %2029 = vmatprep.subr.mxu0 0.0
    %2030 = vmatpush2.msra.mxu0 0.0
    %2031 = vmatprep.subr.mxu0 0.0
    %2032 = vmatpush2.msra.mxu0 0.0
    %2033 = vmatprep.subr.mxu0 0.0
    %2034 = vmatpush2.msra.mxu0 0.0
    %2035 = vmatprep.subr.mxu0 0.0
    %2036 = vmatpush2.msra.mxu0 0.0
    %2037 = vmatprep.subr.mxu0 0.0
    %2038 = vmatpush2.msra.mxu0 0.0
    %2039 = vmatprep.subr.mxu0 0.0
    %2040 = vmatpush2.msra.mxu0 0.0
    %2041 = vmatprep.subr.mxu0 0.0
    %2042 = vmatpush2.msra.mxu0 0.0
    %2043 = vmatprep.subr.mxu0 0.0
    %2044 = vmatpush2.msra.mxu0 0.0
    %2045 = vmatprep.subr.mxu0 0.0
    %2046 = vmatpush2.msra.mxu0 0.0
    %2047 = vmatprep.subr.mxu0 0.0
    %2048 = vmatpush2.msra.mxu0 0.0
    %2049 = vmatprep.subr.mxu0 0.0
    %2050 = vmatpush2.msra.mxu0 0.0
    %2051 = vmatprep.subr.mxu0 0.0
    %2052 = vmatpush2.msra.mxu0 0.0
    %2053 = vmatprep.subr.mxu0 0.0
    %2054 = vmatpush2.msra.mxu0 0.0
    %2055 = vmatprep.mubr.f32.mxu0 0.0
    %2056 = vmatmul.mubr.f32.gmra.mxu0 %v308
    %v2057 = vpop.f32.mrf.mxu0
    %v2058 = vadd.f32 0.0, %v2057
    %v2059 = vpop.f32.mrf.mxu0
    %2060 = vdwg.mxu0
    %v2061 = vadd.f32 %v1990, %v2058
    %v2062 = vxor.u32 %v1989, 2147483648
    %v2063 = vmul.f32 %v2062, 1.442695
    %v2064 = vpow.pop %v2063
    %v2065 = vadd.f32 %v2064, 1.0
    %v2066 = vrcp.pop %v2065
    %v2067 = vmul.f32 1.0, %v2066
    %v2068 = vtanh.pop %v1989
    %v2069 = vmul.f32 %v2067, 0.0
    %2071 = vrot.lane.b32.xlu0 %v2068, 64
    %v2072 = vpop.permute.xlu0 %2071
    %v2074 = vmul.f32 %v2067, %v2072
    %2076 = vrot.lane.b32.xlu0 %v2074, 32
    %v2077 = vpop.permute.xlu0 %2076
    %v2079 = vadd.f32 %v2069, %v2077
    %v2080 = vtanh.pop %v2079
    %2082 = vrot.lane.b32.xlu0 %v2080, 64
    %v2083 = vpop.permute.xlu0 %2082
    %v2085 = vmul.f32 %v2067, %v2083
    %v2086 = vxor.u32 %v2061, 2147483648
    %v2087 = vmul.f32 %v2086, 1.442695
    %v2088 = vpow.pop %v2087
    %v2089 = vadd.f32 %v2088, 1.0
    %v2090 = vrcp.pop %v2089
    %v2091 = vmul.f32 1.0, %v2090
    %v2092 = vtanh.pop %v2061
    %v2093 = vmul.f32 %v2091, 0.0
    %2095 = vrot.lane.b32.xlu0 %v2092, 64
    %v2096 = vpop.permute.xlu0 %2095
    %v2098 = vmul.f32 %v2091, %v2096
    %2100 = vrot.lane.b32.xlu0 %v2098, 32
    %v2101 = vpop.permute.xlu0 %2100
    %v2103 = vadd.f32 %v2093, %v2101
    %v2104 = vtanh.pop %v2103
    %2106 = vrot.lane.b32.xlu0 %v2104, 64
    %v2107 = vpop.permute.xlu0 %2106
    %v2109 = vmul.f32 %v2091, %v2107
    %v2110 = vld [vmem:[%s502] sm:$0xff]
    %2112 = vset.pattern.permute.xlu0 0
    %2113 = vperm.xlu0 %2112, %v2110
    %v2114 = vpop.permute.xlu0 %2113
    %v2116 = vmul.f32 %v2109, %v2114
    %v2117 = vmul.f32 %v2103, %v2114
    %2119 = vrot.lane.b32.xlu0 %v2085, 32
    %v2120 = vpop.permute.xlu0 %2119
    %2122 = vst.msk [vmem:[#allocation3] sm:$0xff] %vm166, %v2120
    %2124 = vrot.lane.b32.xlu0 %v2116, 32
    %v2125 = vpop.permute.xlu0 %2124
    %2127 = vst.msk [vmem:[%s520] sm:$0xff] %vm166, %v2125
    %v2128 = vld [vmem:[%s522] sm:$0xff]
    %v2129 = vsel %vm166, %v2120, 0
    %2131 = vmatprep.subr.mxu0 0.0
    %2132 = vmatpush1.msra.mxu0 0.0
    %2133 = vmatprep.subr.mxu0 0.0
    %2134 = vmatpush1.msra.mxu0 0.0
    %2135 = vmatprep.subr.mxu0 0.0
    %2136 = vmatpush1.msra.mxu0 0.0
    %2137 = vmatprep.subr.mxu0 0.0
    %2138 = vmatpush1.msra.mxu0 0.0
    %2139 = vmatprep.subr.mxu0 0.0
    %2140 = vmatpush1.msra.mxu0 0.0
    %2141 = vmatprep.subr.mxu0 0.0
    %2142 = vmatpush1.msra.mxu0 0.0
    %2143 = vmatprep.subr.mxu0 0.0
    %2144 = vmatpush1.msra.mxu0 0.0
    %2145 = vmatprep.subr.mxu0 0.0
    %2146 = vmatpush1.msra.mxu0 0.0
    %2147 = vmatprep.subr.mxu0 0.0
    %2148 = vmatpush1.msra.mxu0 0.0
    %2149 = vmatprep.subr.mxu0 0.0
    %2150 = vmatpush1.msra.mxu0 0.0
    %2151 = vmatprep.subr.mxu0 0.0
    %2152 = vmatpush1.msra.mxu0 0.0
    %2153 = vmatprep.subr.mxu0 0.0
    %2154 = vmatpush1.msra.mxu0 0.0
    %2155 = vmatprep.subr.mxu0 0.0
    %2156 = vmatpush1.msra.mxu0 %v1913
    %2157 = vmatprep.subr.mxu0 0.0
    %2158 = vmatpush1.msra.mxu0 %v1912
    %2159 = vmatprep.subr.mxu0 0.0
    %2160 = vmatpush1.msra.mxu0 %v1911
    %2161 = vmatprep.subr.mxu0 0.0
    %2162 = vmatpush1.msra.mxu0 %v1910
    %2163 = vmatprep.subr.mxu0 0.0
    %2164 = vmatpush2.msra.mxu0 0.0
    %2165 = vmatprep.subr.mxu0 0.0
    %2166 = vmatpush2.msra.mxu0 0.0
    %2167 = vmatprep.subr.mxu0 0.0
    %2168 = vmatpush2.msra.mxu0 0.0
    %2169 = vmatprep.subr.mxu0 0.0
    %2170 = vmatpush2.msra.mxu0 0.0
    %2171 = vmatprep.subr.mxu0 0.0
    %2172 = vmatpush2.msra.mxu0 0.0
    %2173 = vmatprep.subr.mxu0 0.0
    %2174 = vmatpush2.msra.mxu0 0.0
    %2175 = vmatprep.subr.mxu0 0.0
    %2176 = vmatpush2.msra.mxu0 0.0
    %2177 = vmatprep.subr.mxu0 0.0
    %2178 = vmatpush2.msra.mxu0 0.0
    %2179 = vmatprep.subr.mxu0 0.0
    %2180 = vmatpush2.msra.mxu0 0.0
    %2181 = vmatprep.subr.mxu0 0.0
    %2182 = vmatpush2.msra.mxu0 0.0
    %2183 = vmatprep.subr.mxu0 0.0
    %2184 = vmatpush2.msra.mxu0 0.0
    %2185 = vmatprep.subr.mxu0 0.0
    %2186 = vmatpush2.msra.mxu0 0.0
    %2187 = vmatprep.subr.mxu0 0.0
    %2188 = vmatpush2.msra.mxu0 0.0
    %2189 = vmatprep.subr.mxu0 0.0
    %2190 = vmatpush2.msra.mxu0 0.0
    %2191 = vmatprep.subr.mxu0 0.0
    %2192 = vmatpush2.msra.mxu0 0.0
    %2193 = vmatprep.subr.mxu0 0.0
    %2194 = vmatpush2.msra.mxu0 0.0
    %2195 = vmatprep.mubr.f32.mxu0 0.0
    %2196 = vmatmul.mubr.f32.gmra.mxu0 %v2129
    %v2197 = vpop.f32.mrf.mxu0
    %v2198 = vadd.f32 0.0, %v2197
    %v2199 = vpop.f32.mrf.mxu0
    %2200 = vdwg.mxu0
    %v2201 = vadd.f32 %v2128, %v2198
    %v2202 = vld [vmem:[%s597 + $0x8] sm:$0xff]
    %v2203 = vsel %vm166, %v2125, 0
    %2205 = vmatprep.subr.mxu0 0.0
    %2206 = vmatpush1.msra.mxu0 0.0
    %2207 = vmatprep.subr.mxu0 0.0
    %2208 = vmatpush1.msra.mxu0 0.0
    %2209 = vmatprep.subr.mxu0 0.0
    %2210 = vmatpush1.msra.mxu0 0.0
    %2211 = vmatprep.subr.mxu0 0.0
    %2212 = vmatpush1.msra.mxu0 0.0
    %2213 = vmatprep.subr.mxu0 0.0
    %2214 = vmatpush1.msra.mxu0 0.0
    %2215 = vmatprep.subr.mxu0 0.0
    %2216 = vmatpush1.msra.mxu0 0.0
    %2217 = vmatprep.subr.mxu0 0.0
    %2218 = vmatpush1.msra.mxu0 0.0
    %2219 = vmatprep.subr.mxu0 0.0
    %2220 = vmatpush1.msra.mxu0 0.0
    %2221 = vmatprep.subr.mxu0 0.0
    %2222 = vmatpush1.msra.mxu0 0.0
    %2223 = vmatprep.subr.mxu0 0.0
    %2224 = vmatpush1.msra.mxu0 0.0
    %2225 = vmatprep.subr.mxu0 0.0
    %2226 = vmatpush1.msra.mxu0 0.0
    %2227 = vmatprep.subr.mxu0 0.0
    %2228 = vmatpush1.msra.mxu0 0.0
    %2229 = vmatprep.subr.mxu0 0.0
    %2230 = vmatpush1.msra.mxu0 %v1917
    %2231 = vmatprep.subr.mxu0 0.0
    %2232 = vmatpush1.msra.mxu0 %v1916
    %2233 = vmatprep.subr.mxu0 0.0
    %2234 = vmatpush1.msra.mxu0 %v1915
    %2235 = vmatprep.subr.mxu0 0.0
    %2236 = vmatpush1.msra.mxu0 %v1914
    %2237 = vmatprep.subr.mxu0 0.0
    %2238 = vmatpush2.msra.mxu0 0.0
    %2239 = vmatprep.subr.mxu0 0.0
    %2240 = vmatpush2.msra.mxu0 0.0
    %2241 = vmatprep.subr.mxu0 0.0
    %2242 = vmatpush2.msra.mxu0 0.0
    %2243 = vmatprep.subr.mxu0 0.0
    %2244 = vmatpush2.msra.mxu0 0.0
    %2245 = vmatprep.subr.mxu0 0.0
    %2246 = vmatpush2.msra.mxu0 0.0
    %2247 = vmatprep.subr.mxu0 0.0
    %2248 = vmatpush2.msra.mxu0 0.0
    %2249 = vmatprep.subr.mxu0 0.0
    %2250 = vmatpush2.msra.mxu0 0.0
    %2251 = vmatprep.subr.mxu0 0.0
    %2252 = vmatpush2.msra.mxu0 0.0
    %2253 = vmatprep.subr.mxu0 0.0
    %2254 = vmatpush2.msra.mxu0 0.0
    %2255 = vmatprep.subr.mxu0 0.0
    %2256 = vmatpush2.msra.mxu0 0.0
    %2257 = vmatprep.subr.mxu0 0.0
    %2258 = vmatpush2.msra.mxu0 0.0
    %2259 = vmatprep.subr.mxu0 0.0
    %2260 = vmatpush2.msra.mxu0 0.0
    %2261 = vmatprep.subr.mxu0 0.0
    %2262 = vmatpush2.msra.mxu0 0.0
    %2263 = vmatprep.subr.mxu0 0.0
    %2264 = vmatpush2.msra.mxu0 0.0
    %2265 = vmatprep.subr.mxu0 0.0
    %2266 = vmatpush2.msra.mxu0 0.0
    %2267 = vmatprep.subr.mxu0 0.0
    %2268 = vmatpush2.msra.mxu0 0.0
    %2269 = vmatprep.mubr.f32.mxu0 0.0
    %2270 = vmatmul.mubr.f32.gmra.mxu0 %v2203
    %v2271 = vpop.f32.mrf.mxu0
    %v2272 = vadd.f32 0.0, %v2271
    %v2273 = vpop.f32.mrf.mxu0
    %2274 = vdwg.mxu0
    %v2275 = vadd.f32 %v2202, %v2272
    %v2276 = vxor.u32 %v2201, 2147483648
    %v2277 = vmul.f32 %v2276, 1.442695
    %v2278 = vpow.pop %v2277
    %v2279 = vadd.f32 %v2278, 1.0
    %v2280 = vrcp.pop %v2279
    %v2281 = vmul.f32 1.0, %v2280
    %v2282 = vtanh.pop %v2201
    %v2283 = vmul.f32 %v2281, %v2079
    %2285 = vrot.lane.b32.xlu0 %v2282, 64
    %v2286 = vpop.permute.xlu0 %2285
    %v2288 = vmul.f32 %v2281, %v2286
    %2290 = vrot.lane.b32.xlu0 %v2288, 32
    %v2291 = vpop.permute.xlu0 %2290
    %v2293 = vadd.f32 %v2283, %v2291
    %v2294 = vtanh.pop %v2293
    %2296 = vrot.lane.b32.xlu0 %v2294, 64
    %v2297 = vpop.permute.xlu0 %2296
    %v2299 = vmul.f32 %v2281, %v2297
    %v2300 = vxor.u32 %v2275, 2147483648
    %v2301 = vmul.f32 %v2300, 1.442695
    %v2302 = vpow.pop %v2301
    %v2303 = vadd.f32 %v2302, 1.0
    %v2304 = vrcp.pop %v2303
    %v2305 = vmul.f32 1.0, %v2304
    %v2306 = vtanh.pop %v2275
    %v2307 = vmul.f32 %v2305, %v2117
    %2309 = vrot.lane.b32.xlu0 %v2306, 64
    %v2310 = vpop.permute.xlu0 %2309
    %v2312 = vmul.f32 %v2305, %v2310
    %2314 = vrot.lane.b32.xlu0 %v2312, 32
    %v2315 = vpop.permute.xlu0 %2314
    %v2317 = vadd.f32 %v2307, %v2315
    %v2318 = vtanh.pop %v2317
    %2320 = vrot.lane.b32.xlu0 %v2318, 64
    %v2321 = vpop.permute.xlu0 %2320
    %v2323 = vmul.f32 %v2305, %v2321
    %v2324 = vld [vmem:[%s720] sm:$0xff]
    %2326 = vset.pattern.permute.xlu0 0
    %2327 = vperm.xlu0 %2326, %v2324
    %v2328 = vpop.permute.xlu0 %2327
    %v2330 = vmul.f32 %v2323, %v2328
    %v2331 = vmul.f32 %v2317, %v2328
    %2333 = vrot.lane.b32.xlu0 %v2299, 32
    %v2334 = vpop.permute.xlu0 %2333
    %2336 = vst.msk [vmem:[%s733] sm:$0xff] %vm166, %v2334
    %2338 = vrot.lane.b32.xlu0 %v2330, 32
    %v2339 = vpop.permute.xlu0 %2338
    %2341 = vst.msk [vmem:[%s739] sm:$0xff] %vm166, %v2339
    %v2342 = vld [vmem:[%s741] sm:$0xff]
    %v2343 = vsel %vm166, %v2334, 0
    %2345 = vmatprep.subr.mxu0 0.0
    %2346 = vmatpush1.msra.mxu0 0.0
    %2347 = vmatprep.subr.mxu0 0.0
    %2348 = vmatpush1.msra.mxu0 0.0
    %2349 = vmatprep.subr.mxu0 0.0
    %2350 = vmatpush1.msra.mxu0 0.0
    %2351 = vmatprep.subr.mxu0 0.0
    %2352 = vmatpush1.msra.mxu0 0.0
    %2353 = vmatprep.subr.mxu0 0.0
    %2354 = vmatpush1.msra.mxu0 0.0
    %2355 = vmatprep.subr.mxu0 0.0
    %2356 = vmatpush1.msra.mxu0 0.0
    %2357 = vmatprep.subr.mxu0 0.0
    %2358 = vmatpush1.msra.mxu0 0.0
    %2359 = vmatprep.subr.mxu0 0.0
    %2360 = vmatpush1.msra.mxu0 0.0
    %2361 = vmatprep.subr.mxu0 0.0
    %2362 = vmatpush1.msra.mxu0 0.0
    %2363 = vmatprep.subr.mxu0 0.0
    %2364 = vmatpush1.msra.mxu0 0.0
    %2365 = vmatprep.subr.mxu0 0.0
    %2366 = vmatpush1.msra.mxu0 0.0
    %2367 = vmatprep.subr.mxu0 0.0
    %2368 = vmatpush1.msra.mxu0 0.0
    %2369 = vmatprep.subr.mxu0 0.0
    %2370 = vmatpush1.msra.mxu0 %v1913
    %2371 = vmatprep.subr.mxu0 0.0
    %2372 = vmatpush1.msra.mxu0 %v1912
    %2373 = vmatprep.subr.mxu0 0.0
    %2374 = vmatpush1.msra.mxu0 %v1911
    %2375 = vmatprep.subr.mxu0 0.0
    %2376 = vmatpush1.msra.mxu0 %v1910
    %2377 = vmatprep.subr.mxu0 0.0
    %2378 = vmatpush2.msra.mxu0 0.0
    %2379 = vmatprep.subr.mxu0 0.0
    %2380 = vmatpush2.msra.mxu0 0.0
    %2381 = vmatprep.subr.mxu0 0.0
    %2382 = vmatpush2.msra.mxu0 0.0
    %2383 = vmatprep.subr.mxu0 0.0
    %2384 = vmatpush2.msra.mxu0 0.0
    %2385 = vmatprep.subr.mxu0 0.0
    %2386 = vmatpush2.msra.mxu0 0.0
    %2387 = vmatprep.subr.mxu0 0.0
    %2388 = vmatpush2.msra.mxu0 0.0
    %2389 = vmatprep.subr.mxu0 0.0
    %2390 = vmatpush2.msra.mxu0 0.0
    %2391 = vmatprep.subr.mxu0 0.0
    %2392 = vmatpush2.msra.mxu0 0.0
    %2393 = vmatprep.subr.mxu0 0.0
    %2394 = vmatpush2.msra.mxu0 0.0
    %2395 = vmatprep.subr.mxu0 0.0
    %2396 = vmatpush2.msra.mxu0 0.0
    %2397 = vmatprep.subr.mxu0 0.0
    %2398 = vmatpush2.msra.mxu0 0.0
    %2399 = vmatprep.subr.mxu0 0.0
    %2400 = vmatpush2.msra.mxu0 0.0
    %2401 = vmatprep.subr.mxu0 0.0
    %2402 = vmatpush2.msra.mxu0 0.0
    %2403 = vmatprep.subr.mxu0 0.0
    %2404 = vmatpush2.msra.mxu0 0.0
    %2405 = vmatprep.subr.mxu0 0.0
    %2406 = vmatpush2.msra.mxu0 0.0
    %2407 = vmatprep.subr.mxu0 0.0
    %2408 = vmatpush2.msra.mxu0 0.0
    %2409 = vmatprep.mubr.f32.mxu0 0.0
    %2410 = vmatmul.mubr.f32.gmra.mxu0 %v2343
    %v2411 = vpop.f32.mrf.mxu0
    %v2412 = vadd.f32 0.0, %v2411
    %v2413 = vpop.f32.mrf.mxu0
    %2414 = vdwg.mxu0
    %v2415 = vadd.f32 %v2342, %v2412
    %v2416 = vld [vmem:[%s816 + $0x8] sm:$0xff]
    %v2417 = vsel %vm166, %v2339, 0
    %2419 = vmatprep.subr.mxu0 0.0
    %2420 = vmatpush1.msra.mxu0 0.0
    %2421 = vmatprep.subr.mxu0 0.0
    %2422 = vmatpush1.msra.mxu0 0.0
    %2423 = vmatprep.subr.mxu0 0.0
    %2424 = vmatpush1.msra.mxu0 0.0
    %2425 = vmatprep.subr.mxu0 0.0
    %2426 = vmatpush1.msra.mxu0 0.0
    %2427 = vmatprep.subr.mxu0 0.0
    %2428 = vmatpush1.msra.mxu0 0.0
    %2429 = vmatprep.subr.mxu0 0.0
    %2430 = vmatpush1.msra.mxu0 0.0
    %2431 = vmatprep.subr.mxu0 0.0
    %2432 = vmatpush1.msra.mxu0 0.0
    %2433 = vmatprep.subr.mxu0 0.0
    %2434 = vmatpush1.msra.mxu0 0.0
    %2435 = vmatprep.subr.mxu0 0.0
    %2436 = vmatpush1.msra.mxu0 0.0
    %2437 = vmatprep.subr.mxu0 0.0
    %2438 = vmatpush1.msra.mxu0 0.0
    %2439 = vmatprep.subr.mxu0 0.0
    %2440 = vmatpush1.msra.mxu0 0.0
    %2441 = vmatprep.subr.mxu0 0.0
    %2442 = vmatpush1.msra.mxu0 0.0
    %2443 = vmatprep.subr.mxu0 0.0
    %2444 = vmatpush1.msra.mxu0 %v1917
    %2445 = vmatprep.subr.mxu0 0.0
    %2446 = vmatpush1.msra.mxu0 %v1916
    %2447 = vmatprep.subr.mxu0 0.0
    %2448 = vmatpush1.msra.mxu0 %v1915
    %2449 = vmatprep.subr.mxu0 0.0
    %2450 = vmatpush1.msra.mxu0 %v1914
    %2451 = vmatprep.subr.mxu0 0.0
    %2452 = vmatpush2.msra.mxu0 0.0
    %2453 = vmatprep.subr.mxu0 0.0
    %2454 = vmatpush2.msra.mxu0 0.0
    %2455 = vmatprep.subr.mxu0 0.0
    %2456 = vmatpush2.msra.mxu0 0.0
    %2457 = vmatprep.subr.mxu0 0.0
    %2458 = vmatpush2.msra.mxu0 0.0
    %2459 = vmatprep.subr.mxu0 0.0
    %2460 = vmatpush2.msra.mxu0 0.0
    %2461 = vmatprep.subr.mxu0 0.0
    %2462 = vmatpush2.msra.mxu0 0.0
    %2463 = vmatprep.subr.mxu0 0.0
    %2464 = vmatpush2.msra.mxu0 0.0
    %2465 = vmatprep.subr.mxu0 0.0
    %2466 = vmatpush2.msra.mxu0 0.0
    %2467 = vmatprep.subr.mxu0 0.0
    %2468 = vmatpush2.msra.mxu0 0.0
    %2469 = vmatprep.subr.mxu0 0.0
    %2470 = vmatpush2.msra.mxu0 0.0
    %2471 = vmatprep.subr.mxu0 0.0
    %2472 = vmatpush2.msra.mxu0 0.0
    %2473 = vmatprep.subr.mxu0 0.0
    %2474 = vmatpush2.msra.mxu0 0.0
    %2475 = vmatprep.subr.mxu0 0.0
    %2476 = vmatpush2.msra.mxu0 0.0
    %2477 = vmatprep.subr.mxu0 0.0
    %2478 = vmatpush2.msra.mxu0 0.0
    %2479 = vmatprep.subr.mxu0 0.0
    %2480 = vmatpush2.msra.mxu0 0.0
    %2481 = vmatprep.subr.mxu0 0.0
    %2482 = vmatpush2.msra.mxu0 0.0
    %2483 = vmatprep.mubr.f32.mxu0 0.0
    %2484 = vmatmul.mubr.f32.gmra.mxu0 %v2417
    %v2485 = vpop.f32.mrf.mxu0
    %v2486 = vadd.f32 0.0, %v2485
    %v2487 = vpop.f32.mrf.mxu0
    %2488 = vdwg.mxu0
    %v2489 = vadd.f32 %v2416, %v2486
    %v2490 = vxor.u32 %v2415, 2147483648
    %v2491 = vmul.f32 %v2490, 1.442695
    %v2492 = vpow.pop %v2491
    %v2493 = vadd.f32 %v2492, 1.0
    %v2494 = vrcp.pop %v2493
    %v2495 = vmul.f32 1.0, %v2494
    %v2496 = vtanh.pop %v2415
    %v2497 = vmul.f32 %v2495, %v2293
    %2499 = vrot.lane.b32.xlu0 %v2496, 64
    %v2500 = vpop.permute.xlu0 %2499
    %v2502 = vmul.f32 %v2495, %v2500
    %2504 = vrot.lane.b32.xlu0 %v2502, 32
    %v2505 = vpop.permute.xlu0 %2504
    %v2507 = vadd.f32 %v2497, %v2505
    %v2508 = vtanh.pop %v2507
    %2510 = vrot.lane.b32.xlu0 %v2508, 64
    %v2511 = vpop.permute.xlu0 %2510
    %v2513 = vmul.f32 %v2495, %v2511
    %v2514 = vxor.u32 %v2489, 2147483648
    %v2515 = vmul.f32 %v2514, 1.442695
    %v2516 = vpow.pop %v2515
    %v2517 = vadd.f32 %v2516, 1.0
    %v2518 = vrcp.pop %v2517
    %v2519 = vmul.f32 1.0, %v2518
    %v2520 = vtanh.pop %v2489
    %v2521 = vmul.f32 %v2519, %v2331
    %2523 = vrot.lane.b32.xlu0 %v2520, 64
    %v2524 = vpop.permute.xlu0 %2523
    %v2526 = vmul.f32 %v2519, %v2524
    %2528 = vrot.lane.b32.xlu0 %v2526, 32
    %v2529 = vpop.permute.xlu0 %2528
    %v2531 = vadd.f32 %v2521, %v2529
    %v2532 = vtanh.pop %v2531
    %2534 = vrot.lane.b32.xlu0 %v2532, 64
    %v2535 = vpop.permute.xlu0 %2534
    %v2537 = vmul.f32 %v2519, %v2535
    %v2538 = vld [vmem:[%s939] sm:$0xff]
    %2540 = vset.pattern.permute.xlu0 0
    %2541 = vperm.xlu0 %2540, %v2538
    %v2542 = vpop.permute.xlu0 %2541
    %v2544 = vmul.f32 %v2537, %v2542
    %v2545 = vmul.f32 %v2531, %v2542
    %2547 = vrot.lane.b32.xlu0 %v2513, 32
    %v2548 = vpop.permute.xlu0 %2547
    %2550 = vst.msk [vmem:[%s952] sm:$0xff] %vm166, %v2548
    %2552 = vrot.lane.b32.xlu0 %v2544, 32
    %v2553 = vpop.permute.xlu0 %2552
    %2555 = vst.msk [vmem:[%s958] sm:$0xff] %vm166, %v2553
    %v2556 = vld [vmem:[%s816] sm:$0xff]
    %v2557 = vsel %vm166, %v2548, 0
    %2559 = vmatprep.subr.mxu0 0.0
    %2560 = vmatpush1.msra.mxu0 0.0
    %2561 = vmatprep.subr.mxu0 0.0
    %2562 = vmatpush1.msra.mxu0 0.0
    %2563 = vmatprep.subr.mxu0 0.0
    %2564 = vmatpush1.msra.mxu0 0.0
    %2565 = vmatprep.subr.mxu0 0.0
    %2566 = vmatpush1.msra.mxu0 0.0
    %2567 = vmatprep.subr.mxu0 0.0
    %2568 = vmatpush1.msra.mxu0 0.0
    %2569 = vmatprep.subr.mxu0 0.0
    %2570 = vmatpush1.msra.mxu0 0.0
    %2571 = vmatprep.subr.mxu0 0.0
    %2572 = vmatpush1.msra.mxu0 0.0
    %2573 = vmatprep.subr.mxu0 0.0
    %2574 = vmatpush1.msra.mxu0 0.0
    %2575 = vmatprep.subr.mxu0 0.0
    %2576 = vmatpush1.msra.mxu0 0.0
    %2577 = vmatprep.subr.mxu0 0.0
    %2578 = vmatpush1.msra.mxu0 0.0
    %2579 = vmatprep.subr.mxu0 0.0
    %2580 = vmatpush1.msra.mxu0 0.0
    %2581 = vmatprep.subr.mxu0 0.0
    %2582 = vmatpush1.msra.mxu0 0.0
    %2583 = vmatprep.subr.mxu0 0.0
    %2584 = vmatpush1.msra.mxu0 %v1913
    %2585 = vmatprep.subr.mxu0 0.0
    %2586 = vmatpush1.msra.mxu0 %v1912
    %2587 = vmatprep.subr.mxu0 0.0
    %2588 = vmatpush1.msra.mxu0 %v1911
    %2589 = vmatprep.subr.mxu0 0.0
    %2590 = vmatpush1.msra.mxu0 %v1910
    %2591 = vmatprep.subr.mxu0 0.0
    %2592 = vmatpush2.msra.mxu0 0.0
    %2593 = vmatprep.subr.mxu0 0.0
    %2594 = vmatpush2.msra.mxu0 0.0
    %2595 = vmatprep.subr.mxu0 0.0
    %2596 = vmatpush2.msra.mxu0 0.0
    %2597 = vmatprep.subr.mxu0 0.0
    %2598 = vmatpush2.msra.mxu0 0.0
    %2599 = vmatprep.subr.mxu0 0.0
    %2600 = vmatpush2.msra.mxu0 0.0
    %2601 = vmatprep.subr.mxu0 0.0
    %2602 = vmatpush2.msra.mxu0 0.0
    %2603 = vmatprep.subr.mxu0 0.0
    %2604 = vmatpush2.msra.mxu0 0.0
    %2605 = vmatprep.subr.mxu0 0.0
    %2606 = vmatpush2.msra.mxu0 0.0
    %2607 = vmatprep.subr.mxu0 0.0
    %2608 = vmatpush2.msra.mxu0 0.0
    %2609 = vmatprep.subr.mxu0 0.0
    %2610 = vmatpush2.msra.mxu0 0.0
    %2611 = vmatprep.subr.mxu0 0.0
    %2612 = vmatpush2.msra.mxu0 0.0
    %2613 = vmatprep.subr.mxu0 0.0
    %2614 = vmatpush2.msra.mxu0 0.0
    %2615 = vmatprep.subr.mxu0 0.0
    %2616 = vmatpush2.msra.mxu0 0.0
    %2617 = vmatprep.subr.mxu0 0.0
    %2618 = vmatpush2.msra.mxu0 0.0
    %2619 = vmatprep.subr.mxu0 0.0
    %2620 = vmatpush2.msra.mxu0 0.0
    %2621 = vmatprep.subr.mxu0 0.0
    %2622 = vmatpush2.msra.mxu0 0.0
    %2623 = vmatprep.mubr.f32.mxu0 0.0
    %2624 = vmatmul.mubr.f32.gmra.mxu0 %v2557
    %v2625 = vpop.f32.mrf.mxu0
    %v2626 = vadd.f32 0.0, %v2625
    %v2627 = vpop.f32.mrf.mxu0
    %2628 = vdwg.mxu0
    %v2629 = vadd.f32 %v2556, %v2626
    %v2630 = vld [vmem:[%s741 + $0x8] sm:$0xff]
    %v2631 = vsel %vm166, %v2553, 0
    %2633 = vmatprep.subr.mxu0 0.0
    %2634 = vmatpush1.msra.mxu0 0.0
    %2635 = vmatprep.subr.mxu0 0.0
    %2636 = vmatpush1.msra.mxu0 0.0
    %2637 = vmatprep.subr.mxu0 0.0
    %2638 = vmatpush1.msra.mxu0 0.0
    %2639 = vmatprep.subr.mxu0 0.0
    %2640 = vmatpush1.msra.mxu0 0.0
    %2641 = vmatprep.subr.mxu0 0.0
    %2642 = vmatpush1.msra.mxu0 0.0
    %2643 = vmatprep.subr.mxu0 0.0
    %2644 = vmatpush1.msra.mxu0 0.0
    %2645 = vmatprep.subr.mxu0 0.0
    %2646 = vmatpush1.msra.mxu0 0.0
    %2647 = vmatprep.subr.mxu0 0.0
    %2648 = vmatpush1.msra.mxu0 0.0
    %2649 = vmatprep.subr.mxu0 0.0
    %2650 = vmatpush1.msra.mxu0 0.0
    %2651 = vmatprep.subr.mxu0 0.0
    %2652 = vmatpush1.msra.mxu0 0.0
    %2653 = vmatprep.subr.mxu0 0.0
    %2654 = vmatpush1.msra.mxu0 0.0
    %2655 = vmatprep.subr.mxu0 0.0
    %2656 = vmatpush1.msra.mxu0 0.0
    %2657 = vmatprep.subr.mxu0 0.0
    %2658 = vmatpush1.msra.mxu0 %v1917
    %2659 = vmatprep.subr.mxu0 0.0
    %2660 = vmatpush1.msra.mxu0 %v1916
    %2661 = vmatprep.subr.mxu0 0.0
    %2662 = vmatpush1.msra.mxu0 %v1915
    %2663 = vmatprep.subr.mxu0 0.0
    %2664 = vmatpush1.msra.mxu0 %v1914
    %2665 = vmatprep.subr.mxu0 0.0
    %2666 = vmatpush2.msra.mxu0 0.0
    %2667 = vmatprep.subr.mxu0 0.0
    %2668 = vmatpush2.msra.mxu0 0.0
    %2669 = vmatprep.subr.mxu0 0.0
    %2670 = vmatpush2.msra.mxu0 0.0
    %2671 = vmatprep.subr.mxu0 0.0
    %2672 = vmatpush2.msra.mxu0 0.0
    %2673 = vmatprep.subr.mxu0 0.0
    %2674 = vmatpush2.msra.mxu0 0.0
    %2675 = vmatprep.subr.mxu0 0.0
    %2676 = vmatpush2.msra.mxu0 0.0
    %2677 = vmatprep.subr.mxu0 0.0
    %2678 = vmatpush2.msra.mxu0 0.0
    %2679 = vmatprep.subr.mxu0 0.0
    %2680 = vmatpush2.msra.mxu0 0.0
    %2681 = vmatprep.subr.mxu0 0.0
    %2682 = vmatpush2.msra.mxu0 0.0
    %2683 = vmatprep.subr.mxu0 0.0
    %2684 = vmatpush2.msra.mxu0 0.0
    %2685 = vmatprep.subr.mxu0 0.0
    %2686 = vmatpush2.msra.mxu0 0.0
    %2687 = vmatprep.subr.mxu0 0.0
    %2688 = vmatpush2.msra.mxu0 0.0
    %2689 = vmatprep.subr.mxu0 0.0
    %2690 = vmatpush2.msra.mxu0 0.0
    %2691 = vmatprep.subr.mxu0 0.0
    %2692 = vmatpush2.msra.mxu0 0.0
    %2693 = vmatprep.subr.mxu0 0.0
    %2694 = vmatpush2.msra.mxu0 0.0
    %2695 = vmatprep.subr.mxu0 0.0
    %2696 = vmatpush2.msra.mxu0 0.0
    %2697 = vmatprep.mubr.f32.mxu0 0.0
    %2698 = vmatmul.mubr.f32.gmra.mxu0 %v2631
    %v2699 = vpop.f32.mrf.mxu0
    %v2700 = vadd.f32 0.0, %v2699
    %v2701 = vpop.f32.mrf.mxu0
    %2702 = vdwg.mxu0
    %v2703 = vadd.f32 %v2630, %v2700
    %v2704 = vxor.u32 %v2629, 2147483648
    %v2705 = vmul.f32 %v2704, 1.442695
    %v2706 = vpow.pop %v2705
    %v2707 = vadd.f32 %v2706, 1.0
    %v2708 = vrcp.pop %v2707
    %v2709 = vmul.f32 1.0, %v2708
    %v2710 = vtanh.pop %v2629
    %v2711 = vmul.f32 %v2709, %v2507
    %2713 = vrot.lane.b32.xlu0 %v2710, 64
    %v2714 = vpop.permute.xlu0 %2713
    %v2716 = vmul.f32 %v2709, %v2714
    %2718 = vrot.lane.b32.xlu0 %v2716, 32
    %v2719 = vpop.permute.xlu0 %2718
    %v2721 = vadd.f32 %v2711, %v2719
    %v2722 = vtanh.pop %v2721
    %2724 = vrot.lane.b32.xlu0 %v2722, 64
    %v2725 = vpop.permute.xlu0 %2724
    %v2727 = vmul.f32 %v2709, %v2725
    %v2728 = vxor.u32 %v2703, 2147483648
    %v2729 = vmul.f32 %v2728, 1.442695
    %v2730 = vpow.pop %v2729
    %v2731 = vadd.f32 %v2730, 1.0
    %v2732 = vrcp.pop %v2731
    %v2733 = vmul.f32 1.0, %v2732
    %v2734 = vtanh.pop %v2703
    %v2735 = vmul.f32 %v2733, %v2545
    %2737 = vrot.lane.b32.xlu0 %v2734, 64
    %v2738 = vpop.permute.xlu0 %2737
    %v2740 = vmul.f32 %v2733, %v2738
    %2742 = vrot.lane.b32.xlu0 %v2740, 32
    %v2743 = vpop.permute.xlu0 %2742
    %v2745 = vadd.f32 %v2735, %v2743
    %v2746 = vtanh.pop %v2745
    %2748 = vrot.lane.b32.xlu0 %v2746, 64
    %v2749 = vpop.permute.xlu0 %2748
    %v2751 = vmul.f32 %v2733, %v2749
    %v2752 = vld [vmem:[%s1156] sm:$0xff]
    %2754 = vset.pattern.permute.xlu0 0
    %2755 = vperm.xlu0 %2754, %v2752
    %v2756 = vpop.permute.xlu0 %2755
    %v2758 = vmul.f32 %v2751, %v2756
    %v2759 = vmul.f32 %v2745, %v2756
    %2761 = vrot.lane.b32.xlu0 %v2727, 32
    %v2762 = vpop.permute.xlu0 %2761
    %2764 = vst.msk [vmem:[%s1169] sm:$0xff] %vm166, %v2762
    %2766 = vrot.lane.b32.xlu0 %v2758, 32
    %v2767 = vpop.permute.xlu0 %2766
    %2769 = vst.msk [vmem:[%s1175] sm:$0xff] %vm166, %v2767
    %v2770 = vld [vmem:[%s597] sm:$0xff]
    %v2771 = vsel %vm166, %v2762, 0
    %2773 = vmatprep.subr.mxu0 0.0
    %2774 = vmatpush1.msra.mxu0 0.0
    %2775 = vmatprep.subr.mxu0 0.0
    %2776 = vmatpush1.msra.mxu0 0.0
    %2777 = vmatprep.subr.mxu0 0.0
    %2778 = vmatpush1.msra.mxu0 0.0
    %2779 = vmatprep.subr.mxu0 0.0
    %2780 = vmatpush1.msra.mxu0 0.0
    %2781 = vmatprep.subr.mxu0 0.0
    %2782 = vmatpush1.msra.mxu0 0.0
    %2783 = vmatprep.subr.mxu0 0.0
    %2784 = vmatpush1.msra.mxu0 0.0
    %2785 = vmatprep.subr.mxu0 0.0
    %2786 = vmatpush1.msra.mxu0 0.0
    %2787 = vmatprep.subr.mxu0 0.0
    %2788 = vmatpush1.msra.mxu0 0.0
    %2789 = vmatprep.subr.mxu0 0.0
    %2790 = vmatpush1.msra.mxu0 0.0
    %2791 = vmatprep.subr.mxu0 0.0
    %2792 = vmatpush1.msra.mxu0 0.0
    %2793 = vmatprep.subr.mxu0 0.0
    %2794 = vmatpush1.msra.mxu0 0.0
    %2795 = vmatprep.subr.mxu0 0.0
    %2796 = vmatpush1.msra.mxu0 0.0
    %2797 = vmatprep.subr.mxu0 0.0
    %2798 = vmatpush1.msra.mxu0 %v1913
    %2799 = vmatprep.subr.mxu0 0.0
    %2800 = vmatpush1.msra.mxu0 %v1912
    %2801 = vmatprep.subr.mxu0 0.0
    %2802 = vmatpush1.msra.mxu0 %v1911
    %2803 = vmatprep.subr.mxu0 0.0
    %2804 = vmatpush1.msra.mxu0 %v1910
    %2805 = vmatprep.subr.mxu0 0.0
    %2806 = vmatpush2.msra.mxu0 0.0
    %2807 = vmatprep.subr.mxu0 0.0
    %2808 = vmatpush2.msra.mxu0 0.0
    %2809 = vmatprep.subr.mxu0 0.0
    %2810 = vmatpush2.msra.mxu0 0.0
    %2811 = vmatprep.subr.mxu0 0.0
    %2812 = vmatpush2.msra.mxu0 0.0
    %2813 = vmatprep.subr.mxu0 0.0
    %2814 = vmatpush2.msra.mxu0 0.0
    %2815 = vmatprep.subr.mxu0 0.0
    %2816 = vmatpush2.msra.mxu0 0.0
    %2817 = vmatprep.subr.mxu0 0.0
    %2818 = vmatpush2.msra.mxu0 0.0
    %2819 = vmatprep.subr.mxu0 0.0
    %2820 = vmatpush2.msra.mxu0 0.0
    %2821 = vmatprep.subr.mxu0 0.0
    %2822 = vmatpush2.msra.mxu0 0.0
    %2823 = vmatprep.subr.mxu0 0.0
    %2824 = vmatpush2.msra.mxu0 0.0
    %2825 = vmatprep.subr.mxu0 0.0
    %2826 = vmatpush2.msra.mxu0 0.0
    %2827 = vmatprep.subr.mxu0 0.0
    %2828 = vmatpush2.msra.mxu0 0.0
    %2829 = vmatprep.subr.mxu0 0.0
    %2830 = vmatpush2.msra.mxu0 0.0
    %2831 = vmatprep.subr.mxu0 0.0
    %2832 = vmatpush2.msra.mxu0 0.0
    %2833 = vmatprep.subr.mxu0 0.0
    %2834 = vmatpush2.msra.mxu0 0.0
    %2835 = vmatprep.subr.mxu0 0.0
    %2836 = vmatpush2.msra.mxu0 0.0
    %2837 = vmatprep.mubr.f32.mxu0 0.0
    %2838 = vmatmul.mubr.f32.gmra.mxu0 %v2771
    %v2839 = vpop.f32.mrf.mxu0
    %v2840 = vadd.f32 0.0, %v2839
    %v2841 = vpop.f32.mrf.mxu0
    %2842 = vdwg.mxu0
    %v2843 = vadd.f32 %v2770, %v2840
    %v2844 = vld [vmem:[%s522 + $0x8] sm:$0xff]
    %v2845 = vsel %vm166, %v2767, 0
    %2847 = vmatprep.subr.mxu0 0.0
    %2848 = vmatpush1.msra.mxu0 0.0
    %2849 = vmatprep.subr.mxu0 0.0
    %2850 = vmatpush1.msra.mxu0 0.0
    %2851 = vmatprep.subr.mxu0 0.0
    %2852 = vmatpush1.msra.mxu0 0.0
    %2853 = vmatprep.subr.mxu0 0.0
    %2854 = vmatpush1.msra.mxu0 0.0
    %2855 = vmatprep.subr.mxu0 0.0
    %2856 = vmatpush1.msra.mxu0 0.0
    %2857 = vmatprep.subr.mxu0 0.0
    %2858 = vmatpush1.msra.mxu0 0.0
    %2859 = vmatprep.subr.mxu0 0.0
    %2860 = vmatpush1.msra.mxu0 0.0
    %2861 = vmatprep.subr.mxu0 0.0
    %2862 = vmatpush1.msra.mxu0 0.0
    %2863 = vmatprep.subr.mxu0 0.0
    %2864 = vmatpush1.msra.mxu0 0.0
    %2865 = vmatprep.subr.mxu0 0.0
    %2866 = vmatpush1.msra.mxu0 0.0
    %2867 = vmatprep.subr.mxu0 0.0
    %2868 = vmatpush1.msra.mxu0 0.0
    %2869 = vmatprep.subr.mxu0 0.0
    %2870 = vmatpush1.msra.mxu0 0.0
    %2871 = vmatprep.subr.mxu0 0.0
    %2872 = vmatpush1.msra.mxu0 %v1917
    %2873 = vmatprep.subr.mxu0 0.0
    %2874 = vmatpush1.msra.mxu0 %v1916
    %2875 = vmatprep.subr.mxu0 0.0
    %2876 = vmatpush1.msra.mxu0 %v1915
    %2877 = vmatprep.subr.mxu0 0.0
    %2878 = vmatpush1.msra.mxu0 %v1914
    %2879 = vmatprep.subr.mxu0 0.0
    %2880 = vmatpush2.msra.mxu0 0.0
    %2881 = vmatprep.subr.mxu0 0.0
    %2882 = vmatpush2.msra.mxu0 0.0
    %2883 = vmatprep.subr.mxu0 0.0
    %2884 = vmatpush2.msra.mxu0 0.0
    %2885 = vmatprep.subr.mxu0 0.0
    %2886 = vmatpush2.msra.mxu0 0.0
    %2887 = vmatprep.subr.mxu0 0.0
    %2888 = vmatpush2.msra.mxu0 0.0
    %2889 = vmatprep.subr.mxu0 0.0
    %2890 = vmatpush2.msra.mxu0 0.0
    %2891 = vmatprep.subr.mxu0 0.0
    %2892 = vmatpush2.msra.mxu0 0.0
    %2893 = vmatprep.subr.mxu0 0.0
    %2894 = vmatpush2.msra.mxu0 0.0
    %2895 = vmatprep.subr.mxu0 0.0
    %2896 = vmatpush2.msra.mxu0 0.0
    %2897 = vmatprep.subr.mxu0 0.0
    %2898 = vmatpush2.msra.mxu0 0.0
    %2899 = vmatprep.subr.mxu0 0.0
    %2900 = vmatpush2.msra.mxu0 0.0
    %2901 = vmatprep.subr.mxu0 0.0
    %2902 = vmatpush2.msra.mxu0 0.0
    %2903 = vmatprep.subr.mxu0 0.0
    %2904 = vmatpush2.msra.mxu0 0.0
    %2905 = vmatprep.subr.mxu0 0.0
    %2906 = vmatpush2.msra.mxu0 0.0
    %2907 = vmatprep.subr.mxu0 0.0
    %2908 = vmatpush2.msra.mxu0 0.0
    %2909 = vmatprep.subr.mxu0 0.0
    %2910 = vmatpush2.msra.mxu0 0.0
    %2911 = vmatprep.mubr.f32.mxu0 0.0
    %2912 = vmatmul.mubr.f32.gmra.mxu0 %v2845
    %v2913 = vpop.f32.mrf.mxu0
    %v2914 = vadd.f32 0.0, %v2913
    %v2915 = vpop.f32.mrf.mxu0
    %2916 = vdwg.mxu0
    %v2917 = vadd.f32 %v2844, %v2914
    %v2918 = vxor.u32 %v2843, 2147483648
    %v2919 = vmul.f32 %v2918, 1.442695
    %v2920 = vpow.pop %v2919
    %v2921 = vadd.f32 %v2920, 1.0
    %v2922 = vrcp.pop %v2921
    %v2923 = vmul.f32 1.0, %v2922
    %v2924 = vtanh.pop %v2843
    %v2925 = vmul.f32 %v2923, %v2721
    %2927 = vrot.lane.b32.xlu0 %v2924, 64
    %v2928 = vpop.permute.xlu0 %2927
    %v2930 = vmul.f32 %v2923, %v2928
    %2932 = vrot.lane.b32.xlu0 %v2930, 32
    %v2933 = vpop.permute.xlu0 %2932
    %v2935 = vadd.f32 %v2925, %v2933
    %v2936 = vtanh.pop %v2935
    %2938 = vrot.lane.b32.xlu0 %v2936, 64
    %v2939 = vpop.permute.xlu0 %2938
    %v2941 = vmul.f32 %v2923, %v2939
    %v2942 = vxor.u32 %v2917, 2147483648
    %v2943 = vmul.f32 %v2942, 1.442695
    %v2944 = vpow.pop %v2943
    %v2945 = vadd.f32 %v2944, 1.0
    %v2946 = vrcp.pop %v2945
    %v2947 = vmul.f32 1.0, %v2946
    %v2948 = vtanh.pop %v2917
    %v2949 = vmul.f32 %v2947, %v2759
    %2951 = vrot.lane.b32.xlu0 %v2948, 64
    %v2952 = vpop.permute.xlu0 %2951
    %v2954 = vmul.f32 %v2947, %v2952
    %2956 = vrot.lane.b32.xlu0 %v2954, 32
    %v2957 = vpop.permute.xlu0 %2956
    %v2959 = vadd.f32 %v2949, %v2957
    %v2960 = vtanh.pop %v2959
    %2962 = vrot.lane.b32.xlu0 %v2960, 64
    %v2963 = vpop.permute.xlu0 %2962
    %v2965 = vmul.f32 %v2947, %v2963
    %v2966 = vld [vmem:[%s1373] sm:$0xff]
    %2968 = vset.pattern.permute.xlu0 0
    %2969 = vperm.xlu0 %2968, %v2966
    %v2970 = vpop.permute.xlu0 %2969
    %v2972 = vmul.f32 %v2965, %v2970
    %v2973 = vmul.f32 %v2959, %v2970
    %2975 = vrot.lane.b32.xlu0 %v2941, 32
    %v2976 = vpop.permute.xlu0 %2975
    %2978 = vst.msk [vmem:[%s1386] sm:$0xff] %vm166, %v2976
    %2980 = vrot.lane.b32.xlu0 %v2972, 32
    %v2981 = vpop.permute.xlu0 %2980
    %2983 = vst.msk [vmem:[%s1392] sm:$0xff] %vm166, %v2981
    %v2984 = vld [vmem:[%s381] sm:$0xff]
    %v2985 = vsel %vm166, %v2976, 0
    %2987 = vmatprep.subr.mxu0 0.0
    %2988 = vmatpush1.msra.mxu0 0.0
    %2989 = vmatprep.subr.mxu0 0.0
    %2990 = vmatpush1.msra.mxu0 0.0
    %2991 = vmatprep.subr.mxu0 0.0
    %2992 = vmatpush1.msra.mxu0 0.0
    %2993 = vmatprep.subr.mxu0 0.0
    %2994 = vmatpush1.msra.mxu0 0.0
    %2995 = vmatprep.subr.mxu0 0.0
    %2996 = vmatpush1.msra.mxu0 0.0
    %2997 = vmatprep.subr.mxu0 0.0
    %2998 = vmatpush1.msra.mxu0 0.0
    %2999 = vmatprep.subr.mxu0 0.0
    %3000 = vmatpush1.msra.mxu0 0.0
    %3001 = vmatprep.subr.mxu0 0.0
    %3002 = vmatpush1.msra.mxu0 0.0
    %3003 = vmatprep.subr.mxu0 0.0
    %3004 = vmatpush1.msra.mxu0 0.0
    %3005 = vmatprep.subr.mxu0 0.0
    %3006 = vmatpush1.msra.mxu0 0.0
    %3007 = vmatprep.subr.mxu0 0.0
    %3008 = vmatpush1.msra.mxu0 0.0
    %3009 = vmatprep.subr.mxu0 0.0
    %3010 = vmatpush1.msra.mxu0 0.0
    %3011 = vmatprep.subr.mxu0 0.0
    %3012 = vmatpush1.msra.mxu0 %v1913
    %3013 = vmatprep.subr.mxu0 0.0
    %3014 = vmatpush1.msra.mxu0 %v1912
    %3015 = vmatprep.subr.mxu0 0.0
    %3016 = vmatpush1.msra.mxu0 %v1911
    %3017 = vmatprep.subr.mxu0 0.0
    %3018 = vmatpush1.msra.mxu0 %v1910
    %3019 = vmatprep.subr.mxu0 0.0
    %3020 = vmatpush2.msra.mxu0 0.0
    %3021 = vmatprep.subr.mxu0 0.0
    %3022 = vmatpush2.msra.mxu0 0.0
    %3023 = vmatprep.subr.mxu0 0.0
    %3024 = vmatpush2.msra.mxu0 0.0
    %3025 = vmatprep.subr.mxu0 0.0
    %3026 = vmatpush2.msra.mxu0 0.0
    %3027 = vmatprep.subr.mxu0 0.0
    %3028 = vmatpush2.msra.mxu0 0.0
    %3029 = vmatprep.subr.mxu0 0.0
    %3030 = vmatpush2.msra.mxu0 0.0
    %3031 = vmatprep.subr.mxu0 0.0
    %3032 = vmatpush2.msra.mxu0 0.0
    %3033 = vmatprep.subr.mxu0 0.0
    %3034 = vmatpush2.msra.mxu0 0.0
    %3035 = vmatprep.subr.mxu0 0.0
    %3036 = vmatpush2.msra.mxu0 0.0
    %3037 = vmatprep.subr.mxu0 0.0
    %3038 = vmatpush2.msra.mxu0 0.0
    %3039 = vmatprep.subr.mxu0 0.0
    %3040 = vmatpush2.msra.mxu0 0.0
    %3041 = vmatprep.subr.mxu0 0.0
    %3042 = vmatpush2.msra.mxu0 0.0
    %3043 = vmatprep.subr.mxu0 0.0
    %3044 = vmatpush2.msra.mxu0 0.0
    %3045 = vmatprep.subr.mxu0 0.0
    %3046 = vmatpush2.msra.mxu0 0.0
    %3047 = vmatprep.subr.mxu0 0.0
    %3048 = vmatpush2.msra.mxu0 0.0
    %3049 = vmatprep.subr.mxu0 0.0
    %3050 = vmatpush2.msra.mxu0 0.0
    %3051 = vmatprep.mubr.f32.mxu0 0.0
    %3052 = vmatmul.mubr.f32.gmra.mxu0 %v2985
    %v3053 = vpop.f32.mrf.mxu0
    %v3054 = vadd.f32 0.0, %v3053
    %v3055 = vpop.f32.mrf.mxu0
    %3056 = vdwg.mxu0
    %v3057 = vadd.f32 %v2984, %v3054
    %v3058 = vld [vmem:[#allocation2 + $0x8] sm:$0xff]
    %v3059 = vsel %vm166, %v2981, 0
    %3061 = vmatprep.subr.mxu0 0.0
    %3062 = vmatpush1.msra.mxu0 0.0
    %3063 = vmatprep.subr.mxu0 0.0
    %3064 = vmatpush1.msra.mxu0 0.0
    %3065 = vmatprep.subr.mxu0 0.0
    %3066 = vmatpush1.msra.mxu0 0.0
    %3067 = vmatprep.subr.mxu0 0.0
    %3068 = vmatpush1.msra.mxu0 0.0
    %3069 = vmatprep.subr.mxu0 0.0
    %3070 = vmatpush1.msra.mxu0 0.0
    %3071 = vmatprep.subr.mxu0 0.0
    %3072 = vmatpush1.msra.mxu0 0.0
    %3073 = vmatprep.subr.mxu0 0.0
    %3074 = vmatpush1.msra.mxu0 0.0
    %3075 = vmatprep.subr.mxu0 0.0
    %3076 = vmatpush1.msra.mxu0 0.0
    %3077 = vmatprep.subr.mxu0 0.0
    %3078 = vmatpush1.msra.mxu0 0.0
    %3079 = vmatprep.subr.mxu0 0.0
    %3080 = vmatpush1.msra.mxu0 0.0
    %3081 = vmatprep.subr.mxu0 0.0
    %3082 = vmatpush1.msra.mxu0 0.0
    %3083 = vmatprep.subr.mxu0 0.0
    %3084 = vmatpush1.msra.mxu0 0.0
    %3085 = vmatprep.subr.mxu0 0.0
    %3086 = vmatpush1.msra.mxu0 %v1917
    %3087 = vmatprep.subr.mxu0 0.0
    %3088 = vmatpush1.msra.mxu0 %v1916
    %3089 = vmatprep.subr.mxu0 0.0
    %3090 = vmatpush1.msra.mxu0 %v1915
    %3091 = vmatprep.subr.mxu0 0.0
    %3092 = vmatpush1.msra.mxu0 %v1914
    %3093 = vmatprep.subr.mxu0 0.0
    %3094 = vmatpush2.msra.mxu0 0.0
    %3095 = vmatprep.subr.mxu0 0.0
    %3096 = vmatpush2.msra.mxu0 0.0
    %3097 = vmatprep.subr.mxu0 0.0
    %3098 = vmatpush2.msra.mxu0 0.0
    %3099 = vmatprep.subr.mxu0 0.0
    %3100 = vmatpush2.msra.mxu0 0.0
    %3101 = vmatprep.subr.mxu0 0.0
    %3102 = vmatpush2.msra.mxu0 0.0
    %3103 = vmatprep.subr.mxu0 0.0
    %3104 = vmatpush2.msra.mxu0 0.0
    %3105 = vmatprep.subr.mxu0 0.0
    %3106 = vmatpush2.msra.mxu0 0.0
    %3107 = vmatprep.subr.mxu0 0.0
    %3108 = vmatpush2.msra.mxu0 0.0
    %3109 = vmatprep.subr.mxu0 0.0
    %3110 = vmatpush2.msra.mxu0 0.0
    %3111 = vmatprep.subr.mxu0 0.0
    %3112 = vmatpush2.msra.mxu0 0.0
    %3113 = vmatprep.subr.mxu0 0.0
    %3114 = vmatpush2.msra.mxu0 0.0
    %3115 = vmatprep.subr.mxu0 0.0
    %3116 = vmatpush2.msra.mxu0 0.0
    %3117 = vmatprep.subr.mxu0 0.0
    %3118 = vmatpush2.msra.mxu0 0.0
    %3119 = vmatprep.subr.mxu0 0.0
    %3120 = vmatpush2.msra.mxu0 0.0
    %3121 = vmatprep.subr.mxu0 0.0
    %3122 = vmatpush2.msra.mxu0 0.0
    %3123 = vmatprep.subr.mxu0 0.0
    %3124 = vmatpush2.msra.mxu0 0.0
    %3125 = vmatprep.mubr.f32.mxu0 0.0
    %3126 = vmatmul.mubr.f32.gmra.mxu0 %v3059
    %v3127 = vpop.f32.mrf.mxu0
    %v3128 = vadd.f32 0.0, %v3127
    %v3129 = vpop.f32.mrf.mxu0
    %3130 = vdwg.mxu0
    %v3131 = vadd.f32 %v3058, %v3128
    %v3132 = vxor.u32 %v3057, 2147483648
    %v3133 = vmul.f32 %v3132, 1.442695
    %v3134 = vpow.pop %v3133
    %v3135 = vadd.f32 %v3134, 1.0
    %v3136 = vrcp.pop %v3135
    %v3137 = vmul.f32 1.0, %v3136
    %v3138 = vtanh.pop %v3057
    %v3139 = vmul.f32 %v3137, %v2935
    %3141 = vrot.lane.b32.xlu0 %v3138, 64
    %v3142 = vpop.permute.xlu0 %3141
    %v3144 = vmul.f32 %v3137, %v3142
    %3146 = vrot.lane.b32.xlu0 %v3144, 32
    %v3147 = vpop.permute.xlu0 %3146
    %v3149 = vadd.f32 %v3139, %v3147
    %v3150 = vtanh.pop %v3149
    %3152 = vrot.lane.b32.xlu0 %v3150, 64
    %v3153 = vpop.permute.xlu0 %3152
    %v3155 = vmul.f32 %v3137, %v3153
    %v3156 = vxor.u32 %v3131, 2147483648
    %v3157 = vmul.f32 %v3156, 1.442695
    %v3158 = vpow.pop %v3157
    %v3159 = vadd.f32 %v3158, 1.0
    %v3160 = vrcp.pop %v3159
    %v3161 = vmul.f32 1.0, %v3160
    %v3162 = vtanh.pop %v3131
    %v3163 = vmul.f32 %v3161, %v2973
    %3165 = vrot.lane.b32.xlu0 %v3162, 64
    %v3166 = vpop.permute.xlu0 %3165
    %v3168 = vmul.f32 %v3161, %v3166
    %3170 = vrot.lane.b32.xlu0 %v3168, 32
    %v3171 = vpop.permute.xlu0 %3170
    %v3173 = vadd.f32 %v3163, %v3171
    %v3174 = vtanh.pop %v3173
    %3176 = vrot.lane.b32.xlu0 %v3174, 64
    %v3177 = vpop.permute.xlu0 %3176
    %v3179 = vmul.f32 %v3161, %v3177
    %v3180 = vld [vmem:[%s1] sm:$0xff]
    %3182 = vset.pattern.permute.xlu0 0
    %3183 = vperm.xlu0 %3182, %v3180
    %v3184 = vpop.permute.xlu0 %3183
    %v3186 = vmul.f32 %v3179, %v3184
    %3188 = vrot.lane.b32.xlu0 %v3155, 32
    %v3189 = vpop.permute.xlu0 %3188
    %3191 = vst.msk [vmem:[%s1601] sm:$0xff] %vm166, %v3189
    %3193 = vrot.lane.b32.xlu0 %v3186, 32
    %v3194 = vpop.permute.xlu0 %3193
    %3196 = vst.msk [vmem:[#allocation4] sm:$0xff] %vm166, %v3194
    %v3197 = vld [vmem:[#allocation3] sm:$0xff]
    %v3198 = vld [vmem:[#allocation3 + $0x8] sm:$0xff]
    %v3199 = vld [vmem:[#allocation3 + $0x10] sm:$0xff]
    %v3200 = vld [vmem:[#allocation3 + $0x18] sm:$0xff]
    %v3201 = vld [vmem:[#allocation3 + $0x20] sm:$0xff]
    %v3202 = vld [vmem:[#allocation3 + $0x28] sm:$0xff]
    %v3203 = vld [vmem:[#allocation4] sm:$0xff]
    %v3204 = vld [vmem:[#allocation4 + $0x8] sm:$0xff]
    %v3205 = vld [vmem:[#allocation4 + $0x10] sm:$0xff]
    %v3206 = vld [vmem:[#allocation4 + $0x18] sm:$0xff]
    %v3207 = vld [vmem:[#allocation4 + $0x20] sm:$0xff]
    %v3208 = vld [vmem:[#allocation4 + $0x28] sm:$0xff]
    %v3209 = vld [vmem:[%s11] sm:$0xff]
    %v3210 = vld [vmem:[%s11 + $0x8] sm:$0xff]
    %v3211 = vld [vmem:[%s11 + $0x10] sm:$0xff]
    %v3212 = vld [vmem:[%s11 + $0x18] sm:$0xff]
    %v3213 = vld [vmem:[%s12] sm:$0xff]
    %v3214 = vld [vmem:[%s12 + $0x8] sm:$0xff]
    %v3215 = vld [vmem:[%s12 + $0x10] sm:$0xff]
    %v3216 = vld [vmem:[%s12 + $0x18] sm:$0xff]
    %v3218 = vsel %vm166, %v3203, 0
    %v3221 = vsel %vm166, %v3204, 0
    %v3224 = vsel %vm166, %v3205, 0
    %v3227 = vsel %vm166, %v3206, 0
    %v3230 = vsel %vm166, %v3207, 0
    %v3233 = vsel %vm166, %v3208, 0
    %3235 = vmatprep.subr.mxu0 0.0
    %3236 = vmatpush1.msra.mxu0 0.0
    %3237 = vmatprep.subr.mxu0 0.0
    %3238 = vmatpush1.msra.mxu0 0.0
    %3239 = vmatprep.subr.mxu0 0.0
    %3240 = vmatpush1.msra.mxu0 0.0
    %3241 = vmatprep.subr.mxu0 0.0
    %3242 = vmatpush1.msra.mxu0 0.0
    %3243 = vmatprep.subr.mxu0 0.0
    %3244 = vmatpush1.msra.mxu0 0.0
    %3245 = vmatprep.subr.mxu0 0.0
    %3246 = vmatpush1.msra.mxu0 0.0
    %3247 = vmatprep.subr.mxu0 0.0
    %3248 = vmatpush1.msra.mxu0 0.0
    %3249 = vmatprep.subr.mxu0 0.0
    %3250 = vmatpush1.msra.mxu0 0.0
    %3251 = vmatprep.subr.mxu0 0.0
    %3252 = vmatpush1.msra.mxu0 0.0
    %3253 = vmatprep.subr.mxu0 0.0
    %3254 = vmatpush1.msra.mxu0 0.0
    %3255 = vmatprep.subr.mxu0 0.0
    %3256 = vmatpush1.msra.mxu0 0.0
    %3257 = vmatprep.subr.mxu0 0.0
    %3258 = vmatpush1.msra.mxu0 0.0
    %3259 = vmatprep.subr.mxu0 0.0
    %3260 = vmatpush1.msra.mxu0 %v3216
    %3261 = vmatprep.subr.mxu0 0.0
    %3262 = vmatpush1.msra.mxu0 %v3215
    %3263 = vmatprep.subr.mxu0 0.0
    %3264 = vmatpush1.msra.mxu0 %v3214
    %3265 = vmatprep.subr.mxu0 0.0
    %3266 = vmatpush1.msra.mxu0 %v3213
    %3267 = vmatprep.subr.mxu0 0.0
    %3268 = vmatpush2.msra.mxu0 0.0
    %3269 = vmatprep.subr.mxu0 0.0
    %3270 = vmatpush2.msra.mxu0 0.0
    %3271 = vmatprep.subr.mxu0 0.0
    %3272 = vmatpush2.msra.mxu0 0.0
    %3273 = vmatprep.subr.mxu0 0.0
    %3274 = vmatpush2.msra.mxu0 0.0
    %3275 = vmatprep.subr.mxu0 0.0
    %3276 = vmatpush2.msra.mxu0 0.0
    %3277 = vmatprep.subr.mxu0 0.0
    %3278 = vmatpush2.msra.mxu0 0.0
    %3279 = vmatprep.subr.mxu0 0.0
    %3280 = vmatpush2.msra.mxu0 0.0
    %3281 = vmatprep.subr.mxu0 0.0
    %3282 = vmatpush2.msra.mxu0 0.0
    %3283 = vmatprep.subr.mxu0 0.0
    %3284 = vmatpush2.msra.mxu0 0.0
    %3285 = vmatprep.subr.mxu0 0.0
    %3286 = vmatpush2.msra.mxu0 0.0
    %3287 = vmatprep.subr.mxu0 0.0
    %3288 = vmatpush2.msra.mxu0 0.0
    %3289 = vmatprep.subr.mxu0 0.0
    %3290 = vmatpush2.msra.mxu0 0.0
    %3291 = vmatprep.subr.mxu0 0.0
    %3292 = vmatpush2.msra.mxu0 0.0
    %3293 = vmatprep.subr.mxu0 0.0
    %3294 = vmatpush2.msra.mxu0 0.0
    %3295 = vmatprep.subr.mxu0 0.0
    %3296 = vmatpush2.msra.mxu0 0.0
    %3297 = vmatprep.subr.mxu0 0.0
    %3298 = vmatpush2.msra.mxu0 0.0
    %3299 = vmatprep.mubr.f32.mxu0 0.0
    %3300 = vmatmul.mubr.f32.gmra.mxu0 %v3218
    %v3301 = vpop.f32.mrf.mxu0
    %v3302 = vadd.f32 0.0, %v3301
    %v3303 = vpop.f32.mrf.mxu0
    %3304 = vmatprep.mubr.f32.mxu0 0.0
    %3305 = vmatmul.mubr.f32.gmra.mxu0 %v3221
    %v3306 = vpop.f32.mrf.mxu0
    %v3307 = vadd.f32 0.0, %v3306
    %v3308 = vpop.f32.mrf.mxu0
    %3309 = vmatprep.mubr.f32.mxu0 0.0
    %3310 = vmatmul.mubr.f32.gmra.mxu0 %v3224
    %v3311 = vpop.f32.mrf.mxu0
    %v3312 = vadd.f32 0.0, %v3311
    %v3313 = vpop.f32.mrf.mxu0
    %3314 = vmatprep.mubr.f32.mxu0 0.0
    %3315 = vmatmul.mubr.f32.gmra.mxu0 %v3227
    %v3316 = vpop.f32.mrf.mxu0
    %v3317 = vadd.f32 0.0, %v3316
    %v3318 = vpop.f32.mrf.mxu0
    %3319 = vmatprep.mubr.f32.mxu0 0.0
    %3320 = vmatmul.mubr.f32.gmra.mxu0 %v3230
    %v3321 = vpop.f32.mrf.mxu0
    %v3322 = vadd.f32 0.0, %v3321
    %v3323 = vpop.f32.mrf.mxu0
    %3324 = vmatprep.mubr.f32.mxu0 0.0
    %3325 = vmatmul.mubr.f32.gmra.mxu0 %v3233
    %v3326 = vpop.f32.mrf.mxu0
    %v3327 = vadd.f32 0.0, %v3326
    %v3328 = vpop.f32.mrf.mxu0
    %3329 = vdwg.mxu0
    %v3331 = vsel %vm166, %v3197, 0
    %v3334 = vsel %vm166, %v3198, 0
    %v3337 = vsel %vm166, %v3199, 0
    %v3340 = vsel %vm166, %v3200, 0
    %v3343 = vsel %vm166, %v3201, 0
    %v3346 = vsel %vm166, %v3202, 0
    %3348 = vmatprep.subr.mxu0 0.0
    %3349 = vmatpush1.msra.mxu0 0.0
    %3350 = vmatprep.subr.mxu0 0.0
    %3351 = vmatpush1.msra.mxu0 0.0
    %3352 = vmatprep.subr.mxu0 0.0
    %3353 = vmatpush1.msra.mxu0 0.0
    %3354 = vmatprep.subr.mxu0 0.0
    %3355 = vmatpush1.msra.mxu0 0.0
    %3356 = vmatprep.subr.mxu0 0.0
    %3357 = vmatpush1.msra.mxu0 0.0
    %3358 = vmatprep.subr.mxu0 0.0
    %3359 = vmatpush1.msra.mxu0 0.0
    %3360 = vmatprep.subr.mxu0 0.0
    %3361 = vmatpush1.msra.mxu0 0.0
    %3362 = vmatprep.subr.mxu0 0.0
    %3363 = vmatpush1.msra.mxu0 0.0
    %3364 = vmatprep.subr.mxu0 0.0
    %3365 = vmatpush1.msra.mxu0 0.0
    %3366 = vmatprep.subr.mxu0 0.0
    %3367 = vmatpush1.msra.mxu0 0.0
    %3368 = vmatprep.subr.mxu0 0.0
    %3369 = vmatpush1.msra.mxu0 0.0
    %3370 = vmatprep.subr.mxu0 0.0
    %3371 = vmatpush1.msra.mxu0 0.0
    %3372 = vmatprep.subr.mxu0 0.0
    %3373 = vmatpush1.msra.mxu0 %v3212
    %3374 = vmatprep.subr.mxu0 0.0
    %3375 = vmatpush1.msra.mxu0 %v3211
    %3376 = vmatprep.subr.mxu0 0.0
    %3377 = vmatpush1.msra.mxu0 %v3210
    %3378 = vmatprep.subr.mxu0 0.0
    %3379 = vmatpush1.msra.mxu0 %v3209
    %3380 = vmatprep.subr.mxu0 0.0
    %3381 = vmatpush2.msra.mxu0 0.0
    %3382 = vmatprep.subr.mxu0 0.0
    %3383 = vmatpush2.msra.mxu0 0.0
    %3384 = vmatprep.subr.mxu0 0.0
    %3385 = vmatpush2.msra.mxu0 0.0
    %3386 = vmatprep.subr.mxu0 0.0
    %3387 = vmatpush2.msra.mxu0 0.0
    %3388 = vmatprep.subr.mxu0 0.0
    %3389 = vmatpush2.msra.mxu0 0.0
    %3390 = vmatprep.subr.mxu0 0.0
    %3391 = vmatpush2.msra.mxu0 0.0
    %3392 = vmatprep.subr.mxu0 0.0
    %3393 = vmatpush2.msra.mxu0 0.0
    %3394 = vmatprep.subr.mxu0 0.0
    %3395 = vmatpush2.msra.mxu0 0.0
    %3396 = vmatprep.subr.mxu0 0.0
    %3397 = vmatpush2.msra.mxu0 0.0
    %3398 = vmatprep.subr.mxu0 0.0
    %3399 = vmatpush2.msra.mxu0 0.0
    %3400 = vmatprep.subr.mxu0 0.0
    %3401 = vmatpush2.msra.mxu0 0.0
    %3402 = vmatprep.subr.mxu0 0.0
    %3403 = vmatpush2.msra.mxu0 0.0
    %3404 = vmatprep.subr.mxu0 0.0
    %3405 = vmatpush2.msra.mxu0 0.0
    %3406 = vmatprep.subr.mxu0 0.0
    %3407 = vmatpush2.msra.mxu0 0.0
    %3408 = vmatprep.subr.mxu0 0.0
    %3409 = vmatpush2.msra.mxu0 0.0
    %3410 = vmatprep.subr.mxu0 0.0
    %3411 = vmatpush2.msra.mxu0 0.0
    %3412 = vmatprep.mubr.f32.mxu0 0.0
    %3413 = vmatmul.mubr.f32.gmra.mxu0 %v3331
    %v3414 = vpop.f32.mrf.mxu0
    %v3415 = vadd.f32 %v3302, %v3414
    %v3416 = vpop.f32.mrf.mxu0
    %3417 = vmatprep.mubr.f32.mxu0 0.0
    %3418 = vmatmul.mubr.f32.gmra.mxu0 %v3334
    %v3419 = vpop.f32.mrf.mxu0
    %v3420 = vadd.f32 %v3307, %v3419
    %v3421 = vpop.f32.mrf.mxu0
    %3422 = vmatprep.mubr.f32.mxu0 0.0
    %3423 = vmatmul.mubr.f32.gmra.mxu0 %v3337
    %v3424 = vpop.f32.mrf.mxu0
    %v3425 = vadd.f32 %v3312, %v3424
    %v3426 = vpop.f32.mrf.mxu0
    %3427 = vmatprep.mubr.f32.mxu0 0.0
    %3428 = vmatmul.mubr.f32.gmra.mxu0 %v3340
    %v3429 = vpop.f32.mrf.mxu0
    %v3430 = vadd.f32 %v3317, %v3429
    %v3431 = vpop.f32.mrf.mxu0
    %3432 = vmatprep.mubr.f32.mxu0 0.0
    %3433 = vmatmul.mubr.f32.gmra.mxu0 %v3343
    %v3434 = vpop.f32.mrf.mxu0
    %v3435 = vadd.f32 %v3322, %v3434
    %v3436 = vpop.f32.mrf.mxu0
    %3437 = vmatprep.mubr.f32.mxu0 0.0
    %3438 = vmatmul.mubr.f32.gmra.mxu0 %v3346
    %v3439 = vpop.f32.mrf.mxu0
    %v3440 = vadd.f32 %v3327, %v3439
    %v3441 = vpop.f32.mrf.mxu0
    %3442 = vdwg.mxu0
    %v3443 = vld [vmem:[%s13] sm:$0x1]
    %v3445 = vlaneseq
    %v3446 = vshrl.u32 %v3445, 7
    %v3447 = vsub.s32 0, %v3446
    %v3448 = vrot.slane %v3443, %v3447
    %v3450 = vadd.f32 %v3415, %v3448
    %v3451 = vadd.f32 %v3420, %v3448
    %v3452 = vadd.f32 %v3425, %v3448
    %v3453 = vadd.f32 %v3430, %v3448
    %v3454 = vadd.f32 %v3435, %v3448
    %v3455 = vadd.f32 %v3440, %v3448
    %vm3456 = vcmask 15360
    %3457 = vst.msk [vmem:[%s14] sm:$0xff] %vm3456, %v3450
    %3458 = vst.msk [vmem:[%s14 + $0x8] sm:$0xff] %vm3456, %v3451
    %3459 = vst.msk [vmem:[%s14 + $0x10] sm:$0xff] %vm3456, %v3452
    %3460 = vst.msk [vmem:[%s14 + $0x18] sm:$0xff] %vm3456, %v3453
    %3461 = vst.msk [vmem:[%s14 + $0x20] sm:$0xff] %vm3456, %v3454
    %3462 = vst.msk [vmem:[%s14 + $0x28] sm:$0xff] %vm3456, %v3455
    // Predicated region
    $region86: #{tpu_custom_call.1} parent=1 // pred_check
      _
    $region87: #{tpu_custom_call.1} parent=1 // pred_check_branch
      %3464 = sbr.rel (0) target = $region89
    $region88: #{tpu_custom_call.1} parent=1 // pred_region
      _
    $region89: #{tpu_custom_call.1} parent=1 // pred_fallthru
      _
    // Predicated region
    $region90: #{tpu_custom_call.1} parent=1 // pred_check
      _
    $region91: #{tpu_custom_call.1} parent=1 // pred_check_branch
      %3466 = sbr.rel (0) target = $region93
    $region92: #{tpu_custom_call.1} parent=1 // pred_region
      _
    $region93: #{tpu_custom_call.1} parent=1 // pred_fallthru
      _
    %3467 = vsyncpa [#allocation6], 1
    %3468 = vsyncpa [#allocation8], 1
    %3469 = vsyncpa [#allocation11], 1
    %3470 = vsyncpa [#allocation14], 1

</llo_original>
